<compile_context>
chip_gen: v7x
topology: tpu7x:2x2x1
jax: 0.10.0
libtpu: 0.0.40
codegen_flags: <defaults>
</compile_context>

<pallas_src>
import jax
import jax.numpy as jnp
from jax.experimental import pallas as pl
from jax.experimental.pallas import tpu as pltpu


def _pick_block_b(batch):
    """Largest Bt <= 8 that divides the batch while keeping >= 2 grid steps."""
    target = max(1, min(8, batch // 2))
    for bt in range(target, 0, -1):
        if batch % bt == 0:
            return bt
    return 1


def spike_separation_block(x_nchw, res_nchw, params, *, block_b=None):
    """Fused SpikeSeparationBlock forward.  x/res: (B, C, H, W) f32 (NCHW).

    Returns (out, res_out), both (B, C, H, W) f32.
    """
    B, C, H, W = x_nchw.shape
    HW = H * W
    f32, bf16 = jnp.float32, jnp.bfloat16

    if block_b is None:
        block_b = _pick_block_b(B)
    assert B % block_b == 0, "batch must be divisible by the batch block"
    grid = (B // block_b,)

    # Lane-dense, transpose-free layout: NCHW flattened to (B, C, H*W).
    x = x_nchw.reshape(B, C, HW).astype(f32)
    res = res_nchw.reshape(B, C, HW).astype(f32)

    # Reflection boundary masks over the flattened HW (lane) axis, one row per
    # mask: [w==0, w==W-1, h==0, h==H-1].  Precomputed host-side.
    col = jnp.arange(HW, dtype=jnp.int32)
    wcol = col % W
    row = col // W
    masks = jnp.stack([wcol == 0, wcol == W - 1,
                       row == 0, row == H - 1]).astype(jnp.int32)   # (4, HW)

    def tap_weights(w):
        # (Cout, Cin, 3, 3) -> (9, Cout, Cin); tap index k = kh*3 + kw.
        return jnp.transpose(w, (2, 3, 0, 1)).reshape(9, C, C).astype(bf16)

    w1 = tap_weights(params['conv1_w'])
    b1 = params['conv1_b'].reshape(C, 1).astype(f32)
    w2 = tap_weights(params['conv2_w'])
    b2 = params['conv2_b'].reshape(C, 1).astype(f32)
    wu = tap_weights(params['up_w'])
    bu = params['up_b'].reshape(C, 1).astype(f32)
    wd = params['down_w'][:, :, 0, 0].astype(bf16)                  # (Cout, Cin)
    bd = params['down_b'].reshape(C, 1).astype(f32)

    # Eval-mode BatchNorm folded into the spiking 1x1 conv:
    #   bn(conv(s)) = (Ws @ s) * scale + shift == (scale * Ws) @ s + shift.
    eps = 1e-5
    bn_scale = params['bn_gamma'] / jnp.sqrt(params['bn_var'] + eps)
    bn_shift = params['bn_beta'] - params['bn_mean'] * bn_scale
    ws = (params['spk_w'][:, :, 0, 0] * bn_scale[:, None]).astype(bf16)
    shift = bn_shift.reshape(C, 1).astype(f32)

    def kernel(x_ref, res_ref, mask_ref,
               w1_ref, b1_ref, w2_ref, b2_ref, wu_ref, bu_ref,
               wd_ref, bd_ref, ws_ref, shift_ref,
               out_ref, res_out_ref):
        m = mask_ref[...]
        w_first = m[0:1, :] != 0
        w_last = m[1:2, :] != 0
        h_first = m[2:3, :] != 0
        h_last = m[3:4, :] != 0

        def relu(t):
            return jnp.maximum(t, 0.0)

        def conv3x3(v, w9_ref, b_ref):
            # Reflect-pad(1) 3x3 conv on a (C, HW) activation: nine taps built
            # with lane rolls + boundary selects, accumulated via nine MXU
            # matmuls (Cout, Cin) @ (Cin, HW) into an f32 accumulator.
            r_r = pltpu.roll(v, HW - 1, axis=1)      # v[.., i+1] (right nbr)
            r_l = pltpu.roll(v, 1, axis=1)           # v[.., i-1] (left nbr)
            htap = {
                -1: jnp.where(w_first, r_r, r_l),    # x[.., w-1], reflect at w=0
                0: v,
                1: jnp.where(w_last, r_l, r_r),      # x[.., w+1], reflect at w=W-1
            }
            acc = None
            for dx in (-1, 0, 1):
                t = htap[dx]
                t_dn = pltpu.roll(t, HW - W, axis=1)     # t[h+1, :]
                t_up = pltpu.roll(t, W, axis=1)          # t[h-1, :]
                vtap = {
                    -1: jnp.where(h_first, t_dn, t_up),  # reflect at h=0
                    0: t,
                    1: jnp.where(h_last, t_up, t_dn),    # reflect at h=H-1
                }
                for dy in (-1, 0, 1):
                    k = (dy + 1) * 3 + (dx + 1)
                    d = jnp.dot(w9_ref[k], vtap[dy].astype(jnp.bfloat16),
                                preferred_element_type=jnp.float32)
                    acc = d if acc is None else acc + d
            return acc + b_ref[...]

        def quant4(mem):
            # SpikeQuantizer.quant4 forward: round(clamp(x, 0, 4)), half-to-even.
            return jnp.round(jnp.clip(mem, 0.0, 4.0))

        wd_m = wd_ref[...]
        bd_v = bd_ref[...]
        ws_m = ws_ref[...]
        shift_v = shift_ref[...]

        for bi in range(block_b):
            x0 = x_ref[bi]                  # (C, HW) f32, original input
            r0 = res_ref[bi]

            h = relu(conv3x3(x0, w1_ref, b1_ref))             # conv1 + relu
            h = relu(conv3x3(h, w2_ref, b2_ref) + x0)         # conv2 + skip + relu
            h = relu(conv3x3(h, wu_ref, bu_ref) + r0)         # up_conv + res + relu
            res_out_ref[bi] = h

            # down_conv (1x1, reflect pad 0)
            y = jnp.dot(wd_m, h.astype(jnp.bfloat16),
                        preferred_element_type=jnp.float32) + bd_v

            # LIF over T=4 identical time steps (decay 0.25, soft reset), then
            # mean-over-T folded with the bn-scaled spiking 1x1 conv:
            #   mean_T bn(conv(spike_t)) = 0.25*(scale*Ws) @ sum_t spike_t + shift
            spike = quant4(y)
            ssum = spike
            mem = y
            for _ in range(3):
                mem = (mem - spike) * 0.25 + y
                spike = quant4(mem)
                ssum = ssum + spike

            # spikes are small integers (0..16 summed) — exact in bf16.
            z = jnp.dot(ws_m, ssum.astype(jnp.bfloat16),
                        preferred_element_type=jnp.float32)
            out_ref[bi] = relu(z * 0.25 + shift_v + x0)

    def data_spec():
        return pl.BlockSpec((block_b, C, HW), lambda b: (b, 0, 0))

    def full_spec(a):
        n = a.ndim
        return pl.BlockSpec(a.shape, lambda b, n=n: (0,) * n)

    wargs = (masks, w1, b1, w2, b2, wu, bu, wd, bd, ws, shift)
    in_specs = [data_spec(), data_spec()] + [full_spec(a) for a in wargs]

    flops = 2 * B * HW * C * C * (3 * 9 + 2)
    bytes_accessed = 4 * B * C * HW * 4 + sum(
        int(a.size) * a.dtype.itemsize for a in wargs)

    out, res_out = pl.pallas_call(
        kernel,
        out_shape=(jax.ShapeDtypeStruct((B, C, HW), f32),
                   jax.ShapeDtypeStruct((B, C, HW), f32)),
        grid=grid,
        in_specs=in_specs,
        out_specs=(data_spec(), data_spec()),
        compiler_params=pltpu.CompilerParams(
            dimension_semantics=("parallel",)),
        cost_estimate=pl.CostEstimate(flops=int(flops), transcendentals=0,
                                      bytes_accessed=int(bytes_accessed)),
    )(x, res, *wargs)

    return out.reshape(B, C, H, W), res_out.reshape(B, C, H, W)


def _reference_forward(x, res, params):
    """Pure-JAX reference (NCHW) mirroring the kernel's bf16 cast points."""
    f32, bf16 = jnp.float32, jnp.bfloat16
    C = x.shape[1]

    def conv(v, w, pad):
        if pad:
            v = jnp.pad(v, ((0, 0), (0, 0), (1, 1), (1, 1)), mode='reflect')
        return jax.lax.conv_general_dilated(
            v.astype(bf16), w.astype(bf16), window_strides=(1, 1),
            padding='VALID', dimension_numbers=('NCHW', 'OIHW', 'NCHW'),
            preferred_element_type=f32)

    def bias(b):
        return b.reshape(1, -1, 1, 1)

    relu = lambda t: jnp.maximum(t, 0.0)
    h = relu(conv(x, params['conv1_w'], True) + bias(params['conv1_b']))
    h = relu(conv(h, params['conv2_w'], True) + bias(params['conv2_b']) + x)
    h = relu(conv(h, params['up_w'], True) + bias(params['up_b']) + res)
    res_out = h
    y = conv(h, params['down_w'], False) + bias(params['down_b'])

    quant = lambda m: jnp.round(jnp.clip(m, 0.0, 4.0))
    spike = quant(y)
    ssum = spike
    mem = y
    for _ in range(3):
        mem = (mem - spike) * 0.25 + y
        spike = quant(mem)
        ssum = ssum + spike

    eps = 1e-5
    scale = params['bn_gamma'] / jnp.sqrt(params['bn_var'] + eps)
    shift = params['bn_beta'] - params['bn_mean'] * scale
    ws = (params['spk_w'][:, :, 0, 0] * scale[:, None]).astype(bf16)
    z = conv(ssum, ws.reshape(C, C, 1, 1), False)
    out = relu(z * 0.25 + bias(shift) + x)
    return out, res_out


if __name__ == "__main__":
    key = jax.random.PRNGKey(0)
    B, C, H, W = 2, 32, 16, 16          # in_dim = out_dim = res_dim = 32
    ks = jax.random.split(key, 13)

    def conv_w(k, cout, cin, kh, kw):
        bound = 1.0 / ((cin * kh * kw) ** 0.5)
        return jax.random.uniform(k, (cout, cin, kh, kw), jnp.float32, -bound, bound)

    def conv_b(k, cout, cin, kh, kw):
        bound = 1.0 / ((cin * kh * kw) ** 0.5)
        return jax.random.uniform(k, (cout,), jnp.float32, -bound, bound)

    params = {
        'conv1_w': conv_w(ks[0], C, C, 3, 3), 'conv1_b': conv_b(ks[1], C, C, 3, 3),
        'conv2_w': conv_w(ks[2], C, C, 3, 3), 'conv2_b': conv_b(ks[3], C, C, 3, 3),
        'up_w':    conv_w(ks[4], C, C, 3, 3), 'up_b':    conv_b(ks[5], C, C, 3, 3),
        'down_w':  conv_w(ks[6], C, C, 1, 1), 'down_b':  conv_b(ks[7], C, C, 1, 1),
        'spk_w':   conv_w(ks[8], C, C, 1, 1),                     # bias=False
        'bn_gamma': jax.random.uniform(ks[9], (C,), jnp.float32, 0.5, 1.5),
        'bn_beta':  jax.random.uniform(ks[10], (C,), jnp.float32, -0.1, 0.1),
        'bn_mean':  jnp.zeros((C,), jnp.float32),   # eval-mode running stats
        'bn_var':   jnp.ones((C,), jnp.float32),
    }

    x = jax.random.normal(ks[11], (B, C, H, W), jnp.float32)
    res = jax.random.normal(ks[12], (B, C, H, W), jnp.float32)

    out, res_out = spike_separation_block(x, res, params)
    jax.block_until_ready((out, res_out))

    assert out.shape == (B, C, H, W) and res_out.shape == (B, C, H, W)
    assert bool(jnp.all(jnp.isfinite(out))) and bool(jnp.all(jnp.isfinite(res_out)))

    # Numerical check against a pure-JAX reference that mirrors the kernel's
    # bf16 matmul-operand casts.  The `out` check uses mean-abs-error because
    # quant4 may flip on ulp-level differences near a rounding boundary.
    out_r, res_r = _reference_forward(x, res, params)
    res_err = float(jnp.max(jnp.abs(res_out - res_r)))
    out_err = float(jnp.mean(jnp.abs(out - out_r)))
    assert res_err < 2e-2, f"res mismatch: max abs err {res_err}"
    assert out_err < 1e-2, f"out mismatch: mean abs err {out_err}"

    print("KERNEL_OK")
</pallas_src>

<mosaic_0001>
module attributes {stable_mosaic.version = 11 : i64} {
  func.func @kernel(%arg0: i32, %arg1: memref<1x32x256xf32, #tpu.memory_space<vmem>>, %arg2: memref<1x32x256xf32, #tpu.memory_space<vmem>>, %arg3: memref<4x256xi32, #tpu.memory_space<vmem>>, %arg4: memref<9x32x32xbf16, #tpu.memory_space<vmem>>, %arg5: memref<32x1xf32, #tpu.memory_space<vmem>>, %arg6: memref<9x32x32xbf16, #tpu.memory_space<vmem>>, %arg7: memref<32x1xf32, #tpu.memory_space<vmem>>, %arg8: memref<9x32x32xbf16, #tpu.memory_space<vmem>>, %arg9: memref<32x1xf32, #tpu.memory_space<vmem>>, %arg10: memref<32x32xbf16, #tpu.memory_space<vmem>>, %arg11: memref<32x1xf32, #tpu.memory_space<vmem>>, %arg12: memref<32x32xbf16, #tpu.memory_space<vmem>>, %arg13: memref<32x1xf32, #tpu.memory_space<vmem>>, %arg14: memref<1x32x256xf32, #tpu.memory_space<vmem>>, %arg15: memref<1x32x256xf32, #tpu.memory_space<vmem>>) attributes {dimension_semantics = [#tpu.dimension_semantics<parallel>], iteration_bounds = array<i64: 2>, scalar_prefetch = 0 : i64, scratch_operands = 0 : i64, tpu.core_type = #tpu.core_type<tc>, window_params = [{transform_indices = @transform_0, window_bounds = array<i64: 1, 32, 256>}, {transform_indices = @transform_1, window_bounds = array<i64: 1, 32, 256>}, {pipeline_mode = #tpu.pipeline_mode<synchronous>, transform_indices = @transform_2, window_bounds = array<i64: 4, 256>}, {pipeline_mode = #tpu.pipeline_mode<synchronous>, transform_indices = @transform_3, window_bounds = array<i64: 9, 32, 32>}, {pipeline_mode = #tpu.pipeline_mode<synchronous>, transform_indices = @transform_4, window_bounds = array<i64: 32, 1>}, {pipeline_mode = #tpu.pipeline_mode<synchronous>, transform_indices = @transform_5, window_bounds = array<i64: 9, 32, 32>}, {pipeline_mode = #tpu.pipeline_mode<synchronous>, transform_indices = @transform_6, window_bounds = array<i64: 32, 1>}, {pipeline_mode = #tpu.pipeline_mode<synchronous>, transform_indices = @transform_7, window_bounds = array<i64: 9, 32, 32>}, {pipeline_mode = #tpu.pipeline_mode<synchronous>, transform_indices = @transform_8, window_bounds = array<i64: 32, 1>}, {pipeline_mode = #tpu.pipeline_mode<synchronous>, transform_indices = @transform_9, window_bounds = array<i64: 32, 32>}, {pipeline_mode = #tpu.pipeline_mode<synchronous>, transform_indices = @transform_10, window_bounds = array<i64: 32, 1>}, {pipeline_mode = #tpu.pipeline_mode<synchronous>, transform_indices = @transform_11, window_bounds = array<i64: 32, 32>}, {pipeline_mode = #tpu.pipeline_mode<synchronous>, transform_indices = @transform_12, window_bounds = array<i64: 32, 1>}, {transform_indices = @transform_13, window_bounds = array<i64: 1, 32, 256>}, {transform_indices = @transform_14, window_bounds = array<i64: 1, 32, 256>}]} {
    %c0 = arith.constant 0 : index
    %c0_0 = arith.constant 0 : index
    %0 = vector.load %arg3[%c0, %c0_0] : memref<4x256xi32, #tpu.memory_space<vmem>>, vector<4x256xi32>
    %1 = vector.extract_strided_slice %0 {offsets = [0, 0], sizes = [1, 256], strides = [1, 1]} : vector<4x256xi32> to vector<1x256xi32>
    %c0_i32 = arith.constant 0 : i32
    %2 = vector.broadcast %c0_i32 : i32 to vector<1x256xi32>
    %3 = arith.cmpi ne, %1, %2 : vector<1x256xi32>
    %4 = vector.extract_strided_slice %0 {offsets = [1, 0], sizes = [1, 256], strides = [1, 1]} : vector<4x256xi32> to vector<1x256xi32>
    %c0_i32_1 = arith.constant 0 : i32
    %5 = vector.broadcast %c0_i32_1 : i32 to vector<1x256xi32>
    %6 = arith.cmpi ne, %4, %5 : vector<1x256xi32>
    %7 = vector.extract_strided_slice %0 {offsets = [2, 0], sizes = [1, 256], strides = [1, 1]} : vector<4x256xi32> to vector<1x256xi32>
    %c0_i32_2 = arith.constant 0 : i32
    %8 = vector.broadcast %c0_i32_2 : i32 to vector<1x256xi32>
    %9 = arith.cmpi ne, %7, %8 : vector<1x256xi32>
    %10 = vector.extract_strided_slice %0 {offsets = [3, 0], sizes = [1, 256], strides = [1, 1]} : vector<4x256xi32> to vector<1x256xi32>
    %c0_i32_3 = arith.constant 0 : i32
    %11 = vector.broadcast %c0_i32_3 : i32 to vector<1x256xi32>
    %12 = arith.cmpi ne, %10, %11 : vector<1x256xi32>
    %c0_4 = arith.constant 0 : index
    %c0_5 = arith.constant 0 : index
    %13 = vector.load %arg10[%c0_4, %c0_5] : memref<32x32xbf16, #tpu.memory_space<vmem>>, vector<32x32xbf16>
    %c0_6 = arith.constant 0 : index
    %c0_7 = arith.constant 0 : index
    %14 = vector.load %arg11[%c0_6, %c0_7] : memref<32x1xf32, #tpu.memory_space<vmem>>, vector<32x1xf32>
    %c0_8 = arith.constant 0 : index
    %c0_9 = arith.constant 0 : index
    %15 = vector.load %arg12[%c0_8, %c0_9] : memref<32x32xbf16, #tpu.memory_space<vmem>>, vector<32x32xbf16>
    %c0_10 = arith.constant 0 : index
    %c0_11 = arith.constant 0 : index
    %16 = vector.load %arg13[%c0_10, %c0_11] : memref<32x1xf32, #tpu.memory_space<vmem>>, vector<32x1xf32>
    %c0_12 = arith.constant 0 : index
    %c0_13 = arith.constant 0 : index
    %c0_14 = arith.constant 0 : index
    %17 = vector.load %arg1[%c0_12, %c0_13, %c0_14] : memref<1x32x256xf32, #tpu.memory_space<vmem>>, vector<1x32x256xf32>
    %18 = vector.shape_cast %17 : vector<1x32x256xf32> to vector<32x256xf32>
    %c0_15 = arith.constant 0 : index
    %c0_16 = arith.constant 0 : index
    %c0_17 = arith.constant 0 : index
    %19 = vector.load %arg2[%c0_15, %c0_16, %c0_17] : memref<1x32x256xf32, #tpu.memory_space<vmem>>, vector<1x32x256xf32>
    %20 = vector.shape_cast %19 : vector<1x32x256xf32> to vector<32x256xf32>
    %c255_i32 = arith.constant 255 : i32
    %21 = tpu.dynamic_rotate %18 by %c255_i32 dim 1 : vector<32x256xf32>, i32 -> vector<32x256xf32>
    %c1_i32 = arith.constant 1 : i32
    %22 = tpu.dynamic_rotate %18 by %c1_i32 dim 1 : vector<32x256xf32>, i32 -> vector<32x256xf32>
    %23 = vector.shape_cast %3 : vector<1x256xi1> to vector<1x256xi1>
    %24 = vector.broadcast %23 : vector<1x256xi1> to vector<32x256xi1>
    %25 = arith.select %24, %21, %22 : vector<32x256xi1>, vector<32x256xf32>
    %26 = vector.shape_cast %6 : vector<1x256xi1> to vector<1x256xi1>
    %27 = vector.broadcast %26 : vector<1x256xi1> to vector<32x256xi1>
    %28 = arith.select %27, %22, %21 : vector<32x256xi1>, vector<32x256xf32>
    %c240_i32 = arith.constant 240 : i32
    %29 = tpu.dynamic_rotate %25 by %c240_i32 dim 1 : vector<32x256xf32>, i32 -> vector<32x256xf32>
    %c16_i32 = arith.constant 16 : i32
    %30 = tpu.dynamic_rotate %25 by %c16_i32 dim 1 : vector<32x256xf32>, i32 -> vector<32x256xf32>
    %31 = vector.shape_cast %9 : vector<1x256xi1> to vector<1x256xi1>
    %32 = vector.broadcast %31 : vector<1x256xi1> to vector<32x256xi1>
    %33 = arith.select %32, %29, %30 : vector<32x256xi1>, vector<32x256xf32>
    %34 = vector.shape_cast %12 : vector<1x256xi1> to vector<1x256xi1>
    %35 = vector.broadcast %34 : vector<1x256xi1> to vector<32x256xi1>
    %36 = arith.select %35, %30, %29 : vector<32x256xi1>, vector<32x256xf32>
    %c0_18 = arith.constant 0 : index
    %c0_19 = arith.constant 0 : index
    %c0_20 = arith.constant 0 : index
    %37 = vector.load %arg4[%c0_18, %c0_19, %c0_20] : memref<9x32x32xbf16, #tpu.memory_space<vmem>>, vector<1x32x32xbf16>
    %38 = vector.shape_cast %37 : vector<1x32x32xbf16> to vector<32x32xbf16>
    %39 = arith.truncf %33 : vector<32x256xf32> to vector<32x256xbf16>
    %cst = arith.constant dense<0.000000e+00> : vector<32x256xf32>
    %40 = tpu.matmul %38, %39, %cst {dimension_numbers = #tpu.dot_dimension_numbers<[1], [0], [0], [1], [0, 0, 1, 1], [], []>} : vector<32x32xbf16>, vector<32x256xbf16>, vector<32x256xf32> -> vector<32x256xf32>
    %c3 = arith.constant 3 : index
    %c0_21 = arith.constant 0 : index
    %c0_22 = arith.constant 0 : index
    %41 = vector.load %arg4[%c3, %c0_21, %c0_22] : memref<9x32x32xbf16, #tpu.memory_space<vmem>>, vector<1x32x32xbf16>
    %42 = vector.shape_cast %41 : vector<1x32x32xbf16> to vector<32x32xbf16>
    %43 = arith.truncf %25 : vector<32x256xf32> to vector<32x256xbf16>
    %cst_23 = arith.constant dense<0.000000e+00> : vector<32x256xf32>
    %44 = tpu.matmul %42, %43, %cst_23 {dimension_numbers = #tpu.dot_dimension_numbers<[1], [0], [0], [1], [0, 0, 1, 1], [], []>} : vector<32x32xbf16>, vector<32x256xbf16>, vector<32x256xf32> -> vector<32x256xf32>
    %45 = arith.addf %40, %44 : vector<32x256xf32>
    %c6 = arith.constant 6 : index
    %c0_24 = arith.constant 0 : index
    %c0_25 = arith.constant 0 : index
    %46 = vector.load %arg4[%c6, %c0_24, %c0_25] : memref<9x32x32xbf16, #tpu.memory_space<vmem>>, vector<1x32x32xbf16>
    %47 = vector.shape_cast %46 : vector<1x32x32xbf16> to vector<32x32xbf16>
    %48 = arith.truncf %36 : vector<32x256xf32> to vector<32x256xbf16>
    %cst_26 = arith.constant dense<0.000000e+00> : vector<32x256xf32>
    %49 = tpu.matmul %47, %48, %cst_26 {dimension_numbers = #tpu.dot_dimension_numbers<[1], [0], [0], [1], [0, 0, 1, 1], [], []>} : vector<32x32xbf16>, vector<32x256xbf16>, vector<32x256xf32> -> vector<32x256xf32>
    %50 = arith.addf %45, %49 : vector<32x256xf32>
    %c240_i32_27 = arith.constant 240 : i32
    %51 = tpu.dynamic_rotate %18 by %c240_i32_27 dim 1 : vector<32x256xf32>, i32 -> vector<32x256xf32>
    %c16_i32_28 = arith.constant 16 : i32
    %52 = tpu.dynamic_rotate %18 by %c16_i32_28 dim 1 : vector<32x256xf32>, i32 -> vector<32x256xf32>
    %53 = vector.shape_cast %9 : vector<1x256xi1> to vector<1x256xi1>
    %54 = vector.broadcast %53 : vector<1x256xi1> to vector<32x256xi1>
    %55 = arith.select %54, %51, %52 : vector<32x256xi1>, vector<32x256xf32>
    %56 = vector.shape_cast %12 : vector<1x256xi1> to vector<1x256xi1>
    %57 = vector.broadcast %56 : vector<1x256xi1> to vector<32x256xi1>
    %58 = arith.select %57, %52, %51 : vector<32x256xi1>, vector<32x256xf32>
    %c1 = arith.constant 1 : index
    %c0_29 = arith.constant 0 : index
    %c0_30 = arith.constant 0 : index
    %59 = vector.load %arg4[%c1, %c0_29, %c0_30] : memref<9x32x32xbf16, #tpu.memory_space<vmem>>, vector<1x32x32xbf16>
    %60 = vector.shape_cast %59 : vector<1x32x32xbf16> to vector<32x32xbf16>
    %61 = arith.truncf %55 : vector<32x256xf32> to vector<32x256xbf16>
    %cst_31 = arith.constant dense<0.000000e+00> : vector<32x256xf32>
    %62 = tpu.matmul %60, %61, %cst_31 {dimension_numbers = #tpu.dot_dimension_numbers<[1], [0], [0], [1], [0, 0, 1, 1], [], []>} : vector<32x32xbf16>, vector<32x256xbf16>, vector<32x256xf32> -> vector<32x256xf32>
    %63 = arith.addf %50, %62 : vector<32x256xf32>
    %c4 = arith.constant 4 : index
    %c0_32 = arith.constant 0 : index
    %c0_33 = arith.constant 0 : index
    %64 = vector.load %arg4[%c4, %c0_32, %c0_33] : memref<9x32x32xbf16, #tpu.memory_space<vmem>>, vector<1x32x32xbf16>
    %65 = vector.shape_cast %64 : vector<1x32x32xbf16> to vector<32x32xbf16>
    %66 = arith.truncf %18 : vector<32x256xf32> to vector<32x256xbf16>
    %cst_34 = arith.constant dense<0.000000e+00> : vector<32x256xf32>
    %67 = tpu.matmul %65, %66, %cst_34 {dimension_numbers = #tpu.dot_dimension_numbers<[1], [0], [0], [1], [0, 0, 1, 1], [], []>} : vector<32x32xbf16>, vector<32x256xbf16>, vector<32x256xf32> -> vector<32x256xf32>
    %68 = arith.addf %63, %67 : vector<32x256xf32>
    %c7 = arith.constant 7 : index
    %c0_35 = arith.constant 0 : index
    %c0_36 = arith.constant 0 : index
    %69 = vector.load %arg4[%c7, %c0_35, %c0_36] : memref<9x32x32xbf16, #tpu.memory_space<vmem>>, vector<1x32x32xbf16>
    %70 = vector.shape_cast %69 : vector<1x32x32xbf16> to vector<32x32xbf16>
    %71 = arith.truncf %58 : vector<32x256xf32> to vector<32x256xbf16>
    %cst_37 = arith.constant dense<0.000000e+00> : vector<32x256xf32>
    %72 = tpu.matmul %70, %71, %cst_37 {dimension_numbers = #tpu.dot_dimension_numbers<[1], [0], [0], [1], [0, 0, 1, 1], [], []>} : vector<32x32xbf16>, vector<32x256xbf16>, vector<32x256xf32> -> vector<32x256xf32>
    %73 = arith.addf %68, %72 : vector<32x256xf32>
    %c240_i32_38 = arith.constant 240 : i32
    %74 = tpu.dynamic_rotate %28 by %c240_i32_38 dim 1 : vector<32x256xf32>, i32 -> vector<32x256xf32>
    %c16_i32_39 = arith.constant 16 : i32
    %75 = tpu.dynamic_rotate %28 by %c16_i32_39 dim 1 : vector<32x256xf32>, i32 -> vector<32x256xf32>
    %76 = vector.shape_cast %9 : vector<1x256xi1> to vector<1x256xi1>
    %77 = vector.broadcast %76 : vector<1x256xi1> to vector<32x256xi1>
    %78 = arith.select %77, %74, %75 : vector<32x256xi1>, vector<32x256xf32>
    %79 = vector.shape_cast %12 : vector<1x256xi1> to vector<1x256xi1>
    %80 = vector.broadcast %79 : vector<1x256xi1> to vector<32x256xi1>
    %81 = arith.select %80, %75, %74 : vector<32x256xi1>, vector<32x256xf32>
    %c2 = arith.constant 2 : index
    %c0_40 = arith.constant 0 : index
    %c0_41 = arith.constant 0 : index
    %82 = vector.load %arg4[%c2, %c0_40, %c0_41] : memref<9x32x32xbf16, #tpu.memory_space<vmem>>, vector<1x32x32xbf16>
    %83 = vector.shape_cast %82 : vector<1x32x32xbf16> to vector<32x32xbf16>
    %84 = arith.truncf %78 : vector<32x256xf32> to vector<32x256xbf16>
    %cst_42 = arith.constant dense<0.000000e+00> : vector<32x256xf32>
    %85 = tpu.matmul %83, %84, %cst_42 {dimension_numbers = #tpu.dot_dimension_numbers<[1], [0], [0], [1], [0, 0, 1, 1], [], []>} : vector<32x32xbf16>, vector<32x256xbf16>, vector<32x256xf32> -> vector<32x256xf32>
    %86 = arith.addf %73, %85 : vector<32x256xf32>
    %c5 = arith.constant 5 : index
    %c0_43 = arith.constant 0 : index
    %c0_44 = arith.constant 0 : index
    %87 = vector.load %arg4[%c5, %c0_43, %c0_44] : memref<9x32x32xbf16, #tpu.memory_space<vmem>>, vector<1x32x32xbf16>
    %88 = vector.shape_cast %87 : vector<1x32x32xbf16> to vector<32x32xbf16>
    %89 = arith.truncf %28 : vector<32x256xf32> to vector<32x256xbf16>
    %cst_45 = arith.constant dense<0.000000e+00> : vector<32x256xf32>
    %90 = tpu.matmul %88, %89, %cst_45 {dimension_numbers = #tpu.dot_dimension_numbers<[1], [0], [0], [1], [0, 0, 1, 1], [], []>} : vector<32x32xbf16>, vector<32x256xbf16>, vector<32x256xf32> -> vector<32x256xf32>
    %91 = arith.addf %86, %90 : vector<32x256xf32>
    %c8 = arith.constant 8 : index
    %c0_46 = arith.constant 0 : index
    %c0_47 = arith.constant 0 : index
    %92 = vector.load %arg4[%c8, %c0_46, %c0_47] : memref<9x32x32xbf16, #tpu.memory_space<vmem>>, vector<1x32x32xbf16>
    %93 = vector.shape_cast %92 : vector<1x32x32xbf16> to vector<32x32xbf16>
    %94 = arith.truncf %81 : vector<32x256xf32> to vector<32x256xbf16>
    %cst_48 = arith.constant dense<0.000000e+00> : vector<32x256xf32>
    %95 = tpu.matmul %93, %94, %cst_48 {dimension_numbers = #tpu.dot_dimension_numbers<[1], [0], [0], [1], [0, 0, 1, 1], [], []>} : vector<32x32xbf16>, vector<32x256xbf16>, vector<32x256xf32> -> vector<32x256xf32>
    %96 = arith.addf %91, %95 : vector<32x256xf32>
    %c0_49 = arith.constant 0 : index
    %c0_50 = arith.constant 0 : index
    %97 = vector.load %arg5[%c0_49, %c0_50] : memref<32x1xf32, #tpu.memory_space<vmem>>, vector<32x1xf32>
    %98 = vector.broadcast %97 : vector<32x1xf32> to vector<32x256xf32>
    %99 = arith.addf %96, %98 : vector<32x256xf32>
    %cst_51 = arith.constant 0.000000e+00 : f32
    %100 = vector.broadcast %cst_51 : f32 to vector<32x256xf32>
    %101 = arith.maximumf %99, %100 : vector<32x256xf32>
    %c255_i32_52 = arith.constant 255 : i32
    %102 = tpu.dynamic_rotate %101 by %c255_i32_52 dim 1 : vector<32x256xf32>, i32 -> vector<32x256xf32>
    %c1_i32_53 = arith.constant 1 : i32
    %103 = tpu.dynamic_rotate %101 by %c1_i32_53 dim 1 : vector<32x256xf32>, i32 -> vector<32x256xf32>
    %104 = vector.shape_cast %3 : vector<1x256xi1> to vector<1x256xi1>
    %105 = vector.broadcast %104 : vector<1x256xi1> to vector<32x256xi1>
    %106 = arith.select %105, %102, %103 : vector<32x256xi1>, vector<32x256xf32>
    %107 = vector.shape_cast %6 : vector<1x256xi1> to vector<1x256xi1>
    %108 = vector.broadcast %107 : vector<1x256xi1> to vector<32x256xi1>
    %109 = arith.select %108, %103, %102 : vector<32x256xi1>, vector<32x256xf32>
    %c240_i32_54 = arith.constant 240 : i32
    %110 = tpu.dynamic_rotate %106 by %c240_i32_54 dim 1 : vector<32x256xf32>, i32 -> vector<32x256xf32>
    %c16_i32_55 = arith.constant 16 : i32
    %111 = tpu.dynamic_rotate %106 by %c16_i32_55 dim 1 : vector<32x256xf32>, i32 -> vector<32x256xf32>
    %112 = vector.shape_cast %9 : vector<1x256xi1> to vector<1x256xi1>
    %113 = vector.broadcast %112 : vector<1x256xi1> to vector<32x256xi1>
    %114 = arith.select %113, %110, %111 : vector<32x256xi1>, vector<32x256xf32>
    %115 = vector.shape_cast %12 : vector<1x256xi1> to vector<1x256xi1>
    %116 = vector.broadcast %115 : vector<1x256xi1> to vector<32x256xi1>
    %117 = arith.select %116, %111, %110 : vector<32x256xi1>, vector<32x256xf32>
    %c0_56 = arith.constant 0 : index
    %c0_57 = arith.constant 0 : index
    %c0_58 = arith.constant 0 : index
    %118 = vector.load %arg6[%c0_56, %c0_57, %c0_58] : memref<9x32x32xbf16, #tpu.memory_space<vmem>>, vector<1x32x32xbf16>
    %119 = vector.shape_cast %118 : vector<1x32x32xbf16> to vector<32x32xbf16>
    %120 = arith.truncf %114 : vector<32x256xf32> to vector<32x256xbf16>
    %cst_59 = arith.constant dense<0.000000e+00> : vector<32x256xf32>
    %121 = tpu.matmul %119, %120, %cst_59 {dimension_numbers = #tpu.dot_dimension_numbers<[1], [0], [0], [1], [0, 0, 1, 1], [], []>} : vector<32x32xbf16>, vector<32x256xbf16>, vector<32x256xf32> -> vector<32x256xf32>
    %c3_60 = arith.constant 3 : index
    %c0_61 = arith.constant 0 : index
    %c0_62 = arith.constant 0 : index
    %122 = vector.load %arg6[%c3_60, %c0_61, %c0_62] : memref<9x32x32xbf16, #tpu.memory_space<vmem>>, vector<1x32x32xbf16>
    %123 = vector.shape_cast %122 : vector<1x32x32xbf16> to vector<32x32xbf16>
    %124 = arith.truncf %106 : vector<32x256xf32> to vector<32x256xbf16>
    %cst_63 = arith.constant dense<0.000000e+00> : vector<32x256xf32>
    %125 = tpu.matmul %123, %124, %cst_63 {dimension_numbers = #tpu.dot_dimension_numbers<[1], [0], [0], [1], [0, 0, 1, 1], [], []>} : vector<32x32xbf16>, vector<32x256xbf16>, vector<32x256xf32> -> vector<32x256xf32>
    %126 = arith.addf %121, %125 : vector<32x256xf32>
    %c6_64 = arith.constant 6 : index
    %c0_65 = arith.constant 0 : index
    %c0_66 = arith.constant 0 : index
    %127 = vector.load %arg6[%c6_64, %c0_65, %c0_66] : memref<9x32x32xbf16, #tpu.memory_space<vmem>>, vector<1x32x32xbf16>
    %128 = vector.shape_cast %127 : vector<1x32x32xbf16> to vector<32x32xbf16>
    %129 = arith.truncf %117 : vector<32x256xf32> to vector<32x256xbf16>
    %cst_67 = arith.constant dense<0.000000e+00> : vector<32x256xf32>
    %130 = tpu.matmul %128, %129, %cst_67 {dimension_numbers = #tpu.dot_dimension_numbers<[1], [0], [0], [1], [0, 0, 1, 1], [], []>} : vector<32x32xbf16>, vector<32x256xbf16>, vector<32x256xf32> -> vector<32x256xf32>
    %131 = arith.addf %126, %130 : vector<32x256xf32>
    %c240_i32_68 = arith.constant 240 : i32
    %132 = tpu.dynamic_rotate %101 by %c240_i32_68 dim 1 : vector<32x256xf32>, i32 -> vector<32x256xf32>
    %c16_i32_69 = arith.constant 16 : i32
    %133 = tpu.dynamic_rotate %101 by %c16_i32_69 dim 1 : vector<32x256xf32>, i32 -> vector<32x256xf32>
    %134 = vector.shape_cast %9 : vector<1x256xi1> to vector<1x256xi1>
    %135 = vector.broadcast %134 : vector<1x256xi1> to vector<32x256xi1>
    %136 = arith.select %135, %132, %133 : vector<32x256xi1>, vector<32x256xf32>
    %137 = vector.shape_cast %12 : vector<1x256xi1> to vector<1x256xi1>
    %138 = vector.broadcast %137 : vector<1x256xi1> to vector<32x256xi1>
    %139 = arith.select %138, %133, %132 : vector<32x256xi1>, vector<32x256xf32>
    %c1_70 = arith.constant 1 : index
    %c0_71 = arith.constant 0 : index
    %c0_72 = arith.constant 0 : index
    %140 = vector.load %arg6[%c1_70, %c0_71, %c0_72] : memref<9x32x32xbf16, #tpu.memory_space<vmem>>, vector<1x32x32xbf16>
    %141 = vector.shape_cast %140 : vector<1x32x32xbf16> to vector<32x32xbf16>
    %142 = arith.truncf %136 : vector<32x256xf32> to vector<32x256xbf16>
    %cst_73 = arith.constant dense<0.000000e+00> : vector<32x256xf32>
    %143 = tpu.matmul %141, %142, %cst_73 {dimension_numbers = #tpu.dot_dimension_numbers<[1], [0], [0], [1], [0, 0, 1, 1], [], []>} : vector<32x32xbf16>, vector<32x256xbf16>, vector<32x256xf32> -> vector<32x256xf32>
    %144 = arith.addf %131, %143 : vector<32x256xf32>
    %c4_74 = arith.constant 4 : index
    %c0_75 = arith.constant 0 : index
    %c0_76 = arith.constant 0 : index
    %145 = vector.load %arg6[%c4_74, %c0_75, %c0_76] : memref<9x32x32xbf16, #tpu.memory_space<vmem>>, vector<1x32x32xbf16>
    %146 = vector.shape_cast %145 : vector<1x32x32xbf16> to vector<32x32xbf16>
    %147 = arith.truncf %101 : vector<32x256xf32> to vector<32x256xbf16>
    %cst_77 = arith.constant dense<0.000000e+00> : vector<32x256xf32>
    %148 = tpu.matmul %146, %147, %cst_77 {dimension_numbers = #tpu.dot_dimension_numbers<[1], [0], [0], [1], [0, 0, 1, 1], [], []>} : vector<32x32xbf16>, vector<32x256xbf16>, vector<32x256xf32> -> vector<32x256xf32>
    %149 = arith.addf %144, %148 : vector<32x256xf32>
    %c7_78 = arith.constant 7 : index
    %c0_79 = arith.constant 0 : index
    %c0_80 = arith.constant 0 : index
    %150 = vector.load %arg6[%c7_78, %c0_79, %c0_80] : memref<9x32x32xbf16, #tpu.memory_space<vmem>>, vector<1x32x32xbf16>
    %151 = vector.shape_cast %150 : vector<1x32x32xbf16> to vector<32x32xbf16>
    %152 = arith.truncf %139 : vector<32x256xf32> to vector<32x256xbf16>
    %cst_81 = arith.constant dense<0.000000e+00> : vector<32x256xf32>
    %153 = tpu.matmul %151, %152, %cst_81 {dimension_numbers = #tpu.dot_dimension_numbers<[1], [0], [0], [1], [0, 0, 1, 1], [], []>} : vector<32x32xbf16>, vector<32x256xbf16>, vector<32x256xf32> -> vector<32x256xf32>
    %154 = arith.addf %149, %153 : vector<32x256xf32>
    %c240_i32_82 = arith.constant 240 : i32
    %155 = tpu.dynamic_rotate %109 by %c240_i32_82 dim 1 : vector<32x256xf32>, i32 -> vector<32x256xf32>
    %c16_i32_83 = arith.constant 16 : i32
    %156 = tpu.dynamic_rotate %109 by %c16_i32_83 dim 1 : vector<32x256xf32>, i32 -> vector<32x256xf32>
    %157 = vector.shape_cast %9 : vector<1x256xi1> to vector<1x256xi1>
    %158 = vector.broadcast %157 : vector<1x256xi1> to vector<32x256xi1>
    %159 = arith.select %158, %155, %156 : vector<32x256xi1>, vector<32x256xf32>
    %160 = vector.shape_cast %12 : vector<1x256xi1> to vector<1x256xi1>
    %161 = vector.broadcast %160 : vector<1x256xi1> to vector<32x256xi1>
    %162 = arith.select %161, %156, %155 : vector<32x256xi1>, vector<32x256xf32>
    %c2_84 = arith.constant 2 : index
    %c0_85 = arith.constant 0 : index
    %c0_86 = arith.constant 0 : index
    %163 = vector.load %arg6[%c2_84, %c0_85, %c0_86] : memref<9x32x32xbf16, #tpu.memory_space<vmem>>, vector<1x32x32xbf16>
    %164 = vector.shape_cast %163 : vector<1x32x32xbf16> to vector<32x32xbf16>
    %165 = arith.truncf %159 : vector<32x256xf32> to vector<32x256xbf16>
    %cst_87 = arith.constant dense<0.000000e+00> : vector<32x256xf32>
    %166 = tpu.matmul %164, %165, %cst_87 {dimension_numbers = #tpu.dot_dimension_numbers<[1], [0], [0], [1], [0, 0, 1, 1], [], []>} : vector<32x32xbf16>, vector<32x256xbf16>, vector<32x256xf32> -> vector<32x256xf32>
    %167 = arith.addf %154, %166 : vector<32x256xf32>
    %c5_88 = arith.constant 5 : index
    %c0_89 = arith.constant 0 : index
    %c0_90 = arith.constant 0 : index
    %168 = vector.load %arg6[%c5_88, %c0_89, %c0_90] : memref<9x32x32xbf16, #tpu.memory_space<vmem>>, vector<1x32x32xbf16>
    %169 = vector.shape_cast %168 : vector<1x32x32xbf16> to vector<32x32xbf16>
    %170 = arith.truncf %109 : vector<32x256xf32> to vector<32x256xbf16>
    %cst_91 = arith.constant dense<0.000000e+00> : vector<32x256xf32>
    %171 = tpu.matmul %169, %170, %cst_91 {dimension_numbers = #tpu.dot_dimension_numbers<[1], [0], [0], [1], [0, 0, 1, 1], [], []>} : vector<32x32xbf16>, vector<32x256xbf16>, vector<32x256xf32> -> vector<32x256xf32>
    %172 = arith.addf %167, %171 : vector<32x256xf32>
    %c8_92 = arith.constant 8 : index
    %c0_93 = arith.constant 0 : index
    %c0_94 = arith.constant 0 : index
    %173 = vector.load %arg6[%c8_92, %c0_93, %c0_94] : memref<9x32x32xbf16, #tpu.memory_space<vmem>>, vector<1x32x32xbf16>
    %174 = vector.shape_cast %173 : vector<1x32x32xbf16> to vector<32x32xbf16>
    %175 = arith.truncf %162 : vector<32x256xf32> to vector<32x256xbf16>
    %cst_95 = arith.constant dense<0.000000e+00> : vector<32x256xf32>
    %176 = tpu.matmul %174, %175, %cst_95 {dimension_numbers = #tpu.dot_dimension_numbers<[1], [0], [0], [1], [0, 0, 1, 1], [], []>} : vector<32x32xbf16>, vector<32x256xbf16>, vector<32x256xf32> -> vector<32x256xf32>
    %177 = arith.addf %172, %176 : vector<32x256xf32>
    %c0_96 = arith.constant 0 : index
    %c0_97 = arith.constant 0 : index
    %178 = vector.load %arg7[%c0_96, %c0_97] : memref<32x1xf32, #tpu.memory_space<vmem>>, vector<32x1xf32>
    %179 = vector.broadcast %178 : vector<32x1xf32> to vector<32x256xf32>
    %180 = arith.addf %177, %179 : vector<32x256xf32>
    %181 = arith.addf %180, %18 : vector<32x256xf32>
    %cst_98 = arith.constant 0.000000e+00 : f32
    %182 = vector.broadcast %cst_98 : f32 to vector<32x256xf32>
    %183 = arith.maximumf %181, %182 : vector<32x256xf32>
    %c255_i32_99 = arith.constant 255 : i32
    %184 = tpu.dynamic_rotate %183 by %c255_i32_99 dim 1 : vector<32x256xf32>, i32 -> vector<32x256xf32>
    %c1_i32_100 = arith.constant 1 : i32
    %185 = tpu.dynamic_rotate %183 by %c1_i32_100 dim 1 : vector<32x256xf32>, i32 -> vector<32x256xf32>
    %186 = vector.shape_cast %3 : vector<1x256xi1> to vector<1x256xi1>
    %187 = vector.broadcast %186 : vector<1x256xi1> to vector<32x256xi1>
    %188 = arith.select %187, %184, %185 : vector<32x256xi1>, vector<32x256xf32>
    %189 = vector.shape_cast %6 : vector<1x256xi1> to vector<1x256xi1>
    %190 = vector.broadcast %189 : vector<1x256xi1> to vector<32x256xi1>
    %191 = arith.select %190, %185, %184 : vector<32x256xi1>, vector<32x256xf32>
    %c240_i32_101 = arith.constant 240 : i32
    %192 = tpu.dynamic_rotate %188 by %c240_i32_101 dim 1 : vector<32x256xf32>, i32 -> vector<32x256xf32>
    %c16_i32_102 = arith.constant 16 : i32
    %193 = tpu.dynamic_rotate %188 by %c16_i32_102 dim 1 : vector<32x256xf32>, i32 -> vector<32x256xf32>
    %194 = vector.shape_cast %9 : vector<1x256xi1> to vector<1x256xi1>
    %195 = vector.broadcast %194 : vector<1x256xi1> to vector<32x256xi1>
    %196 = arith.select %195, %192, %193 : vector<32x256xi1>, vector<32x256xf32>
    %197 = vector.shape_cast %12 : vector<1x256xi1> to vector<1x256xi1>
    %198 = vector.broadcast %197 : vector<1x256xi1> to vector<32x256xi1>
    %199 = arith.select %198, %193, %192 : vector<32x256xi1>, vector<32x256xf32>
    %c0_103 = arith.constant 0 : index
    %c0_104 = arith.constant 0 : index
    %c0_105 = arith.constant 0 : index
    %200 = vector.load %arg8[%c0_103, %c0_104, %c0_105] : memref<9x32x32xbf16, #tpu.memory_space<vmem>>, vector<1x32x32xbf16>
    %201 = vector.shape_cast %200 : vector<1x32x32xbf16> to vector<32x32xbf16>
    %202 = arith.truncf %196 : vector<32x256xf32> to vector<32x256xbf16>
    %cst_106 = arith.constant dense<0.000000e+00> : vector<32x256xf32>
    %203 = tpu.matmul %201, %202, %cst_106 {dimension_numbers = #tpu.dot_dimension_numbers<[1], [0], [0], [1], [0, 0, 1, 1], [], []>} : vector<32x32xbf16>, vector<32x256xbf16>, vector<32x256xf32> -> vector<32x256xf32>
    %c3_107 = arith.constant 3 : index
    %c0_108 = arith.constant 0 : index
    %c0_109 = arith.constant 0 : index
    %204 = vector.load %arg8[%c3_107, %c0_108, %c0_109] : memref<9x32x32xbf16, #tpu.memory_space<vmem>>, vector<1x32x32xbf16>
    %205 = vector.shape_cast %204 : vector<1x32x32xbf16> to vector<32x32xbf16>
    %206 = arith.truncf %188 : vector<32x256xf32> to vector<32x256xbf16>
    %cst_110 = arith.constant dense<0.000000e+00> : vector<32x256xf32>
    %207 = tpu.matmul %205, %206, %cst_110 {dimension_numbers = #tpu.dot_dimension_numbers<[1], [0], [0], [1], [0, 0, 1, 1], [], []>} : vector<32x32xbf16>, vector<32x256xbf16>, vector<32x256xf32> -> vector<32x256xf32>
    %208 = arith.addf %203, %207 : vector<32x256xf32>
    %c6_111 = arith.constant 6 : index
    %c0_112 = arith.constant 0 : index
    %c0_113 = arith.constant 0 : index
    %209 = vector.load %arg8[%c6_111, %c0_112, %c0_113] : memref<9x32x32xbf16, #tpu.memory_space<vmem>>, vector<1x32x32xbf16>
    %210 = vector.shape_cast %209 : vector<1x32x32xbf16> to vector<32x32xbf16>
    %211 = arith.truncf %199 : vector<32x256xf32> to vector<32x256xbf16>
    %cst_114 = arith.constant dense<0.000000e+00> : vector<32x256xf32>
    %212 = tpu.matmul %210, %211, %cst_114 {dimension_numbers = #tpu.dot_dimension_numbers<[1], [0], [0], [1], [0, 0, 1, 1], [], []>} : vector<32x32xbf16>, vector<32x256xbf16>, vector<32x256xf32> -> vector<32x256xf32>
    %213 = arith.addf %208, %212 : vector<32x256xf32>
    %c240_i32_115 = arith.constant 240 : i32
    %214 = tpu.dynamic_rotate %183 by %c240_i32_115 dim 1 : vector<32x256xf32>, i32 -> vector<32x256xf32>
    %c16_i32_116 = arith.constant 16 : i32
    %215 = tpu.dynamic_rotate %183 by %c16_i32_116 dim 1 : vector<32x256xf32>, i32 -> vector<32x256xf32>
    %216 = vector.shape_cast %9 : vector<1x256xi1> to vector<1x256xi1>
    %217 = vector.broadcast %216 : vector<1x256xi1> to vector<32x256xi1>
    %218 = arith.select %217, %214, %215 : vector<32x256xi1>, vector<32x256xf32>
    %219 = vector.shape_cast %12 : vector<1x256xi1> to vector<1x256xi1>
    %220 = vector.broadcast %219 : vector<1x256xi1> to vector<32x256xi1>
    %221 = arith.select %220, %215, %214 : vector<32x256xi1>, vector<32x256xf32>
    %c1_117 = arith.constant 1 : index
    %c0_118 = arith.constant 0 : index
    %c0_119 = arith.constant 0 : index
    %222 = vector.load %arg8[%c1_117, %c0_118, %c0_119] : memref<9x32x32xbf16, #tpu.memory_space<vmem>>, vector<1x32x32xbf16>
    %223 = vector.shape_cast %222 : vector<1x32x32xbf16> to vector<32x32xbf16>
    %224 = arith.truncf %218 : vector<32x256xf32> to vector<32x256xbf16>
    %cst_120 = arith.constant dense<0.000000e+00> : vector<32x256xf32>
    %225 = tpu.matmul %223, %224, %cst_120 {dimension_numbers = #tpu.dot_dimension_numbers<[1], [0], [0], [1], [0, 0, 1, 1], [], []>} : vector<32x32xbf16>, vector<32x256xbf16>, vector<32x256xf32> -> vector<32x256xf32>
    %226 = arith.addf %213, %225 : vector<32x256xf32>
    %c4_121 = arith.constant 4 : index
    %c0_122 = arith.constant 0 : index
    %c0_123 = arith.constant 0 : index
    %227 = vector.load %arg8[%c4_121, %c0_122, %c0_123] : memref<9x32x32xbf16, #tpu.memory_space<vmem>>, vector<1x32x32xbf16>
    %228 = vector.shape_cast %227 : vector<1x32x32xbf16> to vector<32x32xbf16>
    %229 = arith.truncf %183 : vector<32x256xf32> to vector<32x256xbf16>
    %cst_124 = arith.constant dense<0.000000e+00> : vector<32x256xf32>
    %230 = tpu.matmul %228, %229, %cst_124 {dimension_numbers = #tpu.dot_dimension_numbers<[1], [0], [0], [1], [0, 0, 1, 1], [], []>} : vector<32x32xbf16>, vector<32x256xbf16>, vector<32x256xf32> -> vector<32x256xf32>
    %231 = arith.addf %226, %230 : vector<32x256xf32>
    %c7_125 = arith.constant 7 : index
    %c0_126 = arith.constant 0 : index
    %c0_127 = arith.constant 0 : index
    %232 = vector.load %arg8[%c7_125, %c0_126, %c0_127] : memref<9x32x32xbf16, #tpu.memory_space<vmem>>, vector<1x32x32xbf16>
    %233 = vector.shape_cast %232 : vector<1x32x32xbf16> to vector<32x32xbf16>
    %234 = arith.truncf %221 : vector<32x256xf32> to vector<32x256xbf16>
    %cst_128 = arith.constant dense<0.000000e+00> : vector<32x256xf32>
    %235 = tpu.matmul %233, %234, %cst_128 {dimension_numbers = #tpu.dot_dimension_numbers<[1], [0], [0], [1], [0, 0, 1, 1], [], []>} : vector<32x32xbf16>, vector<32x256xbf16>, vector<32x256xf32> -> vector<32x256xf32>
    %236 = arith.addf %231, %235 : vector<32x256xf32>
    %c240_i32_129 = arith.constant 240 : i32
    %237 = tpu.dynamic_rotate %191 by %c240_i32_129 dim 1 : vector<32x256xf32>, i32 -> vector<32x256xf32>
    %c16_i32_130 = arith.constant 16 : i32
    %238 = tpu.dynamic_rotate %191 by %c16_i32_130 dim 1 : vector<32x256xf32>, i32 -> vector<32x256xf32>
    %239 = vector.shape_cast %9 : vector<1x256xi1> to vector<1x256xi1>
    %240 = vector.broadcast %239 : vector<1x256xi1> to vector<32x256xi1>
    %241 = arith.select %240, %237, %238 : vector<32x256xi1>, vector<32x256xf32>
    %242 = vector.shape_cast %12 : vector<1x256xi1> to vector<1x256xi1>
    %243 = vector.broadcast %242 : vector<1x256xi1> to vector<32x256xi1>
    %244 = arith.select %243, %238, %237 : vector<32x256xi1>, vector<32x256xf32>
    %c2_131 = arith.constant 2 : index
    %c0_132 = arith.constant 0 : index
    %c0_133 = arith.constant 0 : index
    %245 = vector.load %arg8[%c2_131, %c0_132, %c0_133] : memref<9x32x32xbf16, #tpu.memory_space<vmem>>, vector<1x32x32xbf16>
    %246 = vector.shape_cast %245 : vector<1x32x32xbf16> to vector<32x32xbf16>
    %247 = arith.truncf %241 : vector<32x256xf32> to vector<32x256xbf16>
    %cst_134 = arith.constant dense<0.000000e+00> : vector<32x256xf32>
    %248 = tpu.matmul %246, %247, %cst_134 {dimension_numbers = #tpu.dot_dimension_numbers<[1], [0], [0], [1], [0, 0, 1, 1], [], []>} : vector<32x32xbf16>, vector<32x256xbf16>, vector<32x256xf32> -> vector<32x256xf32>
    %249 = arith.addf %236, %248 : vector<32x256xf32>
    %c5_135 = arith.constant 5 : index
    %c0_136 = arith.constant 0 : index
    %c0_137 = arith.constant 0 : index
    %250 = vector.load %arg8[%c5_135, %c0_136, %c0_137] : memref<9x32x32xbf16, #tpu.memory_space<vmem>>, vector<1x32x32xbf16>
    %251 = vector.shape_cast %250 : vector<1x32x32xbf16> to vector<32x32xbf16>
    %252 = arith.truncf %191 : vector<32x256xf32> to vector<32x256xbf16>
    %cst_138 = arith.constant dense<0.000000e+00> : vector<32x256xf32>
    %253 = tpu.matmul %251, %252, %cst_138 {dimension_numbers = #tpu.dot_dimension_numbers<[1], [0], [0], [1], [0, 0, 1, 1], [], []>} : vector<32x32xbf16>, vector<32x256xbf16>, vector<32x256xf32> -> vector<32x256xf32>
    %254 = arith.addf %249, %253 : vector<32x256xf32>
    %c8_139 = arith.constant 8 : index
    %c0_140 = arith.constant 0 : index
    %c0_141 = arith.constant 0 : index
    %255 = vector.load %arg8[%c8_139, %c0_140, %c0_141] : memref<9x32x32xbf16, #tpu.memory_space<vmem>>, vector<1x32x32xbf16>
    %256 = vector.shape_cast %255 : vector<1x32x32xbf16> to vector<32x32xbf16>
    %257 = arith.truncf %244 : vector<32x256xf32> to vector<32x256xbf16>
    %cst_142 = arith.constant dense<0.000000e+00> : vector<32x256xf32>
    %258 = tpu.matmul %256, %257, %cst_142 {dimension_numbers = #tpu.dot_dimension_numbers<[1], [0], [0], [1], [0, 0, 1, 1], [], []>} : vector<32x32xbf16>, vector<32x256xbf16>, vector<32x256xf32> -> vector<32x256xf32>
    %259 = arith.addf %254, %258 : vector<32x256xf32>
    %c0_143 = arith.constant 0 : index
    %c0_144 = arith.constant 0 : index
    %260 = vector.load %arg9[%c0_143, %c0_144] : memref<32x1xf32, #tpu.memory_space<vmem>>, vector<32x1xf32>
    %261 = vector.broadcast %260 : vector<32x1xf32> to vector<32x256xf32>
    %262 = arith.addf %259, %261 : vector<32x256xf32>
    %263 = arith.addf %262, %20 : vector<32x256xf32>
    %cst_145 = arith.constant 0.000000e+00 : f32
    %264 = vector.broadcast %cst_145 : f32 to vector<32x256xf32>
    %265 = arith.maximumf %263, %264 : vector<32x256xf32>
    %c0_146 = arith.constant 0 : index
    %c0_147 = arith.constant 0 : index
    %c0_148 = arith.constant 0 : index
    %266 = vector.load %arg15[%c0_146, %c0_147, %c0_148] : memref<1x32x256xf32, #tpu.memory_space<vmem>>, vector<1x32x256xf32>
    %267 = vector.shape_cast %266 : vector<1x32x256xf32> to vector<32x256xf32>
    %268 = vector.shape_cast %265 : vector<32x256xf32> to vector<1x32x256xf32>
    tpu.vector_store %arg15[%c0_146, %c0_147, %c0_148], %268 {strides = array<i32>} : memref<1x32x256xf32, #tpu.memory_space<vmem>>, vector<1x32x256xf32>,
    %269 = arith.truncf %265 : vector<32x256xf32> to vector<32x256xbf16>
    %cst_149 = arith.constant dense<0.000000e+00> : vector<32x256xf32>
    %270 = tpu.matmul %13, %269, %cst_149 {dimension_numbers = #tpu.dot_dimension_numbers<[1], [0], [0], [1], [0, 0, 1, 1], [], []>} : vector<32x32xbf16>, vector<32x256xbf16>, vector<32x256xf32> -> vector<32x256xf32>
    %271 = vector.broadcast %14 : vector<32x1xf32> to vector<32x256xf32>
    %272 = arith.addf %270, %271 : vector<32x256xf32>
    %cst_150 = arith.constant 0.000000e+00 : f32
    %cst_151 = arith.constant 4.000000e+00 : f32
    %273 = vector.broadcast %cst_150 : f32 to vector<32x256xf32>
    %274 = arith.maximumf %273, %272 : vector<32x256xf32>
    %275 = vector.broadcast %cst_151 : f32 to vector<32x256xf32>
    %276 = arith.minimumf %275, %274 : vector<32x256xf32>
    %277 = math.roundeven %276 : vector<32x256xf32>
    %278 = arith.subf %272, %277 : vector<32x256xf32>
    %cst_152 = arith.constant 2.500000e-01 : f32
    %279 = vector.broadcast %cst_152 : f32 to vector<32x256xf32>
    %280 = arith.mulf %278, %279 : vector<32x256xf32>
    %281 = arith.addf %280, %272 : vector<32x256xf32>
    %cst_153 = arith.constant 0.000000e+00 : f32
    %cst_154 = arith.constant 4.000000e+00 : f32
    %282 = vector.broadcast %cst_153 : f32 to vector<32x256xf32>
    %283 = arith.maximumf %282, %281 : vector<32x256xf32>
    %284 = vector.broadcast %cst_154 : f32 to vector<32x256xf32>
    %285 = arith.minimumf %284, %283 : vector<32x256xf32>
    %286 = math.roundeven %285 : vector<32x256xf32>
    %287 = arith.addf %277, %286 : vector<32x256xf32>
    %288 = arith.subf %281, %286 : vector<32x256xf32>
    %cst_155 = arith.constant 2.500000e-01 : f32
    %289 = vector.broadcast %cst_155 : f32 to vector<32x256xf32>
    %290 = arith.mulf %288, %289 : vector<32x256xf32>
    %291 = arith.addf %290, %272 : vector<32x256xf32>
    %cst_156 = arith.constant 0.000000e+00 : f32
    %cst_157 = arith.constant 4.000000e+00 : f32
    %292 = vector.broadcast %cst_156 : f32 to vector<32x256xf32>
    %293 = arith.maximumf %292, %291 : vector<32x256xf32>
    %294 = vector.broadcast %cst_157 : f32 to vector<32x256xf32>
    %295 = arith.minimumf %294, %293 : vector<32x256xf32>
    %296 = math.roundeven %295 : vector<32x256xf32>
    %297 = arith.addf %287, %296 : vector<32x256xf32>
    %298 = arith.subf %291, %296 : vector<32x256xf32>
    %cst_158 = arith.constant 2.500000e-01 : f32
    %299 = vector.broadcast %cst_158 : f32 to vector<32x256xf32>
    %300 = arith.mulf %298, %299 : vector<32x256xf32>
    %301 = arith.addf %300, %272 : vector<32x256xf32>
    %cst_159 = arith.constant 0.000000e+00 : f32
    %cst_160 = arith.constant 4.000000e+00 : f32
    %302 = vector.broadcast %cst_159 : f32 to vector<32x256xf32>
    %303 = arith.maximumf %302, %301 : vector<32x256xf32>
    %304 = vector.broadcast %cst_160 : f32 to vector<32x256xf32>
    %305 = arith.minimumf %304, %303 : vector<32x256xf32>
    %306 = math.roundeven %305 : vector<32x256xf32>
    %307 = arith.addf %297, %306 : vector<32x256xf32>
    %308 = arith.truncf %307 : vector<32x256xf32> to vector<32x256xbf16>
    %cst_161 = arith.constant dense<0.000000e+00> : vector<32x256xf32>
    %309 = tpu.matmul %15, %308, %cst_161 {dimension_numbers = #tpu.dot_dimension_numbers<[1], [0], [0], [1], [0, 0, 1, 1], [], []>} : vector<32x32xbf16>, vector<32x256xbf16>, vector<32x256xf32> -> vector<32x256xf32>
    %cst_162 = arith.constant 2.500000e-01 : f32
    %310 = vector.broadcast %cst_162 : f32 to vector<32x256xf32>
    %311 = arith.mulf %309, %310 : vector<32x256xf32>
    %312 = vector.broadcast %16 : vector<32x1xf32> to vector<32x256xf32>
    %313 = arith.addf %311, %312 : vector<32x256xf32>
    %314 = arith.addf %313, %18 : vector<32x256xf32>
    %cst_163 = arith.constant 0.000000e+00 : f32
    %315 = vector.broadcast %cst_163 : f32 to vector<32x256xf32>
    %316 = arith.maximumf %314, %315 : vector<32x256xf32>
    %c0_164 = arith.constant 0 : index
    %c0_165 = arith.constant 0 : index
    %c0_166 = arith.constant 0 : index
    %317 = vector.load %arg14[%c0_164, %c0_165, %c0_166] : memref<1x32x256xf32, #tpu.memory_space<vmem>>, vector<1x32x256xf32>
    %318 = vector.shape_cast %317 : vector<1x32x256xf32> to vector<32x256xf32>
    %319 = vector.shape_cast %316 : vector<32x256xf32> to vector<1x32x256xf32>
    tpu.vector_store %arg14[%c0_164, %c0_165, %c0_166], %319 {strides = array<i32>} : memref<1x32x256xf32, #tpu.memory_space<vmem>>, vector<1x32x256xf32>,
    return
  }
  func.func @transform_0(%arg0: i32) -> (i32, i32, i32) {
    %c0_i32 = arith.constant 0 : i32
    %c0_i32_0 = arith.constant 0 : i32
    %c0_i32_1 = arith.constant 0 : i32
    return %arg0, %c0_i32, %c0_i32_0 : i32, i32, i32
  }
  func.func @transform_1(%arg0: i32) -> (i32, i32, i32) {
    %c0_i32 = arith.constant 0 : i32
    %c0_i32_0 = arith.constant 0 : i32
    %c0_i32_1 = arith.constant 0 : i32
    return %arg0, %c0_i32, %c0_i32_0 : i32, i32, i32
  }
  func.func @transform_2(%arg0: i32) -> (i32, i32) {
    %c0_i32 = arith.constant 0 : i32
    %c0_i32_0 = arith.constant 0 : i32
    %c0_i32_1 = arith.constant 0 : i32
    return %c0_i32, %c0_i32_0 : i32, i32
  }
  func.func @transform_3(%arg0: i32) -> (i32, i32, i32) {
    %c0_i32 = arith.constant 0 : i32
    %c0_i32_0 = arith.constant 0 : i32
    %c0_i32_1 = arith.constant 0 : i32
    %c0_i32_2 = arith.constant 0 : i32
    return %c0_i32, %c0_i32_0, %c0_i32_1 : i32, i32, i32
  }
  func.func @transform_4(%arg0: i32) -> (i32, i32) {
    %c0_i32 = arith.constant 0 : i32
    %c0_i32_0 = arith.constant 0 : i32
    %c0_i32_1 = arith.constant 0 : i32
    return %c0_i32, %c0_i32_0 : i32, i32
  }
  func.func @transform_5(%arg0: i32) -> (i32, i32, i32) {
    %c0_i32 = arith.constant 0 : i32
    %c0_i32_0 = arith.constant 0 : i32
    %c0_i32_1 = arith.constant 0 : i32
    %c0_i32_2 = arith.constant 0 : i32
    return %c0_i32, %c0_i32_0, %c0_i32_1 : i32, i32, i32
  }
  func.func @transform_6(%arg0: i32) -> (i32, i32) {
    %c0_i32 = arith.constant 0 : i32
    %c0_i32_0 = arith.constant 0 : i32
    %c0_i32_1 = arith.constant 0 : i32
    return %c0_i32, %c0_i32_0 : i32, i32
  }
  func.func @transform_7(%arg0: i32) -> (i32, i32, i32) {
    %c0_i32 = arith.constant 0 : i32
    %c0_i32_0 = arith.constant 0 : i32
    %c0_i32_1 = arith.constant 0 : i32
    %c0_i32_2 = arith.constant 0 : i32
    return %c0_i32, %c0_i32_0, %c0_i32_1 : i32, i32, i32
  }
  func.func @transform_8(%arg0: i32) -> (i32, i32) {
    %c0_i32 = arith.constant 0 : i32
    %c0_i32_0 = arith.constant 0 : i32
    %c0_i32_1 = arith.constant 0 : i32
    return %c0_i32, %c0_i32_0 : i32, i32
  }
  func.func @transform_9(%arg0: i32) -> (i32, i32) {
    %c0_i32 = arith.constant 0 : i32
    %c0_i32_0 = arith.constant 0 : i32
    %c0_i32_1 = arith.constant 0 : i32
    return %c0_i32, %c0_i32_0 : i32, i32
  }
  func.func @transform_10(%arg0: i32) -> (i32, i32) {
    %c0_i32 = arith.constant 0 : i32
    %c0_i32_0 = arith.constant 0 : i32
    %c0_i32_1 = arith.constant 0 : i32
    return %c0_i32, %c0_i32_0 : i32, i32
  }
  func.func @transform_11(%arg0: i32) -> (i32, i32) {
    %c0_i32 = arith.constant 0 : i32
    %c0_i32_0 = arith.constant 0 : i32
    %c0_i32_1 = arith.constant 0 : i32
    return %c0_i32, %c0_i32_0 : i32, i32
  }
  func.func @transform_12(%arg0: i32) -> (i32, i32) {
    %c0_i32 = arith.constant 0 : i32
    %c0_i32_0 = arith.constant 0 : i32
    %c0_i32_1 = arith.constant 0 : i32
    return %c0_i32, %c0_i32_0 : i32, i32
  }
  func.func @transform_13(%arg0: i32) -> (i32, i32, i32) {
    %c0_i32 = arith.constant 0 : i32
    %c0_i32_0 = arith.constant 0 : i32
    %c0_i32_1 = arith.constant 0 : i32
    return %arg0, %c0_i32, %c0_i32_0 : i32, i32, i32
  }
  func.func @transform_14(%arg0: i32) -> (i32, i32, i32) {
    %c0_i32 = arith.constant 0 : i32
    %c0_i32_0 = arith.constant 0 : i32
    %c0_i32_1 = arith.constant 0 : i32
    return %arg0, %c0_i32, %c0_i32_0 : i32, i32, i32
  }
}

</mosaic_0001>

<llo_original>
// kernel: tpu_custom_call.1
$region0: #{tpu_custom_call.1}
  #allocation0 [shape = 'u32[]', space=smem, size = 0x4, offset = 0x4, fixed_abs, tag = 'smem constant byte address 0x4 - core index']
  #allocation1 [shape = 'u32[144,128]{1,0:T(1,128)}', space=vmem, size = 0x12000, scoped, tag = 'internal scratch']
  %s0 = inlined_call_operand.hbm [shape: f32[2,32,256], index: 0, kind: input, shape index: {}]
  %s1 = inlined_call_operand.hbm [shape: f32[2,32,256], index: 1, kind: input, shape index: {}]
  %s2 = inlined_call_operand.hbm [shape: s32[4,256], index: 2, kind: input, shape index: {}]
  %s3 = inlined_call_operand.vmem [shape: bf16[9,32,32], index: 3, kind: input, shape index: {}]
  %s4 = inlined_call_operand.vmem [shape: f32[32,1], index: 4, kind: input, shape index: {}]
  %s5 = inlined_call_operand.hbm [shape: bf16[9,32,32], index: 5, kind: input, shape index: {}]
  %s6 = inlined_call_operand.vmem [shape: f32[32,1], index: 6, kind: input, shape index: {}]
  %s7 = inlined_call_operand.hbm [shape: bf16[9,32,32], index: 7, kind: input, shape index: {}]
  %s8 = inlined_call_operand.vmem [shape: f32[32,1], index: 8, kind: input, shape index: {}]
  %s9 = inlined_call_operand.vmem [shape: bf16[32,32], index: 9, kind: input, shape index: {}]
  %s10 = inlined_call_operand.vmem [shape: f32[32,1], index: 10, kind: input, shape index: {}]
  %s11 = inlined_call_operand.vmem [shape: bf16[32,32], index: 11, kind: input, shape index: {}]
  %s12 = inlined_call_operand.vmem [shape: f32[32,1], index: 12, kind: input, shape index: {}]
  %s13 = inlined_call_operand.hbm [shape: f32[2,32,256], index: 13, kind: output, shape index: {0}]
  %s14 = inlined_call_operand.hbm [shape: f32[2,32,256], index: 14, kind: output, shape index: {1}]
  %15 = xla_tuple %s13, %s14
  %s16 = sld [smem:[#allocation0]]
  $region113: #{tpu_custom_call.1} parent=0
    _
  %s18 = ssub.s32 1, %s16
  %s19 = scalar_select 0, %s18, %s16
  $region1: #{tpu_custom_call.1} parent=0
    #allocation2 [shape = 'u8[65536]{0}', space=vmem, size = 0x10000, scoped, tag = 'input window, operand 0']
    #allocation3 [shape = 's32[2]{0}', space=sflag, size = 0x8, scoped, tag = 'scoped memory for tpu_custom_call.1']
    #allocation4 [shape = 's32[2]{0}', space=sflag, size = 0x8, scoped, tag = 'scoped memory for tpu_custom_call.1']
    #allocation5 [shape = 'u8[65536]{0}', space=vmem, size = 0x10000, scoped, tag = 'input window, operand 1']
    #allocation6 [shape = 's32[2]{0}', space=sflag, size = 0x8, scoped, tag = 'scoped memory for tpu_custom_call.1']
    #allocation7 [shape = 'u8[4096]{0}', space=vmem, size = 0x1000, scoped, tag = 'input window, operand 2, single buffered']
    #allocation8 [shape = 'u8[73728]{0}', space=vmem, size = 0x12000, scoped, tag = 'input window, operand 5, single buffered']
    #allocation9 [shape = 's32[1]{0}', space=sflag, size = 0x4, scoped, tag = 'scoped memory for tpu_custom_call.1']
    #allocation10 [shape = 'u8[73728]{0}', space=vmem, size = 0x12000, scoped, tag = 'input window, operand 7, single buffered']
    #allocation11 [shape = 'u8[65536]{0}', space=vmem, size = 0x10000, scoped, tag = 'output window, operand 0']
    #allocation12 [shape = 'u8[65536]{0}', space=vmem, size = 0x10000, scoped, tag = 'output window, operand 1']
    #allocation13 [shape = 's32[2]{0}', space=sflag, size = 0x8, scoped, tag = 'scoped memory for tpu_custom_call.1']
    %20 = vsyncpa [#allocation3], 0
    %s21 = scalar_lea.sflag [#allocation3], 1
    %22 = vsyncpa %s21, 0
    %23 = vsyncpa [#allocation6], 0
    %s24 = scalar_lea.sflag [#allocation6], 1
    %25 = vsyncpa %s24, 0
    %26 = vsyncpa [#allocation9], 0
    %27 = vsyncpa [#allocation4], 0
    %s28 = scalar_lea.sflag [#allocation4], 1
    %29 = vsyncpa %s28, 0
    %30 = vsyncpa [#allocation13], 0
    %s31 = scalar_lea.sflag [#allocation13], 1
    %32 = vsyncpa %s31, 0
    loop: start=0, step=1, limit=4
    $region2: #{tpu_custom_call.1} parent=1 // loop_pre_header
      _
    $region3: #{tpu_custom_call.1} parent=1 // loop_header
      %s34 = sphi 0, %s38
      %p35 = scmp.ge.s32.totalorder %s34, 4
      %s44 = sphi 0, %s46
      %s47 = sphi 0, %s44
      %s48 = sphi 0, %s47
      %s64 = sphi 0, %s48
      %s70 = sphi 0, %s72
      %s73 = sphi 0, %s70
      %s74 = sphi 0, %s73
      %s90 = sphi 0, %s74
      %s94 = sphi 0, %s94
      %s96 = sphi 0, %s94
      %s97 = sphi 0, %s96
      %s111 = sphi 0, %s97
      %s115 = sphi 0, %s115
      %s117 = sphi 0, %s115
      %s118 = sphi 0, %s117
      %s132 = sphi 0, %s118
      %s136 = sphi 0, %s136
      %s138 = sphi 0, %s136
      %s139 = sphi 0, %s138
      %s153 = sphi 0, %s139
      %s157 = sphi 0, %s157
      %s159 = sphi 0, %s157
      %s160 = sphi 0, %s159
      %s174 = sphi 0, %s160
      %s178 = sphi 0, %s178
      %s180 = sphi 0, %s178
      %s181 = sphi 0, %s180
      %s195 = sphi 0, %s181
      %s199 = sphi 0, %s199
      %s201 = sphi 0, %s199
      %s202 = sphi 0, %s201
      %s216 = sphi 0, %s202
      %s220 = sphi 0, %s220
      %s222 = sphi 0, %s220
      %s223 = sphi 0, %s222
      %s237 = sphi 0, %s223
      %s241 = sphi 0, %s241
      %s243 = sphi 0, %s241
      %s244 = sphi 0, %s243
      %s258 = sphi 0, %s244
      %s262 = sphi 0, %s262
      %s264 = sphi 0, %s262
      %s265 = sphi 0, %s264
      %s279 = sphi 0, %s265
      %s283 = sphi 0, %s283
      %s285 = sphi 0, %s283
      %s286 = sphi 0, %s285
      %s300 = sphi 0, %s286
      %s304 = sphi 0, %s304
      %s306 = sphi 0, %s304
      %s307 = sphi 0, %s306
      %s321 = sphi 0, %s307
      %s327 = sphi 0, %s329
      %s330 = sphi 0, %s327
      %s331 = sphi 0, %s330
      %s347 = sphi 0, %s331
      %s353 = sphi 0, %s355
      %s356 = sphi 0, %s353
      %s357 = sphi 0, %s356
      %s373 = sphi 0, %s357
    $region4: #{tpu_custom_call.1} parent=1 // loop_header_branch
      %37 = sbr.rel (%p35) target = $region8
    $region5: #{tpu_custom_call.1} parent=1 // loop_body
      %s39 = ssub.s32 %s34, 1
      %s40 = ssub.s32 %s34, 2
      %s41 = sadd.s32 %s34, 1
      %s42 = ssub.s32 %s34, %s41
      %p43 = scmp.eq.s32.totalorder %s42, 0
      %s45 = sadd.s32 %s44, 1
      %s46 = scalar_select %p43, %s44, %s45
      %p49 = pneg %p43
      %p50 = scmp.eq.s32.totalorder %s34, 1
      %p51 = por %p49, %p50
      %p52 = scmp.ne.s32.totalorder %s44, %s47
      %p53 = scmp.eq.s32.totalorder %s34, 0
      %p54 = por %p52, %p53
      %p55 = scmp.ne.s32.totalorder %s44, %s47
      %p56 = scmp.eq.s32.totalorder %s39, 1
      %p57 = por %p55, %p56
      %p58 = scmp.ne.s32.totalorder %s47, %s48
      %p59 = scmp.eq.s32.totalorder %s39, 0
      %p60 = por %p58, %p59
      %p61 = scmp.ne.s32.totalorder %s47, %s48
      %p62 = scmp.eq.s32.totalorder %s40, 1
      %p63 = por %p61, %p62
      %p65 = scmp.ne.s32.totalorder %s48, %s64
      %p66 = scmp.eq.s32.totalorder %s40, 0
      %p67 = por %p65, %p66
      %s68 = ssub.s32 %s34, %s41
      %p69 = scmp.eq.s32.totalorder %s68, 0
      %s71 = sadd.s32 %s70, 1
      %s72 = scalar_select %p69, %s70, %s71
      %p75 = pneg %p69
      %p76 = scmp.eq.s32.totalorder %s34, 1
      %p77 = por %p75, %p76
      %p78 = scmp.ne.s32.totalorder %s70, %s73
      %p79 = scmp.eq.s32.totalorder %s34, 0
      %p80 = por %p78, %p79
      %p81 = scmp.ne.s32.totalorder %s70, %s73
      %p82 = scmp.eq.s32.totalorder %s39, 1
      %p83 = por %p81, %p82
      %p84 = scmp.ne.s32.totalorder %s73, %s74
      %p85 = scmp.eq.s32.totalorder %s39, 0
      %p86 = por %p84, %p85
      %p87 = scmp.ne.s32.totalorder %s73, %s74
      %p88 = scmp.eq.s32.totalorder %s40, 1
      %p89 = por %p87, %p88
      %p91 = scmp.ne.s32.totalorder %s74, %s90
      %p92 = scmp.eq.s32.totalorder %s40, 0
      %p93 = por %p91, %p92
      %s95 = sadd.s32 %s94, 1
      %p98 = scmp.eq.s32.totalorder %s34, 1
      %p99 = scmp.ne.s32.totalorder %s94, %s96
      %p100 = scmp.eq.s32.totalorder %s34, 0
      %p101 = por %p99, %p100
      %p102 = scmp.ne.s32.totalorder %s94, %s96
      %p103 = scmp.eq.s32.totalorder %s39, 1
      %p104 = por %p102, %p103
      %p105 = scmp.ne.s32.totalorder %s96, %s97
      %p106 = scmp.eq.s32.totalorder %s39, 0
      %p107 = por %p105, %p106
      %p108 = scmp.ne.s32.totalorder %s96, %s97
      %p109 = scmp.eq.s32.totalorder %s40, 1
      %p110 = por %p108, %p109
      %p112 = scmp.ne.s32.totalorder %s97, %s111
      %p113 = scmp.eq.s32.totalorder %s40, 0
      %p114 = por %p112, %p113
      %s116 = sadd.s32 %s115, 1
      %p119 = scmp.eq.s32.totalorder %s34, 1
      %p120 = scmp.ne.s32.totalorder %s115, %s117
      %p121 = scmp.eq.s32.totalorder %s34, 0
      %p122 = por %p120, %p121
      %p123 = scmp.ne.s32.totalorder %s115, %s117
      %p124 = scmp.eq.s32.totalorder %s39, 1
      %p125 = por %p123, %p124
      %p126 = scmp.ne.s32.totalorder %s117, %s118
      %p127 = scmp.eq.s32.totalorder %s39, 0
      %p128 = por %p126, %p127
      %p129 = scmp.ne.s32.totalorder %s117, %s118
      %p130 = scmp.eq.s32.totalorder %s40, 1
      %p131 = por %p129, %p130
      %p133 = scmp.ne.s32.totalorder %s118, %s132
      %p134 = scmp.eq.s32.totalorder %s40, 0
      %p135 = por %p133, %p134
      %s137 = sadd.s32 %s136, 1
      %p140 = scmp.eq.s32.totalorder %s34, 1
      %p141 = scmp.ne.s32.totalorder %s136, %s138
      %p142 = scmp.eq.s32.totalorder %s34, 0
      %p143 = por %p141, %p142
      %p144 = scmp.ne.s32.totalorder %s136, %s138
      %p145 = scmp.eq.s32.totalorder %s39, 1
      %p146 = por %p144, %p145
      %p147 = scmp.ne.s32.totalorder %s138, %s139
      %p148 = scmp.eq.s32.totalorder %s39, 0
      %p149 = por %p147, %p148
      %p150 = scmp.ne.s32.totalorder %s138, %s139
      %p151 = scmp.eq.s32.totalorder %s40, 1
      %p152 = por %p150, %p151
      %p154 = scmp.ne.s32.totalorder %s139, %s153
      %p155 = scmp.eq.s32.totalorder %s40, 0
      %p156 = por %p154, %p155
      %s158 = sadd.s32 %s157, 1
      %p161 = scmp.eq.s32.totalorder %s34, 1
      %p162 = scmp.ne.s32.totalorder %s157, %s159
      %p163 = scmp.eq.s32.totalorder %s34, 0
      %p164 = por %p162, %p163
      %p165 = scmp.ne.s32.totalorder %s157, %s159
      %p166 = scmp.eq.s32.totalorder %s39, 1
      %p167 = por %p165, %p166
      %p168 = scmp.ne.s32.totalorder %s159, %s160
      %p169 = scmp.eq.s32.totalorder %s39, 0
      %p170 = por %p168, %p169
      %p171 = scmp.ne.s32.totalorder %s159, %s160
      %p172 = scmp.eq.s32.totalorder %s40, 1
      %p173 = por %p171, %p172
      %p175 = scmp.ne.s32.totalorder %s160, %s174
      %p176 = scmp.eq.s32.totalorder %s40, 0
      %p177 = por %p175, %p176
      %s179 = sadd.s32 %s178, 1
      %p182 = scmp.eq.s32.totalorder %s34, 1
      %p183 = scmp.ne.s32.totalorder %s178, %s180
      %p184 = scmp.eq.s32.totalorder %s34, 0
      %p185 = por %p183, %p184
      %p186 = scmp.ne.s32.totalorder %s178, %s180
      %p187 = scmp.eq.s32.totalorder %s39, 1
      %p188 = por %p186, %p187
      %p189 = scmp.ne.s32.totalorder %s180, %s181
      %p190 = scmp.eq.s32.totalorder %s39, 0
      %p191 = por %p189, %p190
      %p192 = scmp.ne.s32.totalorder %s180, %s181
      %p193 = scmp.eq.s32.totalorder %s40, 1
      %p194 = por %p192, %p193
      %p196 = scmp.ne.s32.totalorder %s181, %s195
      %p197 = scmp.eq.s32.totalorder %s40, 0
      %p198 = por %p196, %p197
      %s200 = sadd.s32 %s199, 1
      %p203 = scmp.eq.s32.totalorder %s34, 1
      %p204 = scmp.ne.s32.totalorder %s199, %s201
      %p205 = scmp.eq.s32.totalorder %s34, 0
      %p206 = por %p204, %p205
      %p207 = scmp.ne.s32.totalorder %s199, %s201
      %p208 = scmp.eq.s32.totalorder %s39, 1
      %p209 = por %p207, %p208
      %p210 = scmp.ne.s32.totalorder %s201, %s202
      %p211 = scmp.eq.s32.totalorder %s39, 0
      %p212 = por %p210, %p211
      %p213 = scmp.ne.s32.totalorder %s201, %s202
      %p214 = scmp.eq.s32.totalorder %s40, 1
      %p215 = por %p213, %p214
      %p217 = scmp.ne.s32.totalorder %s202, %s216
      %p218 = scmp.eq.s32.totalorder %s40, 0
      %p219 = por %p217, %p218
      %s221 = sadd.s32 %s220, 1
      %p224 = scmp.eq.s32.totalorder %s34, 1
      %p225 = scmp.ne.s32.totalorder %s220, %s222
      %p226 = scmp.eq.s32.totalorder %s34, 0
      %p227 = por %p225, %p226
      %p228 = scmp.ne.s32.totalorder %s220, %s222
      %p229 = scmp.eq.s32.totalorder %s39, 1
      %p230 = por %p228, %p229
      %p231 = scmp.ne.s32.totalorder %s222, %s223
      %p232 = scmp.eq.s32.totalorder %s39, 0
      %p233 = por %p231, %p232
      %p234 = scmp.ne.s32.totalorder %s222, %s223
      %p235 = scmp.eq.s32.totalorder %s40, 1
      %p236 = por %p234, %p235
      %p238 = scmp.ne.s32.totalorder %s223, %s237
      %p239 = scmp.eq.s32.totalorder %s40, 0
      %p240 = por %p238, %p239
      %s242 = sadd.s32 %s241, 1
      %p245 = scmp.eq.s32.totalorder %s34, 1
      %p246 = scmp.ne.s32.totalorder %s241, %s243
      %p247 = scmp.eq.s32.totalorder %s34, 0
      %p248 = por %p246, %p247
      %p249 = scmp.ne.s32.totalorder %s241, %s243
      %p250 = scmp.eq.s32.totalorder %s39, 1
      %p251 = por %p249, %p250
      %p252 = scmp.ne.s32.totalorder %s243, %s244
      %p253 = scmp.eq.s32.totalorder %s39, 0
      %p254 = por %p252, %p253
      %p255 = scmp.ne.s32.totalorder %s243, %s244
      %p256 = scmp.eq.s32.totalorder %s40, 1
      %p257 = por %p255, %p256
      %p259 = scmp.ne.s32.totalorder %s244, %s258
      %p260 = scmp.eq.s32.totalorder %s40, 0
      %p261 = por %p259, %p260
      %s263 = sadd.s32 %s262, 1
      %p266 = scmp.eq.s32.totalorder %s34, 1
      %p267 = scmp.ne.s32.totalorder %s262, %s264
      %p268 = scmp.eq.s32.totalorder %s34, 0
      %p269 = por %p267, %p268
      %p270 = scmp.ne.s32.totalorder %s262, %s264
      %p271 = scmp.eq.s32.totalorder %s39, 1
      %p272 = por %p270, %p271
      %p273 = scmp.ne.s32.totalorder %s264, %s265
      %p274 = scmp.eq.s32.totalorder %s39, 0
      %p275 = por %p273, %p274
      %p276 = scmp.ne.s32.totalorder %s264, %s265
      %p277 = scmp.eq.s32.totalorder %s40, 1
      %p278 = por %p276, %p277
      %p280 = scmp.ne.s32.totalorder %s265, %s279
      %p281 = scmp.eq.s32.totalorder %s40, 0
      %p282 = por %p280, %p281
      %s284 = sadd.s32 %s283, 1
      %p287 = scmp.eq.s32.totalorder %s34, 1
      %p288 = scmp.ne.s32.totalorder %s283, %s285
      %p289 = scmp.eq.s32.totalorder %s34, 0
      %p290 = por %p288, %p289
      %p291 = scmp.ne.s32.totalorder %s283, %s285
      %p292 = scmp.eq.s32.totalorder %s39, 1
      %p293 = por %p291, %p292
      %p294 = scmp.ne.s32.totalorder %s285, %s286
      %p295 = scmp.eq.s32.totalorder %s39, 0
      %p296 = por %p294, %p295
      %p297 = scmp.ne.s32.totalorder %s285, %s286
      %p298 = scmp.eq.s32.totalorder %s40, 1
      %p299 = por %p297, %p298
      %p301 = scmp.ne.s32.totalorder %s286, %s300
      %p302 = scmp.eq.s32.totalorder %s40, 0
      %p303 = por %p301, %p302
      %s305 = sadd.s32 %s304, 1
      %p308 = scmp.eq.s32.totalorder %s34, 1
      %p309 = scmp.ne.s32.totalorder %s304, %s306
      %p310 = scmp.eq.s32.totalorder %s34, 0
      %p311 = por %p309, %p310
      %p312 = scmp.ne.s32.totalorder %s304, %s306
      %p313 = scmp.eq.s32.totalorder %s39, 1
      %p314 = por %p312, %p313
      %p315 = scmp.ne.s32.totalorder %s306, %s307
      %p316 = scmp.eq.s32.totalorder %s39, 0
      %p317 = por %p315, %p316
      %p318 = scmp.ne.s32.totalorder %s306, %s307
      %p319 = scmp.eq.s32.totalorder %s40, 1
      %p320 = por %p318, %p319
      %p322 = scmp.ne.s32.totalorder %s307, %s321
      %p323 = scmp.eq.s32.totalorder %s40, 0
      %p324 = por %p322, %p323
      %s325 = ssub.s32 %s34, %s41
      %p326 = scmp.eq.s32.totalorder %s325, 0
      %s328 = sadd.s32 %s327, 1
      %s329 = scalar_select %p326, %s327, %s328
      %p332 = pneg %p326
      %p333 = scmp.eq.s32.totalorder %s34, 1
      %p334 = por %p332, %p333
      %p335 = scmp.ne.s32.totalorder %s327, %s330
      %p336 = scmp.eq.s32.totalorder %s34, 0
      %p337 = por %p335, %p336
      %p338 = scmp.ne.s32.totalorder %s327, %s330
      %p339 = scmp.eq.s32.totalorder %s39, 1
      %p340 = por %p338, %p339
      %p341 = scmp.ne.s32.totalorder %s330, %s331
      %p342 = scmp.eq.s32.totalorder %s39, 0
      %p343 = por %p341, %p342
      %p344 = scmp.ne.s32.totalorder %s330, %s331
      %p345 = scmp.eq.s32.totalorder %s40, 1
      %p346 = por %p344, %p345
      %p348 = scmp.ne.s32.totalorder %s331, %s347
      %p349 = scmp.eq.s32.totalorder %s40, 0
      %p350 = por %p348, %p349
      %s351 = ssub.s32 %s34, %s41
      %p352 = scmp.eq.s32.totalorder %s351, 0
      %s354 = sadd.s32 %s353, 1
      %s355 = scalar_select %p352, %s353, %s354
      %p358 = pneg %p352
      %p359 = scmp.eq.s32.totalorder %s34, 1
      %p360 = por %p358, %p359
      %p361 = scmp.ne.s32.totalorder %s353, %s356
      %p362 = scmp.eq.s32.totalorder %s34, 0
      %p363 = por %p361, %p362
      %p364 = scmp.ne.s32.totalorder %s353, %s356
      %p365 = scmp.eq.s32.totalorder %s39, 1
      %p366 = por %p364, %p365
      %p367 = scmp.ne.s32.totalorder %s356, %s357
      %p368 = scmp.eq.s32.totalorder %s39, 0
      %p369 = por %p367, %p368
      %p370 = scmp.ne.s32.totalorder %s356, %s357
      %p371 = scmp.eq.s32.totalorder %s40, 1
      %p372 = por %p370, %p371
      %p374 = scmp.ne.s32.totalorder %s357, %s373
      %p375 = scmp.eq.s32.totalorder %s40, 0
      %p376 = por %p374, %p375
      %p377 = scmp.le.s32.totalorder 1, %s34
      %p378 = scmp.lt.s32.totalorder %s34, 3
      %p379 = pnand %p377, %p378
      %p380 = pneg %p379
      // Predicated region
      $region9: #{tpu_custom_call.1} parent=5 // pred_check
        _
      $region10: #{tpu_custom_call.1} parent=5 // pred_check_branch
        %382 = sbr.rel (%p379) target = $region12
      $region11: #{tpu_custom_call.1} parent=5 // pred_region
        %s383 = ssub.s32 %s34, 1
        // Predicated region
        $region13: #{tpu_custom_call.1} parent=11 // pred_check
          %p384 = pneg %p107
        $region14: #{tpu_custom_call.1} parent=11 // pred_check_branch
          %386 = sbr.rel (%p384) target = $region16
        $region15: #{tpu_custom_call.1} parent=11 // pred_region
          %s388 = ssub.s32 128, 128
          %389 = vsyncadd [#allocation6], %s388
          %s391 = sshll.u32 [#allocation7], 4
          %s392 = int_to_ptr.vmem [resolvable:$true] %s391
          %394 = dma.hbm_to_vmem [thread:$0]  %s2, 128, %s392, [#allocation6]
        $region16: #{tpu_custom_call.1} parent=11 // pred_fallthru
          _
        // Predicated region
        $region17: #{tpu_custom_call.1} parent=11 // pred_check
          %p395 = pneg %p128
        $region18: #{tpu_custom_call.1} parent=11 // pred_check_branch
          %397 = sbr.rel (%p395) target = $region20
        $region19: #{tpu_custom_call.1} parent=11 // pred_region
          _
        $region20: #{tpu_custom_call.1} parent=11 // pred_fallthru
          _
        // Predicated region
        $region21: #{tpu_custom_call.1} parent=11 // pred_check
          %p398 = pneg %p149
        $region22: #{tpu_custom_call.1} parent=11 // pred_check_branch
          %400 = sbr.rel (%p398) target = $region24
        $region23: #{tpu_custom_call.1} parent=11 // pred_region
          _
        $region24: #{tpu_custom_call.1} parent=11 // pred_fallthru
          _
        // Predicated region
        $region25: #{tpu_custom_call.1} parent=11 // pred_check
          %p401 = pneg %p170
        $region26: #{tpu_custom_call.1} parent=11 // pred_check_branch
          %403 = sbr.rel (%p401) target = $region28
        $region27: #{tpu_custom_call.1} parent=11 // pred_region
          %s405 = ssub.s32 2304, 2304
          %406 = vsyncadd [#allocation9], %s405
          %s407 = sshll.u32 [#allocation8], 4
          %s408 = int_to_ptr.vmem [resolvable:$true] %s407
          %413 = dma.hbm_to_vmem [thread:$0]  %s5, 2304, %s408, [#allocation9], 64, 64, 4
        $region28: #{tpu_custom_call.1} parent=11 // pred_fallthru
          _
        // Predicated region
        $region29: #{tpu_custom_call.1} parent=11 // pred_check
          %p414 = pneg %p191
        $region30: #{tpu_custom_call.1} parent=11 // pred_check_branch
          %416 = sbr.rel (%p414) target = $region32
        $region31: #{tpu_custom_call.1} parent=11 // pred_region
          _
        $region32: #{tpu_custom_call.1} parent=11 // pred_fallthru
          _
        // Predicated region
        $region33: #{tpu_custom_call.1} parent=11 // pred_check
          %p417 = pneg %p212
        $region34: #{tpu_custom_call.1} parent=11 // pred_check_branch
          %419 = sbr.rel (%p417) target = $region36
        $region35: #{tpu_custom_call.1} parent=11 // pred_region
          %s421 = ssub.s32 2304, 2304
          %422 = vsyncadd [#allocation9], %s421
          %s423 = sshll.u32 [#allocation10], 4
          %s424 = int_to_ptr.vmem [resolvable:$true] %s423
          %429 = dma.hbm_to_vmem [thread:$0]  %s7, 2304, %s424, [#allocation9], 64, 64, 4
        $region36: #{tpu_custom_call.1} parent=11 // pred_fallthru
          _
        // Predicated region
        $region37: #{tpu_custom_call.1} parent=11 // pred_check
          %p430 = pneg %p233
        $region38: #{tpu_custom_call.1} parent=11 // pred_check_branch
          %432 = sbr.rel (%p430) target = $region40
        $region39: #{tpu_custom_call.1} parent=11 // pred_region
          _
        $region40: #{tpu_custom_call.1} parent=11 // pred_fallthru
          _
        // Predicated region
        $region41: #{tpu_custom_call.1} parent=11 // pred_check
          %p433 = pneg %p254
        $region42: #{tpu_custom_call.1} parent=11 // pred_check_branch
          %435 = sbr.rel (%p433) target = $region44
        $region43: #{tpu_custom_call.1} parent=11 // pred_region
          _
        $region44: #{tpu_custom_call.1} parent=11 // pred_fallthru
          _
        // Predicated region
        $region45: #{tpu_custom_call.1} parent=11 // pred_check
          %p436 = pneg %p275
        $region46: #{tpu_custom_call.1} parent=11 // pred_check_branch
          %438 = sbr.rel (%p436) target = $region48
        $region47: #{tpu_custom_call.1} parent=11 // pred_region
          _
        $region48: #{tpu_custom_call.1} parent=11 // pred_fallthru
          _
        // Predicated region
        $region49: #{tpu_custom_call.1} parent=11 // pred_check
          %p439 = pneg %p296
        $region50: #{tpu_custom_call.1} parent=11 // pred_check_branch
          %441 = sbr.rel (%p439) target = $region52
        $region51: #{tpu_custom_call.1} parent=11 // pred_region
          _
        $region52: #{tpu_custom_call.1} parent=11 // pred_fallthru
          _
        // Predicated region
        $region53: #{tpu_custom_call.1} parent=11 // pred_check
          %p442 = pneg %p317
        $region54: #{tpu_custom_call.1} parent=11 // pred_check_branch
          %444 = sbr.rel (%p442) target = $region56
        $region55: #{tpu_custom_call.1} parent=11 // pred_region
          _
        $region56: #{tpu_custom_call.1} parent=11 // pred_fallthru
          _
      $region12: #{tpu_custom_call.1} parent=5 // pred_fallthru
        _
      %p445 = scmp.lt.s32.totalorder %s34, 2
      // Predicated region
      $region57: #{tpu_custom_call.1} parent=5 // pred_check
        %p446 = pneg %p445
      $region58: #{tpu_custom_call.1} parent=5 // pred_check_branch
        %448 = sbr.rel (%p446) target = $region60
      $region59: #{tpu_custom_call.1} parent=5 // pred_region
        // Predicated region
        $region61: #{tpu_custom_call.1} parent=59 // pred_check
          %p449 = pneg %p54
        $region62: #{tpu_custom_call.1} parent=59 // pred_check_branch
          %451 = sbr.rel (%p449) target = $region64
        $region63: #{tpu_custom_call.1} parent=59 // pred_region
          %s452 = sand.u32 %s44, 1
          %s453 = scalar_lea.sflag [#allocation3], %s452
          %s454 = sand.u32 %s44, 1
          %s455 = smul.addr %s454, 64
          %s456 = scalar_lea.vmem [#allocation2], %s455
          %s458 = ssub.s32 1024, 1024
          %459 = vsyncadd %s453, %s458
          %s460 = smul.addr %s34, 8
          %s461 = smul.addr %s460, 128
          %s462 = scalar_lea.hbm %s0, %s461
          %s463 = sshll.u32 %s456, 4
          %s464 = int_to_ptr.vmem [resolvable:$true] %s463
          %469 = dma.hbm_to_vmem [thread:$0]  %s462, 1024, %s464, %s453, 256, 256, 16
        $region64: #{tpu_custom_call.1} parent=59 // pred_fallthru
          _
        // Predicated region
        $region65: #{tpu_custom_call.1} parent=59 // pred_check
          %p470 = pneg %p80
        $region66: #{tpu_custom_call.1} parent=59 // pred_check_branch
          %472 = sbr.rel (%p470) target = $region68
        $region67: #{tpu_custom_call.1} parent=59 // pred_region
          %s473 = sand.u32 %s34, 1
          %s474 = scalar_lea.sflag [#allocation6], %s473
          %s475 = sand.u32 %s70, 1
          %s476 = smul.addr %s475, 64
          %s477 = scalar_lea.vmem [#allocation5], %s476
          %s479 = ssub.s32 1024, 1024
          %480 = vsyncadd %s474, %s479
          %s481 = smul.addr %s34, 8
          %s482 = smul.addr %s481, 128
          %s483 = scalar_lea.hbm %s1, %s482
          %s484 = sshll.u32 %s477, 4
          %s485 = int_to_ptr.vmem [resolvable:$true] %s484
          %490 = dma.hbm_to_vmem [thread:$0]  %s483, 1024, %s485, %s474, 256, 256, 16
        $region68: #{tpu_custom_call.1} parent=59 // pred_fallthru
          _
      $region60: #{tpu_custom_call.1} parent=5 // pred_fallthru
        _
      %p491 = scmp.le.s32.totalorder 1, %s34
      %p492 = scmp.lt.s32.totalorder %s34, 3
      %p493 = pnand %p491, %p492
      %p494 = pneg %p493
      // Predicated region
      $region69: #{tpu_custom_call.1} parent=5 // pred_check
        _
      $region70: #{tpu_custom_call.1} parent=5 // pred_check_branch
        %496 = sbr.rel (%p493) target = $region72
      $region71: #{tpu_custom_call.1} parent=5 // pred_region
        %s497 = ssub.s32 %s34, 1
        %s498 = sand.u32 %s47, 1
        %s499 = scalar_lea.sflag [#allocation3], %s498
        %s500 = sand.u32 %s47, 1
        %s501 = smul.addr %s500, 64
        %s502 = scalar_lea.vmem [#allocation2], %s501
        // Predicated region
        $region73: #{tpu_custom_call.1} parent=71 // pred_check
          %p503 = pneg %p60
        $region74: #{tpu_custom_call.1} parent=71 // pred_check_branch
          %505 = sbr.rel (%p503) target = $region76
        $region75: #{tpu_custom_call.1} parent=71 // pred_region
          %506 = dma.done %s499, 1024
        $region76: #{tpu_custom_call.1} parent=71 // pred_fallthru
          _
        %s507 = sand.u32 %s39, 1
        %s508 = scalar_lea.sflag [#allocation6], %s507
        %s509 = sand.u32 %s73, 1
        %s510 = smul.addr %s509, 64
        %s511 = scalar_lea.vmem [#allocation5], %s510
        // Predicated region
        $region77: #{tpu_custom_call.1} parent=71 // pred_check
          %p512 = pneg %p86
        $region78: #{tpu_custom_call.1} parent=71 // pred_check_branch
          %514 = sbr.rel (%p512) target = $region80
        $region79: #{tpu_custom_call.1} parent=71 // pred_region
          %515 = dma.done %s508, 1024
        $region80: #{tpu_custom_call.1} parent=71 // pred_fallthru
          _
        // Predicated region
        $region81: #{tpu_custom_call.1} parent=71 // pred_check
          %p516 = pneg %p107
        $region82: #{tpu_custom_call.1} parent=71 // pred_check_branch
          %518 = sbr.rel (%p516) target = $region84
        $region83: #{tpu_custom_call.1} parent=71 // pred_region
          %519 = dma.done [#allocation6], 128
        $region84: #{tpu_custom_call.1} parent=71 // pred_fallthru
          _
        // Predicated region
        $region85: #{tpu_custom_call.1} parent=71 // pred_check
          %p520 = pneg %p170
        $region86: #{tpu_custom_call.1} parent=71 // pred_check_branch
          %522 = sbr.rel (%p520) target = $region88
        $region87: #{tpu_custom_call.1} parent=71 // pred_region
          %523 = dma.done [#allocation9], 2304
        $region88: #{tpu_custom_call.1} parent=71 // pred_fallthru
          _
        // Predicated region
        $region89: #{tpu_custom_call.1} parent=71 // pred_check
          %p524 = pneg %p212
        $region90: #{tpu_custom_call.1} parent=71 // pred_check_branch
          %526 = sbr.rel (%p524) target = $region92
        $region91: #{tpu_custom_call.1} parent=71 // pred_region
          %527 = dma.done [#allocation9], 2304
        $region92: #{tpu_custom_call.1} parent=71 // pred_fallthru
          _
        %s528 = sand.u32 %s47, 1
        %s529 = scalar_lea.sflag [#allocation3], %s528
        %s530 = sand.u32 %s47, 1
        %s531 = smul.addr %s530, 64
        %s532 = scalar_lea.vmem [#allocation2], %s531
        %p533 = pneg %p60
        %p534 = pneg %p57
        %s535 = sand.u32 %s39, 1
        %s536 = scalar_lea.sflag [#allocation6], %s535
        %s537 = sand.u32 %s73, 1
        %s538 = smul.addr %s537, 64
        %s539 = scalar_lea.vmem [#allocation5], %s538
        %p540 = pneg %p86
        %p541 = pneg %p83
        %p542 = pneg %p107
        %p543 = pneg %p104
        %p544 = pneg %p128
        %p545 = pneg %p125
        %p546 = pneg %p149
        %p547 = pneg %p146
        %p548 = pneg %p170
        %p549 = pneg %p167
        %p550 = pneg %p191
        %p551 = pneg %p188
        %p552 = pneg %p212
        %p553 = pneg %p209
        %p554 = pneg %p233
        %p555 = pneg %p230
        %p556 = pneg %p254
        %p557 = pneg %p251
        %p558 = pneg %p275
        %p559 = pneg %p272
        %p560 = pneg %p296
        %p561 = pneg %p293
        %p562 = pneg %p317
        %p563 = pneg %p314
        %p564 = pneg %p343
        %p565 = pneg %p340
        %s566 = sand.u32 %s330, 1
        %s567 = scalar_lea.sflag [#allocation4], %s566
        %s568 = sand.u32 %s330, 1
        %s569 = smul.addr %s568, 64
        %s570 = scalar_lea.vmem [#allocation11], %s569
        %p571 = pneg %p369
        %p572 = pneg %p366
        %s573 = sand.u32 %s356, 1
        %s574 = scalar_lea.sflag [#allocation13], %s573
        %s575 = sand.u32 %s356, 1
        %s576 = smul.addr %s575, 64
        %s577 = scalar_lea.vmem [#allocation12], %s576
        %v579 = vld [vmem:[#allocation7] sm:$0xff]
        %vm580 = vcmp.ne.s32.totalorder %v579, 0
        %v581 = vld [vmem:[%s9] sm:$0xf]
        %v582 = vld [vmem:[%s9 + $0x4] sm:$0xf]
        %v583 = vld [vmem:[%s9 + $0x8] sm:$0xf]
        %v584 = vld [vmem:[%s9 + $0xc] sm:$0xf]
        %v585 = vld [vmem:[%s10] sm:$0xff]
        %v586 = vld [vmem:[%s10 + $0x8] sm:$0xff]
        %v587 = vld [vmem:[%s10 + $0x10] sm:$0xff]
        %v588 = vld [vmem:[%s10 + $0x18] sm:$0xff]
        %v589 = vld [vmem:[%s11] sm:$0xf]
        %v590 = vld [vmem:[%s11 + $0x4] sm:$0xf]
        %v591 = vld [vmem:[%s11 + $0x8] sm:$0xf]
        %v592 = vld [vmem:[%s11 + $0xc] sm:$0xf]
        %v593 = vld [vmem:[%s12] sm:$0xff]
        %v594 = vld [vmem:[%s12 + $0x8] sm:$0xff]
        %v595 = vld [vmem:[%s12 + $0x10] sm:$0xff]
        %v596 = vld [vmem:[%s12 + $0x18] sm:$0xff]
        %v597 = vld [vmem:[%s502] sm:$0xff]
        %v598 = vld [vmem:[%s502 + $0x8] sm:$0xff]
        %v599 = vld [vmem:[%s502 + $0x10] sm:$0xff]
        %v600 = vld [vmem:[%s502 + $0x18] sm:$0xff]
        %v601 = vld [vmem:[%s502 + $0x20] sm:$0xff]
        %v602 = vld [vmem:[%s502 + $0x28] sm:$0xff]
        %v603 = vld [vmem:[%s502 + $0x30] sm:$0xff]
        %v604 = vld [vmem:[%s502 + $0x38] sm:$0xff]
        %v605 = vld [vmem:[%s511] sm:$0xff]
        %v606 = vld [vmem:[%s511 + $0x8] sm:$0xff]
        %v607 = vld [vmem:[%s511 + $0x10] sm:$0xff]
        %v608 = vld [vmem:[%s511 + $0x18] sm:$0xff]
        %v609 = vld [vmem:[%s511 + $0x20] sm:$0xff]
        %v610 = vld [vmem:[%s511 + $0x28] sm:$0xff]
        %v611 = vld [vmem:[%s511 + $0x30] sm:$0xff]
        %v612 = vld [vmem:[%s511 + $0x38] sm:$0xff]
        %613 = vrot.lane.b32.xlu0 %v597, 127
        %v614 = vpop.permute.xlu0 %613
        %615 = vrot.lane.b32.xlu0 %v599, 127
        %v616 = vpop.permute.xlu0 %615
        %617 = vrot.lane.b32.xlu0 %v601, 127
        %v618 = vpop.permute.xlu0 %617
        %619 = vrot.lane.b32.xlu0 %v603, 127
        %v620 = vpop.permute.xlu0 %619
        %621 = vrot.lane.b32.xlu0 %v598, 127
        %v622 = vpop.permute.xlu0 %621
        %623 = vrot.lane.b32.xlu0 %v600, 127
        %v624 = vpop.permute.xlu0 %623
        %625 = vrot.lane.b32.xlu0 %v602, 127
        %v626 = vpop.permute.xlu0 %625
        %627 = vrot.lane.b32.xlu0 %v604, 127
        %v628 = vpop.permute.xlu0 %627
        %v629 = vlaneseq
        %v630 = vand.u32 %v629, 127
        %vm631 = vcmp.lt.s32.totalorder %v630, 127
        %v632 = vsel %vm631, %v614, %v622
        %v633 = vsel %vm631, %v616, %v624
        %v634 = vsel %vm631, %v618, %v626
        %v635 = vsel %vm631, %v620, %v628
        %v636 = vsel %vm631, %v622, %v614
        %v637 = vsel %vm631, %v624, %v616
        %v638 = vsel %vm631, %v626, %v618
        %v639 = vsel %vm631, %v628, %v620
        %640 = vrot.lane.b32.xlu0 %v597, 1
        %v641 = vpop.permute.xlu0 %640
        %642 = vrot.lane.b32.xlu0 %v599, 1
        %v643 = vpop.permute.xlu0 %642
        %644 = vrot.lane.b32.xlu0 %v601, 1
        %v645 = vpop.permute.xlu0 %644
        %646 = vrot.lane.b32.xlu0 %v603, 1
        %v647 = vpop.permute.xlu0 %646
        %648 = vrot.lane.b32.xlu0 %v598, 1
        %v649 = vpop.permute.xlu0 %648
        %650 = vrot.lane.b32.xlu0 %v600, 1
        %v651 = vpop.permute.xlu0 %650
        %652 = vrot.lane.b32.xlu0 %v602, 1
        %v653 = vpop.permute.xlu0 %652
        %654 = vrot.lane.b32.xlu0 %v604, 1
        %v655 = vpop.permute.xlu0 %654
        %vm656 = vcmp.lt.s32.totalorder %v630, 1
        %v657 = vsel %vm656, %v641, %v649
        %v658 = vsel %vm656, %v643, %v651
        %v659 = vsel %vm656, %v645, %v653
        %v660 = vsel %vm656, %v647, %v655
        %v661 = vsel %vm656, %v649, %v641
        %v662 = vsel %vm656, %v651, %v643
        %v663 = vsel %vm656, %v653, %v645
        %v664 = vsel %vm656, %v655, %v647
        %v665 = vsel %vm580, 1, 0
        %v666 = vlaneseq
        %v667 = vshrl.u32 %v666, 7
        %v668 = vsub.s32 0, %v667
        %v669 = vrot.slane %v665, %v668
        %v670 = vlaneseq
        %v671 = vshrl.u32 %v670, 7
        %v672 = vsub.s32 4, %v671
        %v673 = vrot.slane %v665, %v672
        %v674 = vlaneseq
        %v675 = vshrl.u32 %v674, 7
        %v676 = vsub.s32 0, %v675
        %v677 = vrot.slane %v669, %v676
        %v678 = vlaneseq
        %v679 = vshrl.u32 %v678, 7
        %v680 = vsub.s32 0, %v679
        %v681 = vrot.slane %v673, %v680
        %vm682 = vcmp.eq.s32.totalorder %v677, 1
        %vm683 = vcmp.eq.s32.totalorder %v681, 1
        %v684 = vsel %vm682, %v632, %v661
        %v685 = vsel %vm683, %v636, %v657
        %v686 = vsel %vm682, %v633, %v662
        %v687 = vsel %vm683, %v637, %v658
        %v688 = vsel %vm682, %v634, %v663
        %v689 = vsel %vm683, %v638, %v659
        %v690 = vsel %vm682, %v635, %v664
        %v691 = vsel %vm683, %v639, %v660
        %v692 = vlaneseq
        %v693 = vshrl.u32 %v692, 7
        %v694 = vsub.s32 1, %v693
        %v695 = vrot.slane %v665, %v694
        %v696 = vlaneseq
        %v697 = vshrl.u32 %v696, 7
        %v698 = vsub.s32 5, %v697
        %v699 = vrot.slane %v665, %v698
        %v700 = vlaneseq
        %v701 = vshrl.u32 %v700, 7
        %v702 = vsub.s32 1, %v701
        %v703 = vrot.slane %v695, %v702
        %v704 = vlaneseq
        %v705 = vshrl.u32 %v704, 7
        %v706 = vsub.s32 1, %v705
        %v707 = vrot.slane %v699, %v706
        %vm708 = vcmp.eq.s32.totalorder %v703, 1
        %vm709 = vcmp.eq.s32.totalorder %v707, 1
        %v710 = vsel %vm708, %v661, %v632
        %v711 = vsel %vm709, %v657, %v636
        %v712 = vsel %vm708, %v662, %v633
        %v713 = vsel %vm709, %v658, %v637
        %v714 = vsel %vm708, %v663, %v634
        %v715 = vsel %vm709, %v659, %v638
        %v716 = vsel %vm708, %v664, %v635
        %v717 = vsel %vm709, %v660, %v639
        %718 = vrot.lane.b32.xlu0 %v684, 112
        %v719 = vpop.permute.xlu0 %718
        %720 = vrot.lane.b32.xlu0 %v686, 112
        %v721 = vpop.permute.xlu0 %720
        %722 = vrot.lane.b32.xlu0 %v688, 112
        %v723 = vpop.permute.xlu0 %722
        %724 = vrot.lane.b32.xlu0 %v690, 112
        %v725 = vpop.permute.xlu0 %724
        %726 = vrot.lane.b32.xlu0 %v685, 112
        %v727 = vpop.permute.xlu0 %726
        %728 = vrot.lane.b32.xlu0 %v687, 112
        %v729 = vpop.permute.xlu0 %728
        %730 = vrot.lane.b32.xlu0 %v689, 112
        %v731 = vpop.permute.xlu0 %730
        %732 = vrot.lane.b32.xlu0 %v691, 112
        %v733 = vpop.permute.xlu0 %732
        %vm734 = vcmp.lt.s32.totalorder %v630, 112
        %v735 = vsel %vm734, %v719, %v727
        %v736 = vsel %vm734, %v721, %v729
        %v737 = vsel %vm734, %v723, %v731
        %v738 = vsel %vm734, %v725, %v733
        %v739 = vsel %vm734, %v727, %v719
        %v740 = vsel %vm734, %v729, %v721
        %v741 = vsel %vm734, %v731, %v723
        %v742 = vsel %vm734, %v733, %v725
        %743 = vrot.lane.b32.xlu0 %v684, 16
        %v744 = vpop.permute.xlu0 %743
        %745 = vrot.lane.b32.xlu0 %v686, 16
        %v746 = vpop.permute.xlu0 %745
        %747 = vrot.lane.b32.xlu0 %v688, 16
        %v748 = vpop.permute.xlu0 %747
        %749 = vrot.lane.b32.xlu0 %v690, 16
        %v750 = vpop.permute.xlu0 %749
        %751 = vrot.lane.b32.xlu0 %v685, 16
        %v752 = vpop.permute.xlu0 %751
        %753 = vrot.lane.b32.xlu0 %v687, 16
        %v754 = vpop.permute.xlu0 %753
        %755 = vrot.lane.b32.xlu0 %v689, 16
        %v756 = vpop.permute.xlu0 %755
        %757 = vrot.lane.b32.xlu0 %v691, 16
        %v758 = vpop.permute.xlu0 %757
        %vm759 = vcmp.lt.s32.totalorder %v630, 16
        %v760 = vsel %vm759, %v744, %v752
        %v761 = vsel %vm759, %v746, %v754
        %v762 = vsel %vm759, %v748, %v756
        %v763 = vsel %vm759, %v750, %v758
        %v764 = vsel %vm759, %v752, %v744
        %v765 = vsel %vm759, %v754, %v746
        %v766 = vsel %vm759, %v756, %v748
        %v767 = vsel %vm759, %v758, %v750
        %v768 = vlaneseq
        %v769 = vshrl.u32 %v768, 7
        %v770 = vsub.s32 2, %v769
        %v771 = vrot.slane %v665, %v770
        %v772 = vlaneseq
        %v773 = vshrl.u32 %v772, 7
        %v774 = vsub.s32 6, %v773
        %v775 = vrot.slane %v665, %v774
        %v776 = vlaneseq
        %v777 = vshrl.u32 %v776, 7
        %v778 = vsub.s32 2, %v777
        %v779 = vrot.slane %v771, %v778
        %v780 = vlaneseq
        %v781 = vshrl.u32 %v780, 7
        %v782 = vsub.s32 2, %v781
        %v783 = vrot.slane %v775, %v782
        %vm784 = vcmp.eq.s32.totalorder %v779, 1
        %vm785 = vcmp.eq.s32.totalorder %v783, 1
        %v786 = vsel %vm784, %v735, %v764
        %v787 = vsel %vm785, %v739, %v760
        %v788 = vsel %vm784, %v736, %v765
        %v789 = vsel %vm785, %v740, %v761
        %v790 = vsel %vm784, %v737, %v766
        %v791 = vsel %vm785, %v741, %v762
        %v792 = vsel %vm784, %v738, %v767
        %v793 = vsel %vm785, %v742, %v763
        %v794 = vlaneseq
        %v795 = vshrl.u32 %v794, 7
        %v796 = vsub.s32 3, %v795
        %v797 = vrot.slane %v665, %v796
        %v798 = vlaneseq
        %v799 = vshrl.u32 %v798, 7
        %v800 = vsub.s32 7, %v799
        %v801 = vrot.slane %v665, %v800
        %v802 = vlaneseq
        %v803 = vshrl.u32 %v802, 7
        %v804 = vsub.s32 3, %v803
        %v805 = vrot.slane %v797, %v804
        %v806 = vlaneseq
        %v807 = vshrl.u32 %v806, 7
        %v808 = vsub.s32 3, %v807
        %v809 = vrot.slane %v801, %v808
        %vm810 = vcmp.eq.s32.totalorder %v805, 1
        %vm811 = vcmp.eq.s32.totalorder %v809, 1
        %v812 = vsel %vm810, %v764, %v735
        %v813 = vsel %vm811, %v760, %v739
        %v814 = vsel %vm810, %v765, %v736
        %v815 = vsel %vm811, %v761, %v740
        %v816 = vsel %vm810, %v766, %v737
        %v817 = vsel %vm811, %v762, %v741
        %v818 = vsel %vm810, %v767, %v738
        %v819 = vsel %vm811, %v763, %v742
        %v820 = vld [vmem:[%s3] sm:$0xf]
        %v821 = vld [vmem:[%s3 + $0x4] sm:$0xf]
        %v822 = vld [vmem:[%s3 + $0x8] sm:$0xf]
        %v823 = vld [vmem:[%s3 + $0xc] sm:$0xf]
        %v824 = vpack.c.bf16 %v788, %v786
        %v825 = vpack.c.bf16 %v789, %v787
        %v826 = vpack.c.bf16 %v792, %v790
        %v827 = vpack.c.bf16 %v793, %v791
        %s828 = scalar_lea.vmem %s3, 48
        %v829 = vld [vmem:[%s828] sm:$0xf]
        %v830 = vld [vmem:[%s828 + $0x4] sm:$0xf]
        %v831 = vld [vmem:[%s828 + $0x8] sm:$0xf]
        %v832 = vld [vmem:[%s828 + $0xc] sm:$0xf]
        %v833 = vpack.c.bf16 %v686, %v684
        %v834 = vpack.c.bf16 %v687, %v685
        %v835 = vpack.c.bf16 %v690, %v688
        %v836 = vpack.c.bf16 %v691, %v689
        %v841 = vunpack.c.l.b16 %v829
        %v842 = vunpack.c.l.b16 %v830
        %v843 = vunpack.c.l.b16 %v831
        %v844 = vunpack.c.l.b16 %v832
        %v845 = vpack.c.b16 %v842, %v841
        %v846 = vpack.c.b16 %v844, %v843
        %vm847 = vcmask 261120
        %v849 = vsel %vm847, %v845, 0
        %v852 = vsel %vm847, %v846, 0
        %854 = vmatprep.subr.bf16.mxu0 %v834
        %855 = vmatpush1.bf16.msra.mxu0 %v833
        %856 = vmatprep.subr.bf16.mxu0 %v836
        %857 = vmatpush1.bf16.msra.mxu0 %v835
        %858 = vmatprep.subr.bf16.mxu0 0
        %859 = vmatpush1.bf16.msra.mxu0 0
        %860 = vmatprep.subr.bf16.mxu0 0
        %861 = vmatpush1.bf16.msra.mxu0 0
        %862 = vmatprep.subr.bf16.mxu0 0
        %863 = vmatpush1.bf16.msra.mxu0 0
        %864 = vmatprep.subr.bf16.mxu0 0
        %865 = vmatpush1.bf16.msra.mxu0 0
        %866 = vmatprep.subr.bf16.mxu0 0
        %867 = vmatpush1.bf16.msra.mxu0 0
        %868 = vmatprep.subr.bf16.mxu0 0
        %869 = vmatpush1.bf16.msra.mxu0 0
        %870 = vmatprep.subr.bf16.mxu0 0
        %871 = vmatpush1.bf16.msra.mxu0 0
        %872 = vmatprep.subr.bf16.mxu0 0
        %873 = vmatpush1.bf16.msra.mxu0 0
        %874 = vmatprep.subr.bf16.mxu0 0
        %875 = vmatpush1.bf16.msra.mxu0 0
        %876 = vmatprep.subr.bf16.mxu0 0
        %877 = vmatpush1.bf16.msra.mxu0 0
        %878 = vmatprep.subr.bf16.mxu0 0
        %879 = vmatpush1.bf16.msra.mxu0 0
        %880 = vmatprep.subr.bf16.mxu0 0
        %881 = vmatpush1.bf16.msra.mxu0 0
        %882 = vmatprep.subr.bf16.mxu0 0
        %883 = vmatpush1.bf16.msra.mxu0 0
        %884 = vmatprep.subr.bf16.mxu0 0
        %885 = vmatpush1.bf16.msra.mxu0 0
        %886 = vmatprep.mubr.bf16.mxu0 0
        %887 = vmatmul.mubr.bf16.gmra.mrb[0].mxu0 %v849
        %v888 = vpop.f32.mrb[0].mxu0
        %v889 = vadd.f32 0.0, %v888
        %v890 = vpop.f32.mrb[0].mxu0
        %v891 = vadd.f32 0.0, %v890
        %v892 = vpop.f32.mrb[0].mxu0
        %v893 = vadd.f32 0.0, %v892
        %v894 = vpop.f32.mrb[0].mxu0
        %v895 = vadd.f32 0.0, %v894
        %896 = vmatprep.mubr.bf16.mxu0 0
        %897 = vmatmul.mubr.bf16.gmra.mrb[0].mxu0 %v852
        %v898 = vpop.f32.mrb[0].mxu0
        %v899 = vadd.f32 0.0, %v898
        %v900 = vpop.f32.mrb[0].mxu0
        %v901 = vadd.f32 0.0, %v900
        %v902 = vpop.f32.mrb[0].mxu0
        %v903 = vadd.f32 0.0, %v902
        %v904 = vpop.f32.mrb[0].mxu0
        %v905 = vadd.f32 0.0, %v904
        %906 = vdwg.mxu0
        %v911 = vunpack.c.l.b16 %v820
        %v912 = vunpack.c.l.b16 %v821
        %v913 = vunpack.c.l.b16 %v822
        %v914 = vunpack.c.l.b16 %v823
        %v915 = vpack.c.b16 %v912, %v911
        %v916 = vpack.c.b16 %v914, %v913
        %v918 = vsel %vm847, %v915, 0
        %v921 = vsel %vm847, %v916, 0
        %923 = vmatprep.subr.bf16.mxu0 %v825
        %924 = vmatpush1.bf16.msra.mxu0 %v824
        %925 = vmatprep.subr.bf16.mxu0 %v827
        %926 = vmatpush1.bf16.msra.mxu0 %v826
        %927 = vmatprep.subr.bf16.mxu0 0
        %928 = vmatpush1.bf16.msra.mxu0 0
        %929 = vmatprep.subr.bf16.mxu0 0
        %930 = vmatpush1.bf16.msra.mxu0 0
        %931 = vmatprep.subr.bf16.mxu0 0
        %932 = vmatpush1.bf16.msra.mxu0 0
        %933 = vmatprep.subr.bf16.mxu0 0
        %934 = vmatpush1.bf16.msra.mxu0 0
        %935 = vmatprep.subr.bf16.mxu0 0
        %936 = vmatpush1.bf16.msra.mxu0 0
        %937 = vmatprep.subr.bf16.mxu0 0
        %938 = vmatpush1.bf16.msra.mxu0 0
        %939 = vmatprep.subr.bf16.mxu0 0
        %940 = vmatpush1.bf16.msra.mxu0 0
        %941 = vmatprep.subr.bf16.mxu0 0
        %942 = vmatpush1.bf16.msra.mxu0 0
        %943 = vmatprep.subr.bf16.mxu0 0
        %944 = vmatpush1.bf16.msra.mxu0 0
        %945 = vmatprep.subr.bf16.mxu0 0
        %946 = vmatpush1.bf16.msra.mxu0 0
        %947 = vmatprep.subr.bf16.mxu0 0
        %948 = vmatpush1.bf16.msra.mxu0 0
        %949 = vmatprep.subr.bf16.mxu0 0
        %950 = vmatpush1.bf16.msra.mxu0 0
        %951 = vmatprep.subr.bf16.mxu0 0
        %952 = vmatpush1.bf16.msra.mxu0 0
        %953 = vmatprep.subr.bf16.mxu0 0
        %954 = vmatpush1.bf16.msra.mxu0 0
        %955 = vmatprep.mubr.bf16.mxu0 0
        %956 = vmatmul.mubr.bf16.gmra.mrb[0].mxu0 %v918
        %v957 = vpop.f32.mrb[0].mxu0
        %v958 = vadd.f32 %v889, %v957
        %v959 = vpop.f32.mrb[0].mxu0
        %v960 = vadd.f32 %v891, %v959
        %v961 = vpop.f32.mrb[0].mxu0
        %v962 = vadd.f32 %v893, %v961
        %v963 = vpop.f32.mrb[0].mxu0
        %v964 = vadd.f32 %v895, %v963
        %965 = vmatprep.mubr.bf16.mxu0 0
        %966 = vmatmul.mubr.bf16.gmra.mrb[0].mxu0 %v921
        %v967 = vpop.f32.mrb[0].mxu0
        %v968 = vadd.f32 %v899, %v967
        %v969 = vpop.f32.mrb[0].mxu0
        %v970 = vadd.f32 %v901, %v969
        %v971 = vpop.f32.mrb[0].mxu0
        %v972 = vadd.f32 %v903, %v971
        %v973 = vpop.f32.mrb[0].mxu0
        %v974 = vadd.f32 %v905, %v973
        %975 = vdwg.mxu0
        %s976 = scalar_lea.vmem %s3, 96
        %v977 = vld [vmem:[%s976] sm:$0xf]
        %v978 = vld [vmem:[%s976 + $0x4] sm:$0xf]
        %v979 = vld [vmem:[%s976 + $0x8] sm:$0xf]
        %v980 = vld [vmem:[%s976 + $0xc] sm:$0xf]
        %v981 = vpack.c.bf16 %v814, %v812
        %v982 = vpack.c.bf16 %v815, %v813
        %v983 = vpack.c.bf16 %v818, %v816
        %v984 = vpack.c.bf16 %v819, %v817
        %v989 = vunpack.c.l.b16 %v977
        %v990 = vunpack.c.l.b16 %v978
        %v991 = vunpack.c.l.b16 %v979
        %v992 = vunpack.c.l.b16 %v980
        %v993 = vpack.c.b16 %v990, %v989
        %v994 = vpack.c.b16 %v992, %v991
        %v996 = vsel %vm847, %v993, 0
        %v999 = vsel %vm847, %v994, 0
        %1001 = vmatprep.subr.bf16.mxu0 %v982
        %1002 = vmatpush1.bf16.msra.mxu0 %v981
        %1003 = vmatprep.subr.bf16.mxu0 %v984
        %1004 = vmatpush1.bf16.msra.mxu0 %v983
        %1005 = vmatprep.subr.bf16.mxu0 0
        %1006 = vmatpush1.bf16.msra.mxu0 0
        %1007 = vmatprep.subr.bf16.mxu0 0
        %1008 = vmatpush1.bf16.msra.mxu0 0
        %1009 = vmatprep.subr.bf16.mxu0 0
        %1010 = vmatpush1.bf16.msra.mxu0 0
        %1011 = vmatprep.subr.bf16.mxu0 0
        %1012 = vmatpush1.bf16.msra.mxu0 0
        %1013 = vmatprep.subr.bf16.mxu0 0
        %1014 = vmatpush1.bf16.msra.mxu0 0
        %1015 = vmatprep.subr.bf16.mxu0 0
        %1016 = vmatpush1.bf16.msra.mxu0 0
        %1017 = vmatprep.subr.bf16.mxu0 0
        %1018 = vmatpush1.bf16.msra.mxu0 0
        %1019 = vmatprep.subr.bf16.mxu0 0
        %1020 = vmatpush1.bf16.msra.mxu0 0
        %1021 = vmatprep.subr.bf16.mxu0 0
        %1022 = vmatpush1.bf16.msra.mxu0 0
        %1023 = vmatprep.subr.bf16.mxu0 0
        %1024 = vmatpush1.bf16.msra.mxu0 0
        %1025 = vmatprep.subr.bf16.mxu0 0
        %1026 = vmatpush1.bf16.msra.mxu0 0
        %1027 = vmatprep.subr.bf16.mxu0 0
        %1028 = vmatpush1.bf16.msra.mxu0 0
        %1029 = vmatprep.subr.bf16.mxu0 0
        %1030 = vmatpush1.bf16.msra.mxu0 0
        %1031 = vmatprep.subr.bf16.mxu0 0
        %1032 = vmatpush1.bf16.msra.mxu0 0
        %1033 = vmatprep.mubr.bf16.mxu0 0
        %1034 = vmatmul.mubr.bf16.gmra.mrb[0].mxu0 %v996
        %v1035 = vpop.f32.mrb[0].mxu0
        %v1036 = vadd.f32 0.0, %v1035
        %v1037 = vpop.f32.mrb[0].mxu0
        %v1038 = vadd.f32 0.0, %v1037
        %v1039 = vpop.f32.mrb[0].mxu0
        %v1040 = vadd.f32 0.0, %v1039
        %v1041 = vpop.f32.mrb[0].mxu0
        %v1042 = vadd.f32 0.0, %v1041
        %1043 = vmatprep.mubr.bf16.mxu0 0
        %1044 = vmatmul.mubr.bf16.gmra.mrb[0].mxu0 %v999
        %v1045 = vpop.f32.mrb[0].mxu0
        %v1046 = vadd.f32 0.0, %v1045
        %v1047 = vpop.f32.mrb[0].mxu0
        %v1048 = vadd.f32 0.0, %v1047
        %v1049 = vpop.f32.mrb[0].mxu0
        %v1050 = vadd.f32 0.0, %v1049
        %v1051 = vpop.f32.mrb[0].mxu0
        %v1052 = vadd.f32 0.0, %v1051
        %1053 = vdwg.mxu0
        %v1054 = vadd.f32 %v958, %v1036
        %v1055 = vadd.f32 %v960, %v1038
        %v1056 = vadd.f32 %v962, %v1040
        %v1057 = vadd.f32 %v964, %v1042
        %v1058 = vadd.f32 %v968, %v1046
        %v1059 = vadd.f32 %v970, %v1048
        %v1060 = vadd.f32 %v972, %v1050
        %v1061 = vadd.f32 %v974, %v1052
        %1062 = vrot.lane.b32.xlu0 %v597, 112
        %v1063 = vpop.permute.xlu0 %1062
        %1064 = vrot.lane.b32.xlu0 %v599, 112
        %v1065 = vpop.permute.xlu0 %1064
        %1066 = vrot.lane.b32.xlu0 %v601, 112
        %v1067 = vpop.permute.xlu0 %1066
        %1068 = vrot.lane.b32.xlu0 %v603, 112
        %v1069 = vpop.permute.xlu0 %1068
        %1070 = vrot.lane.b32.xlu0 %v598, 112
        %v1071 = vpop.permute.xlu0 %1070
        %1072 = vrot.lane.b32.xlu0 %v600, 112
        %v1073 = vpop.permute.xlu0 %1072
        %1074 = vrot.lane.b32.xlu0 %v602, 112
        %v1075 = vpop.permute.xlu0 %1074
        %1076 = vrot.lane.b32.xlu0 %v604, 112
        %v1077 = vpop.permute.xlu0 %1076
        %v1078 = vsel %vm734, %v1063, %v1071
        %v1079 = vsel %vm734, %v1065, %v1073
        %v1080 = vsel %vm734, %v1067, %v1075
        %v1081 = vsel %vm734, %v1069, %v1077
        %v1082 = vsel %vm734, %v1071, %v1063
        %v1083 = vsel %vm734, %v1073, %v1065
        %v1084 = vsel %vm734, %v1075, %v1067
        %v1085 = vsel %vm734, %v1077, %v1069
        %1086 = vrot.lane.b32.xlu0 %v597, 16
        %v1087 = vpop.permute.xlu0 %1086
        %1088 = vrot.lane.b32.xlu0 %v599, 16
        %v1089 = vpop.permute.xlu0 %1088
        %1090 = vrot.lane.b32.xlu0 %v601, 16
        %v1091 = vpop.permute.xlu0 %1090
        %1092 = vrot.lane.b32.xlu0 %v603, 16
        %v1093 = vpop.permute.xlu0 %1092
        %1094 = vrot.lane.b32.xlu0 %v598, 16
        %v1095 = vpop.permute.xlu0 %1094
        %1096 = vrot.lane.b32.xlu0 %v600, 16
        %v1097 = vpop.permute.xlu0 %1096
        %1098 = vrot.lane.b32.xlu0 %v602, 16
        %v1099 = vpop.permute.xlu0 %1098
        %1100 = vrot.lane.b32.xlu0 %v604, 16
        %v1101 = vpop.permute.xlu0 %1100
        %v1102 = vsel %vm759, %v1087, %v1095
        %v1103 = vsel %vm759, %v1089, %v1097
        %v1104 = vsel %vm759, %v1091, %v1099
        %v1105 = vsel %vm759, %v1093, %v1101
        %v1106 = vsel %vm759, %v1095, %v1087
        %v1107 = vsel %vm759, %v1097, %v1089
        %v1108 = vsel %vm759, %v1099, %v1091
        %v1109 = vsel %vm759, %v1101, %v1093
        %v1110 = vsel %vm784, %v1078, %v1106
        %v1111 = vsel %vm785, %v1082, %v1102
        %v1112 = vsel %vm784, %v1079, %v1107
        %v1113 = vsel %vm785, %v1083, %v1103
        %v1114 = vsel %vm784, %v1080, %v1108
        %v1115 = vsel %vm785, %v1084, %v1104
        %v1116 = vsel %vm784, %v1081, %v1109
        %v1117 = vsel %vm785, %v1085, %v1105
        %v1118 = vsel %vm810, %v1106, %v1078
        %v1119 = vsel %vm811, %v1102, %v1082
        %v1120 = vsel %vm810, %v1107, %v1079
        %v1121 = vsel %vm811, %v1103, %v1083
        %v1122 = vsel %vm810, %v1108, %v1080
        %v1123 = vsel %vm811, %v1104, %v1084
        %v1124 = vsel %vm810, %v1109, %v1081
        %v1125 = vsel %vm811, %v1105, %v1085
        %s1126 = scalar_lea.vmem %s3, 16
        %v1127 = vld [vmem:[%s1126] sm:$0xf]
        %v1128 = vld [vmem:[%s1126 + $0x4] sm:$0xf]
        %v1129 = vld [vmem:[%s1126 + $0x8] sm:$0xf]
        %v1130 = vld [vmem:[%s1126 + $0xc] sm:$0xf]
        %v1131 = vpack.c.bf16 %v1112, %v1110
        %v1132 = vpack.c.bf16 %v1113, %v1111
        %v1133 = vpack.c.bf16 %v1116, %v1114
        %v1134 = vpack.c.bf16 %v1117, %v1115
        %v1139 = vunpack.c.l.b16 %v1127
        %v1140 = vunpack.c.l.b16 %v1128
        %v1141 = vunpack.c.l.b16 %v1129
        %v1142 = vunpack.c.l.b16 %v1130
        %v1143 = vpack.c.b16 %v1140, %v1139
        %v1144 = vpack.c.b16 %v1142, %v1141
        %v1146 = vsel %vm847, %v1143, 0
        %v1149 = vsel %vm847, %v1144, 0
        %1151 = vmatprep.subr.bf16.mxu0 %v1132
        %1152 = vmatpush1.bf16.msra.mxu0 %v1131
        %1153 = vmatprep.subr.bf16.mxu0 %v1134
        %1154 = vmatpush1.bf16.msra.mxu0 %v1133
        %1155 = vmatprep.subr.bf16.mxu0 0
        %1156 = vmatpush1.bf16.msra.mxu0 0
        %1157 = vmatprep.subr.bf16.mxu0 0
        %1158 = vmatpush1.bf16.msra.mxu0 0
        %1159 = vmatprep.subr.bf16.mxu0 0
        %1160 = vmatpush1.bf16.msra.mxu0 0
        %1161 = vmatprep.subr.bf16.mxu0 0
        %1162 = vmatpush1.bf16.msra.mxu0 0
        %1163 = vmatprep.subr.bf16.mxu0 0
        %1164 = vmatpush1.bf16.msra.mxu0 0
        %1165 = vmatprep.subr.bf16.mxu0 0
        %1166 = vmatpush1.bf16.msra.mxu0 0
        %1167 = vmatprep.subr.bf16.mxu0 0
        %1168 = vmatpush1.bf16.msra.mxu0 0
        %1169 = vmatprep.subr.bf16.mxu0 0
        %1170 = vmatpush1.bf16.msra.mxu0 0
        %1171 = vmatprep.subr.bf16.mxu0 0
        %1172 = vmatpush1.bf16.msra.mxu0 0
        %1173 = vmatprep.subr.bf16.mxu0 0
        %1174 = vmatpush1.bf16.msra.mxu0 0
        %1175 = vmatprep.subr.bf16.mxu0 0
        %1176 = vmatpush1.bf16.msra.mxu0 0
        %1177 = vmatprep.subr.bf16.mxu0 0
        %1178 = vmatpush1.bf16.msra.mxu0 0
        %1179 = vmatprep.subr.bf16.mxu0 0
        %1180 = vmatpush1.bf16.msra.mxu0 0
        %1181 = vmatprep.subr.bf16.mxu0 0
        %1182 = vmatpush1.bf16.msra.mxu0 0
        %1183 = vmatprep.mubr.bf16.mxu0 0
        %1184 = vmatmul.mubr.bf16.gmra.mrb[0].mxu0 %v1146
        %v1185 = vpop.f32.mrb[0].mxu0
        %v1186 = vadd.f32 0.0, %v1185
        %v1187 = vpop.f32.mrb[0].mxu0
        %v1188 = vadd.f32 0.0, %v1187
        %v1189 = vpop.f32.mrb[0].mxu0
        %v1190 = vadd.f32 0.0, %v1189
        %v1191 = vpop.f32.mrb[0].mxu0
        %v1192 = vadd.f32 0.0, %v1191
        %1193 = vmatprep.mubr.bf16.mxu0 0
        %1194 = vmatmul.mubr.bf16.gmra.mrb[0].mxu0 %v1149
        %v1195 = vpop.f32.mrb[0].mxu0
        %v1196 = vadd.f32 0.0, %v1195
        %v1197 = vpop.f32.mrb[0].mxu0
        %v1198 = vadd.f32 0.0, %v1197
        %v1199 = vpop.f32.mrb[0].mxu0
        %v1200 = vadd.f32 0.0, %v1199
        %v1201 = vpop.f32.mrb[0].mxu0
        %v1202 = vadd.f32 0.0, %v1201
        %1203 = vdwg.mxu0
        %v1204 = vadd.f32 %v1054, %v1186
        %v1205 = vadd.f32 %v1055, %v1188
        %v1206 = vadd.f32 %v1056, %v1190
        %v1207 = vadd.f32 %v1057, %v1192
        %v1208 = vadd.f32 %v1058, %v1196
        %v1209 = vadd.f32 %v1059, %v1198
        %v1210 = vadd.f32 %v1060, %v1200
        %v1211 = vadd.f32 %v1061, %v1202
        %s1212 = scalar_lea.vmem %s3, 64
        %v1213 = vld [vmem:[%s1212] sm:$0xf]
        %v1214 = vld [vmem:[%s1212 + $0x4] sm:$0xf]
        %v1215 = vld [vmem:[%s1212 + $0x8] sm:$0xf]
        %v1216 = vld [vmem:[%s1212 + $0xc] sm:$0xf]
        %v1217 = vpack.c.bf16 %v599, %v597
        %v1218 = vpack.c.bf16 %v600, %v598
        %v1219 = vpack.c.bf16 %v603, %v601
        %v1220 = vpack.c.bf16 %v604, %v602
        %v1225 = vunpack.c.l.b16 %v1213
        %v1226 = vunpack.c.l.b16 %v1214
        %v1227 = vunpack.c.l.b16 %v1215
        %v1228 = vunpack.c.l.b16 %v1216
        %v1229 = vpack.c.b16 %v1226, %v1225
        %v1230 = vpack.c.b16 %v1228, %v1227
        %v1232 = vsel %vm847, %v1229, 0
        %v1235 = vsel %vm847, %v1230, 0
        %1237 = vmatprep.subr.bf16.mxu0 %v1218
        %1238 = vmatpush1.bf16.msra.mxu0 %v1217
        %1239 = vmatprep.subr.bf16.mxu0 %v1220
        %1240 = vmatpush1.bf16.msra.mxu0 %v1219
        %1241 = vmatprep.subr.bf16.mxu0 0
        %1242 = vmatpush1.bf16.msra.mxu0 0
        %1243 = vmatprep.subr.bf16.mxu0 0
        %1244 = vmatpush1.bf16.msra.mxu0 0
        %1245 = vmatprep.subr.bf16.mxu0 0
        %1246 = vmatpush1.bf16.msra.mxu0 0
        %1247 = vmatprep.subr.bf16.mxu0 0
        %1248 = vmatpush1.bf16.msra.mxu0 0
        %1249 = vmatprep.subr.bf16.mxu0 0
        %1250 = vmatpush1.bf16.msra.mxu0 0
        %1251 = vmatprep.subr.bf16.mxu0 0
        %1252 = vmatpush1.bf16.msra.mxu0 0
        %1253 = vmatprep.subr.bf16.mxu0 0
        %1254 = vmatpush1.bf16.msra.mxu0 0
        %1255 = vmatprep.subr.bf16.mxu0 0
        %1256 = vmatpush1.bf16.msra.mxu0 0
        %1257 = vmatprep.subr.bf16.mxu0 0
        %1258 = vmatpush1.bf16.msra.mxu0 0
        %1259 = vmatprep.subr.bf16.mxu0 0
        %1260 = vmatpush1.bf16.msra.mxu0 0
        %1261 = vmatprep.subr.bf16.mxu0 0
        %1262 = vmatpush1.bf16.msra.mxu0 0
        %1263 = vmatprep.subr.bf16.mxu0 0
        %1264 = vmatpush1.bf16.msra.mxu0 0
        %1265 = vmatprep.subr.bf16.mxu0 0
        %1266 = vmatpush1.bf16.msra.mxu0 0
        %1267 = vmatprep.subr.bf16.mxu0 0
        %1268 = vmatpush1.bf16.msra.mxu0 0
        %1269 = vmatprep.mubr.bf16.mxu0 0
        %1270 = vmatmul.mubr.bf16.gmra.mrb[0].mxu0 %v1232
        %v1271 = vpop.f32.mrb[0].mxu0
        %v1272 = vadd.f32 0.0, %v1271
        %v1273 = vpop.f32.mrb[0].mxu0
        %v1274 = vadd.f32 0.0, %v1273
        %v1275 = vpop.f32.mrb[0].mxu0
        %v1276 = vadd.f32 0.0, %v1275
        %v1277 = vpop.f32.mrb[0].mxu0
        %v1278 = vadd.f32 0.0, %v1277
        %1279 = vmatprep.mubr.bf16.mxu0 0
        %1280 = vmatmul.mubr.bf16.gmra.mrb[0].mxu0 %v1235
        %v1281 = vpop.f32.mrb[0].mxu0
        %v1282 = vadd.f32 0.0, %v1281
        %v1283 = vpop.f32.mrb[0].mxu0
        %v1284 = vadd.f32 0.0, %v1283
        %v1285 = vpop.f32.mrb[0].mxu0
        %v1286 = vadd.f32 0.0, %v1285
        %v1287 = vpop.f32.mrb[0].mxu0
        %v1288 = vadd.f32 0.0, %v1287
        %1289 = vdwg.mxu0
        %v1290 = vadd.f32 %v1204, %v1272
        %v1291 = vadd.f32 %v1205, %v1274
        %v1292 = vadd.f32 %v1206, %v1276
        %v1293 = vadd.f32 %v1207, %v1278
        %v1294 = vadd.f32 %v1208, %v1282
        %v1295 = vadd.f32 %v1209, %v1284
        %v1296 = vadd.f32 %v1210, %v1286
        %v1297 = vadd.f32 %v1211, %v1288
        %s1298 = scalar_lea.vmem %s3, 112
        %v1299 = vld [vmem:[%s1298] sm:$0xf]
        %v1300 = vld [vmem:[%s1298 + $0x4] sm:$0xf]
        %v1301 = vld [vmem:[%s1298 + $0x8] sm:$0xf]
        %v1302 = vld [vmem:[%s1298 + $0xc] sm:$0xf]
        %v1303 = vpack.c.bf16 %v1120, %v1118
        %v1304 = vpack.c.bf16 %v1121, %v1119
        %v1305 = vpack.c.bf16 %v1124, %v1122
        %v1306 = vpack.c.bf16 %v1125, %v1123
        %v1311 = vunpack.c.l.b16 %v1299
        %v1312 = vunpack.c.l.b16 %v1300
        %v1313 = vunpack.c.l.b16 %v1301
        %v1314 = vunpack.c.l.b16 %v1302
        %v1315 = vpack.c.b16 %v1312, %v1311
        %v1316 = vpack.c.b16 %v1314, %v1313
        %v1318 = vsel %vm847, %v1315, 0
        %v1321 = vsel %vm847, %v1316, 0
        %1323 = vmatprep.subr.bf16.mxu0 %v1304
        %1324 = vmatpush1.bf16.msra.mxu0 %v1303
        %1325 = vmatprep.subr.bf16.mxu0 %v1306
        %1326 = vmatpush1.bf16.msra.mxu0 %v1305
        %1327 = vmatprep.subr.bf16.mxu0 0
        %1328 = vmatpush1.bf16.msra.mxu0 0
        %1329 = vmatprep.subr.bf16.mxu0 0
        %1330 = vmatpush1.bf16.msra.mxu0 0
        %1331 = vmatprep.subr.bf16.mxu0 0
        %1332 = vmatpush1.bf16.msra.mxu0 0
        %1333 = vmatprep.subr.bf16.mxu0 0
        %1334 = vmatpush1.bf16.msra.mxu0 0
        %1335 = vmatprep.subr.bf16.mxu0 0
        %1336 = vmatpush1.bf16.msra.mxu0 0
        %1337 = vmatprep.subr.bf16.mxu0 0
        %1338 = vmatpush1.bf16.msra.mxu0 0
        %1339 = vmatprep.subr.bf16.mxu0 0
        %1340 = vmatpush1.bf16.msra.mxu0 0
        %1341 = vmatprep.subr.bf16.mxu0 0
        %1342 = vmatpush1.bf16.msra.mxu0 0
        %1343 = vmatprep.subr.bf16.mxu0 0
        %1344 = vmatpush1.bf16.msra.mxu0 0
        %1345 = vmatprep.subr.bf16.mxu0 0
        %1346 = vmatpush1.bf16.msra.mxu0 0
        %1347 = vmatprep.subr.bf16.mxu0 0
        %1348 = vmatpush1.bf16.msra.mxu0 0
        %1349 = vmatprep.subr.bf16.mxu0 0
        %1350 = vmatpush1.bf16.msra.mxu0 0
        %1351 = vmatprep.subr.bf16.mxu0 0
        %1352 = vmatpush1.bf16.msra.mxu0 0
        %1353 = vmatprep.subr.bf16.mxu0 0
        %1354 = vmatpush1.bf16.msra.mxu0 0
        %1355 = vmatprep.mubr.bf16.mxu0 0
        %1356 = vmatmul.mubr.bf16.gmra.mrb[0].mxu0 %v1318
        %v1357 = vpop.f32.mrb[0].mxu0
        %v1358 = vadd.f32 0.0, %v1357
        %v1359 = vpop.f32.mrb[0].mxu0
        %v1360 = vadd.f32 0.0, %v1359
        %v1361 = vpop.f32.mrb[0].mxu0
        %v1362 = vadd.f32 0.0, %v1361
        %v1363 = vpop.f32.mrb[0].mxu0
        %v1364 = vadd.f32 0.0, %v1363
        %1365 = vmatprep.mubr.bf16.mxu0 0
        %1366 = vmatmul.mubr.bf16.gmra.mrb[0].mxu0 %v1321
        %v1367 = vpop.f32.mrb[0].mxu0
        %v1368 = vadd.f32 0.0, %v1367
        %v1369 = vpop.f32.mrb[0].mxu0
        %v1370 = vadd.f32 0.0, %v1369
        %v1371 = vpop.f32.mrb[0].mxu0
        %v1372 = vadd.f32 0.0, %v1371
        %v1373 = vpop.f32.mrb[0].mxu0
        %v1374 = vadd.f32 0.0, %v1373
        %1375 = vdwg.mxu0
        %v1376 = vadd.f32 %v1290, %v1358
        %v1377 = vadd.f32 %v1291, %v1360
        %v1378 = vadd.f32 %v1292, %v1362
        %v1379 = vadd.f32 %v1293, %v1364
        %v1380 = vadd.f32 %v1294, %v1368
        %v1381 = vadd.f32 %v1295, %v1370
        %v1382 = vadd.f32 %v1296, %v1372
        %v1383 = vadd.f32 %v1297, %v1374
        %1384 = vrot.lane.b32.xlu0 %v710, 112
        %v1385 = vpop.permute.xlu0 %1384
        %1386 = vrot.lane.b32.xlu0 %v712, 112
        %v1387 = vpop.permute.xlu0 %1386
        %1388 = vrot.lane.b32.xlu0 %v714, 112
        %v1389 = vpop.permute.xlu0 %1388
        %1390 = vrot.lane.b32.xlu0 %v716, 112
        %v1391 = vpop.permute.xlu0 %1390
        %1392 = vrot.lane.b32.xlu0 %v711, 112
        %v1393 = vpop.permute.xlu0 %1392
        %1394 = vrot.lane.b32.xlu0 %v713, 112
        %v1395 = vpop.permute.xlu0 %1394
        %1396 = vrot.lane.b32.xlu0 %v715, 112
        %v1397 = vpop.permute.xlu0 %1396
        %1398 = vrot.lane.b32.xlu0 %v717, 112
        %v1399 = vpop.permute.xlu0 %1398
        %v1400 = vsel %vm734, %v1385, %v1393
        %v1401 = vsel %vm734, %v1387, %v1395
        %v1402 = vsel %vm734, %v1389, %v1397
        %v1403 = vsel %vm734, %v1391, %v1399
        %v1404 = vsel %vm734, %v1393, %v1385
        %v1405 = vsel %vm734, %v1395, %v1387
        %v1406 = vsel %vm734, %v1397, %v1389
        %v1407 = vsel %vm734, %v1399, %v1391
        %1408 = vrot.lane.b32.xlu0 %v710, 16
        %v1409 = vpop.permute.xlu0 %1408
        %1410 = vrot.lane.b32.xlu0 %v712, 16
        %v1411 = vpop.permute.xlu0 %1410
        %1412 = vrot.lane.b32.xlu0 %v714, 16
        %v1413 = vpop.permute.xlu0 %1412
        %1414 = vrot.lane.b32.xlu0 %v716, 16
        %v1415 = vpop.permute.xlu0 %1414
        %1416 = vrot.lane.b32.xlu0 %v711, 16
        %v1417 = vpop.permute.xlu0 %1416
        %1418 = vrot.lane.b32.xlu0 %v713, 16
        %v1419 = vpop.permute.xlu0 %1418
        %1420 = vrot.lane.b32.xlu0 %v715, 16
        %v1421 = vpop.permute.xlu0 %1420
        %1422 = vrot.lane.b32.xlu0 %v717, 16
        %v1423 = vpop.permute.xlu0 %1422
        %v1424 = vsel %vm759, %v1409, %v1417
        %v1425 = vsel %vm759, %v1411, %v1419
        %v1426 = vsel %vm759, %v1413, %v1421
        %v1427 = vsel %vm759, %v1415, %v1423
        %v1428 = vsel %vm759, %v1417, %v1409
        %v1429 = vsel %vm759, %v1419, %v1411
        %v1430 = vsel %vm759, %v1421, %v1413
        %v1431 = vsel %vm759, %v1423, %v1415
        %v1432 = vsel %vm784, %v1400, %v1428
        %v1433 = vsel %vm785, %v1404, %v1424
        %v1434 = vsel %vm784, %v1401, %v1429
        %v1435 = vsel %vm785, %v1405, %v1425
        %v1436 = vsel %vm784, %v1402, %v1430
        %v1437 = vsel %vm785, %v1406, %v1426
        %v1438 = vsel %vm784, %v1403, %v1431
        %v1439 = vsel %vm785, %v1407, %v1427
        %v1440 = vsel %vm810, %v1428, %v1400
        %v1441 = vsel %vm811, %v1424, %v1404
        %v1442 = vsel %vm810, %v1429, %v1401
        %v1443 = vsel %vm811, %v1425, %v1405
        %v1444 = vsel %vm810, %v1430, %v1402
        %v1445 = vsel %vm811, %v1426, %v1406
        %v1446 = vsel %vm810, %v1431, %v1403
        %v1447 = vsel %vm811, %v1427, %v1407
        %s1448 = scalar_lea.vmem %s3, 32
        %v1449 = vld [vmem:[%s1448] sm:$0xf]
        %v1450 = vld [vmem:[%s1448 + $0x4] sm:$0xf]
        %v1451 = vld [vmem:[%s1448 + $0x8] sm:$0xf]
        %v1452 = vld [vmem:[%s1448 + $0xc] sm:$0xf]
        %v1453 = vpack.c.bf16 %v1434, %v1432
        %v1454 = vpack.c.bf16 %v1435, %v1433
        %v1455 = vpack.c.bf16 %v1438, %v1436
        %v1456 = vpack.c.bf16 %v1439, %v1437
        %v1461 = vunpack.c.l.b16 %v1449
        %v1462 = vunpack.c.l.b16 %v1450
        %v1463 = vunpack.c.l.b16 %v1451
        %v1464 = vunpack.c.l.b16 %v1452
        %v1465 = vpack.c.b16 %v1462, %v1461
        %v1466 = vpack.c.b16 %v1464, %v1463
        %v1468 = vsel %vm847, %v1465, 0
        %v1471 = vsel %vm847, %v1466, 0
        %1473 = vmatprep.subr.bf16.mxu0 %v1454
        %1474 = vmatpush1.bf16.msra.mxu0 %v1453
        %1475 = vmatprep.subr.bf16.mxu0 %v1456
        %1476 = vmatpush1.bf16.msra.mxu0 %v1455
        %1477 = vmatprep.subr.bf16.mxu0 0
        %1478 = vmatpush1.bf16.msra.mxu0 0
        %1479 = vmatprep.subr.bf16.mxu0 0
        %1480 = vmatpush1.bf16.msra.mxu0 0
        %1481 = vmatprep.subr.bf16.mxu0 0
        %1482 = vmatpush1.bf16.msra.mxu0 0
        %1483 = vmatprep.subr.bf16.mxu0 0
        %1484 = vmatpush1.bf16.msra.mxu0 0
        %1485 = vmatprep.subr.bf16.mxu0 0
        %1486 = vmatpush1.bf16.msra.mxu0 0
        %1487 = vmatprep.subr.bf16.mxu0 0
        %1488 = vmatpush1.bf16.msra.mxu0 0
        %1489 = vmatprep.subr.bf16.mxu0 0
        %1490 = vmatpush1.bf16.msra.mxu0 0
        %1491 = vmatprep.subr.bf16.mxu0 0
        %1492 = vmatpush1.bf16.msra.mxu0 0
        %1493 = vmatprep.subr.bf16.mxu0 0
        %1494 = vmatpush1.bf16.msra.mxu0 0
        %1495 = vmatprep.subr.bf16.mxu0 0
        %1496 = vmatpush1.bf16.msra.mxu0 0
        %1497 = vmatprep.subr.bf16.mxu0 0
        %1498 = vmatpush1.bf16.msra.mxu0 0
        %1499 = vmatprep.subr.bf16.mxu0 0
        %1500 = vmatpush1.bf16.msra.mxu0 0
        %1501 = vmatprep.subr.bf16.mxu0 0
        %1502 = vmatpush1.bf16.msra.mxu0 0
        %1503 = vmatprep.subr.bf16.mxu0 0
        %1504 = vmatpush1.bf16.msra.mxu0 0
        %1505 = vmatprep.mubr.bf16.mxu0 0
        %1506 = vmatmul.mubr.bf16.gmra.mrb[0].mxu0 %v1468
        %v1507 = vpop.f32.mrb[0].mxu0
        %v1508 = vadd.f32 0.0, %v1507
        %v1509 = vpop.f32.mrb[0].mxu0
        %v1510 = vadd.f32 0.0, %v1509
        %v1511 = vpop.f32.mrb[0].mxu0
        %v1512 = vadd.f32 0.0, %v1511
        %v1513 = vpop.f32.mrb[0].mxu0
        %v1514 = vadd.f32 0.0, %v1513
        %1515 = vmatprep.mubr.bf16.mxu0 0
        %1516 = vmatmul.mubr.bf16.gmra.mrb[0].mxu0 %v1471
        %v1517 = vpop.f32.mrb[0].mxu0
        %v1518 = vadd.f32 0.0, %v1517
        %v1519 = vpop.f32.mrb[0].mxu0
        %v1520 = vadd.f32 0.0, %v1519
        %v1521 = vpop.f32.mrb[0].mxu0
        %v1522 = vadd.f32 0.0, %v1521
        %v1523 = vpop.f32.mrb[0].mxu0
        %v1524 = vadd.f32 0.0, %v1523
        %1525 = vdwg.mxu0
        %v1526 = vadd.f32 %v1376, %v1508
        %v1527 = vadd.f32 %v1377, %v1510
        %v1528 = vadd.f32 %v1378, %v1512
        %v1529 = vadd.f32 %v1379, %v1514
        %v1530 = vadd.f32 %v1380, %v1518
        %v1531 = vadd.f32 %v1381, %v1520
        %v1532 = vadd.f32 %v1382, %v1522
        %v1533 = vadd.f32 %v1383, %v1524
        %s1534 = scalar_lea.vmem %s3, 80
        %v1535 = vld [vmem:[%s1534] sm:$0xf]
        %v1536 = vld [vmem:[%s1534 + $0x4] sm:$0xf]
        %v1537 = vld [vmem:[%s1534 + $0x8] sm:$0xf]
        %v1538 = vld [vmem:[%s1534 + $0xc] sm:$0xf]
        %v1539 = vpack.c.bf16 %v712, %v710
        %v1540 = vpack.c.bf16 %v713, %v711
        %v1541 = vpack.c.bf16 %v716, %v714
        %v1542 = vpack.c.bf16 %v717, %v715
        %v1547 = vunpack.c.l.b16 %v1535
        %v1548 = vunpack.c.l.b16 %v1536
        %v1549 = vunpack.c.l.b16 %v1537
        %v1550 = vunpack.c.l.b16 %v1538
        %v1551 = vpack.c.b16 %v1548, %v1547
        %v1552 = vpack.c.b16 %v1550, %v1549
        %v1554 = vsel %vm847, %v1551, 0
        %v1557 = vsel %vm847, %v1552, 0
        %1559 = vmatprep.subr.bf16.mxu0 %v1540
        %1560 = vmatpush1.bf16.msra.mxu0 %v1539
        %1561 = vmatprep.subr.bf16.mxu0 %v1542
        %1562 = vmatpush1.bf16.msra.mxu0 %v1541
        %1563 = vmatprep.subr.bf16.mxu0 0
        %1564 = vmatpush1.bf16.msra.mxu0 0
        %1565 = vmatprep.subr.bf16.mxu0 0
        %1566 = vmatpush1.bf16.msra.mxu0 0
        %1567 = vmatprep.subr.bf16.mxu0 0
        %1568 = vmatpush1.bf16.msra.mxu0 0
        %1569 = vmatprep.subr.bf16.mxu0 0
        %1570 = vmatpush1.bf16.msra.mxu0 0
        %1571 = vmatprep.subr.bf16.mxu0 0
        %1572 = vmatpush1.bf16.msra.mxu0 0
        %1573 = vmatprep.subr.bf16.mxu0 0
        %1574 = vmatpush1.bf16.msra.mxu0 0
        %1575 = vmatprep.subr.bf16.mxu0 0
        %1576 = vmatpush1.bf16.msra.mxu0 0
        %1577 = vmatprep.subr.bf16.mxu0 0
        %1578 = vmatpush1.bf16.msra.mxu0 0
        %1579 = vmatprep.subr.bf16.mxu0 0
        %1580 = vmatpush1.bf16.msra.mxu0 0
        %1581 = vmatprep.subr.bf16.mxu0 0
        %1582 = vmatpush1.bf16.msra.mxu0 0
        %1583 = vmatprep.subr.bf16.mxu0 0
        %1584 = vmatpush1.bf16.msra.mxu0 0
        %1585 = vmatprep.subr.bf16.mxu0 0
        %1586 = vmatpush1.bf16.msra.mxu0 0
        %1587 = vmatprep.subr.bf16.mxu0 0
        %1588 = vmatpush1.bf16.msra.mxu0 0
        %1589 = vmatprep.subr.bf16.mxu0 0
        %1590 = vmatpush1.bf16.msra.mxu0 0
        %1591 = vmatprep.mubr.bf16.mxu0 0
        %1592 = vmatmul.mubr.bf16.gmra.mrb[0].mxu0 %v1554
        %v1593 = vpop.f32.mrb[0].mxu0
        %v1594 = vadd.f32 0.0, %v1593
        %v1595 = vpop.f32.mrb[0].mxu0
        %v1596 = vadd.f32 0.0, %v1595
        %v1597 = vpop.f32.mrb[0].mxu0
        %v1598 = vadd.f32 0.0, %v1597
        %v1599 = vpop.f32.mrb[0].mxu0
        %v1600 = vadd.f32 0.0, %v1599
        %1601 = vmatprep.mubr.bf16.mxu0 0
        %1602 = vmatmul.mubr.bf16.gmra.mrb[0].mxu0 %v1557
        %v1603 = vpop.f32.mrb[0].mxu0
        %v1604 = vadd.f32 0.0, %v1603
        %v1605 = vpop.f32.mrb[0].mxu0
        %v1606 = vadd.f32 0.0, %v1605
        %v1607 = vpop.f32.mrb[0].mxu0
        %v1608 = vadd.f32 0.0, %v1607
        %v1609 = vpop.f32.mrb[0].mxu0
        %v1610 = vadd.f32 0.0, %v1609
        %1611 = vdwg.mxu0
        %v1612 = vadd.f32 %v1526, %v1594
        %v1613 = vadd.f32 %v1527, %v1596
        %v1614 = vadd.f32 %v1528, %v1598
        %v1615 = vadd.f32 %v1529, %v1600
        %v1616 = vadd.f32 %v1530, %v1604
        %v1617 = vadd.f32 %v1531, %v1606
        %v1618 = vadd.f32 %v1532, %v1608
        %v1619 = vadd.f32 %v1533, %v1610
        %s1620 = scalar_lea.vmem %s3, 128
        %v1621 = vld [vmem:[%s1620] sm:$0xf]
        %v1622 = vld [vmem:[%s1620 + $0x4] sm:$0xf]
        %v1623 = vld [vmem:[%s1620 + $0x8] sm:$0xf]
        %v1624 = vld [vmem:[%s1620 + $0xc] sm:$0xf]
        %v1625 = vpack.c.bf16 %v1442, %v1440
        %v1626 = vpack.c.bf16 %v1443, %v1441
        %v1627 = vpack.c.bf16 %v1446, %v1444
        %v1628 = vpack.c.bf16 %v1447, %v1445
        %v1633 = vunpack.c.l.b16 %v1621
        %v1634 = vunpack.c.l.b16 %v1622
        %v1635 = vunpack.c.l.b16 %v1623
        %v1636 = vunpack.c.l.b16 %v1624
        %v1637 = vpack.c.b16 %v1634, %v1633
        %v1638 = vpack.c.b16 %v1636, %v1635
        %v1640 = vsel %vm847, %v1637, 0
        %v1643 = vsel %vm847, %v1638, 0
        %1645 = vmatprep.subr.bf16.mxu0 %v1626
        %1646 = vmatpush1.bf16.msra.mxu0 %v1625
        %1647 = vmatprep.subr.bf16.mxu0 %v1628
        %1648 = vmatpush1.bf16.msra.mxu0 %v1627
        %1649 = vmatprep.subr.bf16.mxu0 0
        %1650 = vmatpush1.bf16.msra.mxu0 0
        %1651 = vmatprep.subr.bf16.mxu0 0
        %1652 = vmatpush1.bf16.msra.mxu0 0
        %1653 = vmatprep.subr.bf16.mxu0 0
        %1654 = vmatpush1.bf16.msra.mxu0 0
        %1655 = vmatprep.subr.bf16.mxu0 0
        %1656 = vmatpush1.bf16.msra.mxu0 0
        %1657 = vmatprep.subr.bf16.mxu0 0
        %1658 = vmatpush1.bf16.msra.mxu0 0
        %1659 = vmatprep.subr.bf16.mxu0 0
        %1660 = vmatpush1.bf16.msra.mxu0 0
        %1661 = vmatprep.subr.bf16.mxu0 0
        %1662 = vmatpush1.bf16.msra.mxu0 0
        %1663 = vmatprep.subr.bf16.mxu0 0
        %1664 = vmatpush1.bf16.msra.mxu0 0
        %1665 = vmatprep.subr.bf16.mxu0 0
        %1666 = vmatpush1.bf16.msra.mxu0 0
        %1667 = vmatprep.subr.bf16.mxu0 0
        %1668 = vmatpush1.bf16.msra.mxu0 0
        %1669 = vmatprep.subr.bf16.mxu0 0
        %1670 = vmatpush1.bf16.msra.mxu0 0
        %1671 = vmatprep.subr.bf16.mxu0 0
        %1672 = vmatpush1.bf16.msra.mxu0 0
        %1673 = vmatprep.subr.bf16.mxu0 0
        %1674 = vmatpush1.bf16.msra.mxu0 0
        %1675 = vmatprep.subr.bf16.mxu0 0
        %1676 = vmatpush1.bf16.msra.mxu0 0
        %1677 = vmatprep.mubr.bf16.mxu0 0
        %1678 = vmatmul.mubr.bf16.gmra.mrb[0].mxu0 %v1640
        %v1679 = vpop.f32.mrb[0].mxu0
        %v1680 = vadd.f32 0.0, %v1679
        %v1681 = vpop.f32.mrb[0].mxu0
        %v1682 = vadd.f32 0.0, %v1681
        %v1683 = vpop.f32.mrb[0].mxu0
        %v1684 = vadd.f32 0.0, %v1683
        %v1685 = vpop.f32.mrb[0].mxu0
        %v1686 = vadd.f32 0.0, %v1685
        %1687 = vmatprep.mubr.bf16.mxu0 0
        %1688 = vmatmul.mubr.bf16.gmra.mrb[0].mxu0 %v1643
        %v1689 = vpop.f32.mrb[0].mxu0
        %v1690 = vadd.f32 0.0, %v1689
        %v1691 = vpop.f32.mrb[0].mxu0
        %v1692 = vadd.f32 0.0, %v1691
        %v1693 = vpop.f32.mrb[0].mxu0
        %v1694 = vadd.f32 0.0, %v1693
        %v1695 = vpop.f32.mrb[0].mxu0
        %v1696 = vadd.f32 0.0, %v1695
        %1697 = vdwg.mxu0
        %v1698 = vadd.f32 %v1612, %v1680
        %v1699 = vadd.f32 %v1613, %v1682
        %v1700 = vadd.f32 %v1614, %v1684
        %v1701 = vadd.f32 %v1615, %v1686
        %v1702 = vadd.f32 %v1616, %v1690
        %v1703 = vadd.f32 %v1617, %v1692
        %v1704 = vadd.f32 %v1618, %v1694
        %v1705 = vadd.f32 %v1619, %v1696
        %v1706 = vld [vmem:[%s4] sm:$0xff]
        %v1707 = vld [vmem:[%s4 + $0x8] sm:$0xff]
        %v1708 = vld [vmem:[%s4 + $0x10] sm:$0xff]
        %v1709 = vld [vmem:[%s4 + $0x18] sm:$0xff]
        %1711 = vset.pattern.permute.xlu0 0
        %1712 = vperm.xlu0 %1711, %v1706
        %v1713 = vpop.permute.xlu0 %1712
        %1716 = vset.pattern.permute.xlu0 0
        %1717 = vperm.xlu0 %1716, %v1707
        %v1718 = vpop.permute.xlu0 %1717
        %1721 = vset.pattern.permute.xlu0 0
        %1722 = vperm.xlu0 %1721, %v1708
        %v1723 = vpop.permute.xlu0 %1722
        %1726 = vset.pattern.permute.xlu0 0
        %1727 = vperm.xlu0 %1726, %v1709
        %v1728 = vpop.permute.xlu0 %1727
        %v1730 = vadd.f32 %v1698, %v1713
        %v1731 = vadd.f32 %v1699, %v1713
        %v1732 = vadd.f32 %v1700, %v1718
        %v1733 = vadd.f32 %v1701, %v1718
        %v1734 = vadd.f32 %v1702, %v1723
        %v1735 = vadd.f32 %v1703, %v1723
        %v1736 = vadd.f32 %v1704, %v1728
        %v1737 = vadd.f32 %v1705, %v1728
        %v1738 = vmax.f32 %v1730, 0.0
        %v1739 = vmax.f32 %v1731, 0.0
        %v1740 = vmax.f32 %v1732, 0.0
        %v1741 = vmax.f32 %v1733, 0.0
        %v1742 = vmax.f32 %v1734, 0.0
        %v1743 = vmax.f32 %v1735, 0.0
        %v1744 = vmax.f32 %v1736, 0.0
        %v1745 = vmax.f32 %v1737, 0.0
        %1746 = vrot.lane.b32.xlu0 %v1738, 127
        %v1747 = vpop.permute.xlu0 %1746
        %1748 = vrot.lane.b32.xlu0 %v1740, 127
        %v1749 = vpop.permute.xlu0 %1748
        %1750 = vrot.lane.b32.xlu0 %v1742, 127
        %v1751 = vpop.permute.xlu0 %1750
        %1752 = vrot.lane.b32.xlu0 %v1744, 127
        %v1753 = vpop.permute.xlu0 %1752
        %1754 = vrot.lane.b32.xlu0 %v1739, 127
        %v1755 = vpop.permute.xlu0 %1754
        %1756 = vrot.lane.b32.xlu0 %v1741, 127
        %v1757 = vpop.permute.xlu0 %1756
        %1758 = vrot.lane.b32.xlu0 %v1743, 127
        %v1759 = vpop.permute.xlu0 %1758
        %1760 = vrot.lane.b32.xlu0 %v1745, 127
        %v1761 = vpop.permute.xlu0 %1760
        %v1762 = vsel %vm631, %v1747, %v1755
        %v1763 = vsel %vm631, %v1749, %v1757
        %v1764 = vsel %vm631, %v1751, %v1759
        %v1765 = vsel %vm631, %v1753, %v1761
        %v1766 = vsel %vm631, %v1755, %v1747
        %v1767 = vsel %vm631, %v1757, %v1749
        %v1768 = vsel %vm631, %v1759, %v1751
        %v1769 = vsel %vm631, %v1761, %v1753
        %1770 = vrot.lane.b32.xlu0 %v1738, 1
        %v1771 = vpop.permute.xlu0 %1770
        %1772 = vrot.lane.b32.xlu0 %v1740, 1
        %v1773 = vpop.permute.xlu0 %1772
        %1774 = vrot.lane.b32.xlu0 %v1742, 1
        %v1775 = vpop.permute.xlu0 %1774
        %1776 = vrot.lane.b32.xlu0 %v1744, 1
        %v1777 = vpop.permute.xlu0 %1776
        %1778 = vrot.lane.b32.xlu0 %v1739, 1
        %v1779 = vpop.permute.xlu0 %1778
        %1780 = vrot.lane.b32.xlu0 %v1741, 1
        %v1781 = vpop.permute.xlu0 %1780
        %1782 = vrot.lane.b32.xlu0 %v1743, 1
        %v1783 = vpop.permute.xlu0 %1782
        %1784 = vrot.lane.b32.xlu0 %v1745, 1
        %v1785 = vpop.permute.xlu0 %1784
        %v1786 = vsel %vm656, %v1771, %v1779
        %v1787 = vsel %vm656, %v1773, %v1781
        %v1788 = vsel %vm656, %v1775, %v1783
        %v1789 = vsel %vm656, %v1777, %v1785
        %v1790 = vsel %vm656, %v1779, %v1771
        %v1791 = vsel %vm656, %v1781, %v1773
        %v1792 = vsel %vm656, %v1783, %v1775
        %v1793 = vsel %vm656, %v1785, %v1777
        %v1794 = vsel %vm682, %v1762, %v1790
        %v1795 = vsel %vm683, %v1766, %v1786
        %v1796 = vsel %vm682, %v1763, %v1791
        %v1797 = vsel %vm683, %v1767, %v1787
        %v1798 = vsel %vm682, %v1764, %v1792
        %v1799 = vsel %vm683, %v1768, %v1788
        %v1800 = vsel %vm682, %v1765, %v1793
        %v1801 = vsel %vm683, %v1769, %v1789
        %v1802 = vsel %vm708, %v1790, %v1762
        %v1803 = vsel %vm709, %v1786, %v1766
        %v1804 = vsel %vm708, %v1791, %v1763
        %v1805 = vsel %vm709, %v1787, %v1767
        %v1806 = vsel %vm708, %v1792, %v1764
        %v1807 = vsel %vm709, %v1788, %v1768
        %v1808 = vsel %vm708, %v1793, %v1765
        %v1809 = vsel %vm709, %v1789, %v1769
        %1810 = vrot.lane.b32.xlu0 %v1794, 112
        %v1811 = vpop.permute.xlu0 %1810
        %1812 = vrot.lane.b32.xlu0 %v1796, 112
        %v1813 = vpop.permute.xlu0 %1812
        %1814 = vrot.lane.b32.xlu0 %v1798, 112
        %v1815 = vpop.permute.xlu0 %1814
        %1816 = vrot.lane.b32.xlu0 %v1800, 112
        %v1817 = vpop.permute.xlu0 %1816
        %1818 = vrot.lane.b32.xlu0 %v1795, 112
        %v1819 = vpop.permute.xlu0 %1818
        %1820 = vrot.lane.b32.xlu0 %v1797, 112
        %v1821 = vpop.permute.xlu0 %1820
        %1822 = vrot.lane.b32.xlu0 %v1799, 112
        %v1823 = vpop.permute.xlu0 %1822
        %1824 = vrot.lane.b32.xlu0 %v1801, 112
        %v1825 = vpop.permute.xlu0 %1824
        %v1826 = vsel %vm734, %v1811, %v1819
        %v1827 = vsel %vm734, %v1813, %v1821
        %v1828 = vsel %vm734, %v1815, %v1823
        %v1829 = vsel %vm734, %v1817, %v1825
        %v1830 = vsel %vm734, %v1819, %v1811
        %v1831 = vsel %vm734, %v1821, %v1813
        %v1832 = vsel %vm734, %v1823, %v1815
        %v1833 = vsel %vm734, %v1825, %v1817
        %1834 = vrot.lane.b32.xlu0 %v1794, 16
        %v1835 = vpop.permute.xlu0 %1834
        %1836 = vrot.lane.b32.xlu0 %v1796, 16
        %v1837 = vpop.permute.xlu0 %1836
        %1838 = vrot.lane.b32.xlu0 %v1798, 16
        %v1839 = vpop.permute.xlu0 %1838
        %1840 = vrot.lane.b32.xlu0 %v1800, 16
        %v1841 = vpop.permute.xlu0 %1840
        %1842 = vrot.lane.b32.xlu0 %v1795, 16
        %v1843 = vpop.permute.xlu0 %1842
        %1844 = vrot.lane.b32.xlu0 %v1797, 16
        %v1845 = vpop.permute.xlu0 %1844
        %1846 = vrot.lane.b32.xlu0 %v1799, 16
        %v1847 = vpop.permute.xlu0 %1846
        %1848 = vrot.lane.b32.xlu0 %v1801, 16
        %v1849 = vpop.permute.xlu0 %1848
        %v1850 = vsel %vm759, %v1835, %v1843
        %v1851 = vsel %vm759, %v1837, %v1845
        %v1852 = vsel %vm759, %v1839, %v1847
        %v1853 = vsel %vm759, %v1841, %v1849
        %v1854 = vsel %vm759, %v1843, %v1835
        %v1855 = vsel %vm759, %v1845, %v1837
        %v1856 = vsel %vm759, %v1847, %v1839
        %v1857 = vsel %vm759, %v1849, %v1841
        %v1858 = vsel %vm784, %v1826, %v1854
        %v1859 = vsel %vm785, %v1830, %v1850
        %v1860 = vsel %vm784, %v1827, %v1855
        %v1861 = vsel %vm785, %v1831, %v1851
        %v1862 = vsel %vm784, %v1828, %v1856
        %v1863 = vsel %vm785, %v1832, %v1852
        %v1864 = vsel %vm784, %v1829, %v1857
        %v1865 = vsel %vm785, %v1833, %v1853
        %v1866 = vsel %vm810, %v1854, %v1826
        %v1867 = vsel %vm811, %v1850, %v1830
        %v1868 = vsel %vm810, %v1855, %v1827
        %v1869 = vsel %vm811, %v1851, %v1831
        %v1870 = vsel %vm810, %v1856, %v1828
        %v1871 = vsel %vm811, %v1852, %v1832
        %v1872 = vsel %vm810, %v1857, %v1829
        %v1873 = vsel %vm811, %v1853, %v1833
        %v1874 = vld [vmem:[#allocation8] sm:$0xf]
        %v1875 = vld [vmem:[#allocation8 + $0x4] sm:$0xf]
        %v1876 = vld [vmem:[#allocation8 + $0x8] sm:$0xf]
        %v1877 = vld [vmem:[#allocation8 + $0xc] sm:$0xf]
        %v1878 = vpack.c.bf16 %v1860, %v1858
        %v1879 = vpack.c.bf16 %v1861, %v1859
        %v1880 = vpack.c.bf16 %v1864, %v1862
        %v1881 = vpack.c.bf16 %v1865, %v1863
        %s1882 = scalar_lea.vmem [#allocation8], 48
        %v1883 = vld [vmem:[%s1882] sm:$0xf]
        %v1884 = vld [vmem:[%s1882 + $0x4] sm:$0xf]
        %v1885 = vld [vmem:[%s1882 + $0x8] sm:$0xf]
        %v1886 = vld [vmem:[%s1882 + $0xc] sm:$0xf]
        %v1887 = vpack.c.bf16 %v1796, %v1794
        %v1888 = vpack.c.bf16 %v1797, %v1795
        %v1889 = vpack.c.bf16 %v1800, %v1798
        %v1890 = vpack.c.bf16 %v1801, %v1799
        %v1895 = vunpack.c.l.b16 %v1883
        %v1896 = vunpack.c.l.b16 %v1884
        %v1897 = vunpack.c.l.b16 %v1885
        %v1898 = vunpack.c.l.b16 %v1886
        %v1899 = vpack.c.b16 %v1896, %v1895
        %v1900 = vpack.c.b16 %v1898, %v1897
        %v1902 = vsel %vm847, %v1899, 0
        %v1905 = vsel %vm847, %v1900, 0
        %1907 = vmatprep.subr.bf16.mxu0 %v1888
        %1908 = vmatpush1.bf16.msra.mxu0 %v1887
        %1909 = vmatprep.subr.bf16.mxu0 %v1890
        %1910 = vmatpush1.bf16.msra.mxu0 %v1889
        %1911 = vmatprep.subr.bf16.mxu0 0
        %1912 = vmatpush1.bf16.msra.mxu0 0
        %1913 = vmatprep.subr.bf16.mxu0 0
        %1914 = vmatpush1.bf16.msra.mxu0 0
        %1915 = vmatprep.subr.bf16.mxu0 0
        %1916 = vmatpush1.bf16.msra.mxu0 0
        %1917 = vmatprep.subr.bf16.mxu0 0
        %1918 = vmatpush1.bf16.msra.mxu0 0
        %1919 = vmatprep.subr.bf16.mxu0 0
        %1920 = vmatpush1.bf16.msra.mxu0 0
        %1921 = vmatprep.subr.bf16.mxu0 0
        %1922 = vmatpush1.bf16.msra.mxu0 0
        %1923 = vmatprep.subr.bf16.mxu0 0
        %1924 = vmatpush1.bf16.msra.mxu0 0
        %1925 = vmatprep.subr.bf16.mxu0 0
        %1926 = vmatpush1.bf16.msra.mxu0 0
        %1927 = vmatprep.subr.bf16.mxu0 0
        %1928 = vmatpush1.bf16.msra.mxu0 0
        %1929 = vmatprep.subr.bf16.mxu0 0
        %1930 = vmatpush1.bf16.msra.mxu0 0
        %1931 = vmatprep.subr.bf16.mxu0 0
        %1932 = vmatpush1.bf16.msra.mxu0 0
        %1933 = vmatprep.subr.bf16.mxu0 0
        %1934 = vmatpush1.bf16.msra.mxu0 0
        %1935 = vmatprep.subr.bf16.mxu0 0
        %1936 = vmatpush1.bf16.msra.mxu0 0
        %1937 = vmatprep.subr.bf16.mxu0 0
        %1938 = vmatpush1.bf16.msra.mxu0 0
        %1939 = vmatprep.mubr.bf16.mxu0 0
        %1940 = vmatmul.mubr.bf16.gmra.mrb[0].mxu0 %v1902
        %v1941 = vpop.f32.mrb[0].mxu0
        %v1942 = vadd.f32 0.0, %v1941
        %v1943 = vpop.f32.mrb[0].mxu0
        %v1944 = vadd.f32 0.0, %v1943
        %v1945 = vpop.f32.mrb[0].mxu0
        %v1946 = vadd.f32 0.0, %v1945
        %v1947 = vpop.f32.mrb[0].mxu0
        %v1948 = vadd.f32 0.0, %v1947
        %1949 = vmatprep.mubr.bf16.mxu0 0
        %1950 = vmatmul.mubr.bf16.gmra.mrb[0].mxu0 %v1905
        %v1951 = vpop.f32.mrb[0].mxu0
        %v1952 = vadd.f32 0.0, %v1951
        %v1953 = vpop.f32.mrb[0].mxu0
        %v1954 = vadd.f32 0.0, %v1953
        %v1955 = vpop.f32.mrb[0].mxu0
        %v1956 = vadd.f32 0.0, %v1955
        %v1957 = vpop.f32.mrb[0].mxu0
        %v1958 = vadd.f32 0.0, %v1957
        %1959 = vdwg.mxu0
        %v1964 = vunpack.c.l.b16 %v1874
        %v1965 = vunpack.c.l.b16 %v1875
        %v1966 = vunpack.c.l.b16 %v1876
        %v1967 = vunpack.c.l.b16 %v1877
        %v1968 = vpack.c.b16 %v1965, %v1964
        %v1969 = vpack.c.b16 %v1967, %v1966
        %v1971 = vsel %vm847, %v1968, 0
        %v1974 = vsel %vm847, %v1969, 0
        %1976 = vmatprep.subr.bf16.mxu0 %v1879
        %1977 = vmatpush1.bf16.msra.mxu0 %v1878
        %1978 = vmatprep.subr.bf16.mxu0 %v1881
        %1979 = vmatpush1.bf16.msra.mxu0 %v1880
        %1980 = vmatprep.subr.bf16.mxu0 0
        %1981 = vmatpush1.bf16.msra.mxu0 0
        %1982 = vmatprep.subr.bf16.mxu0 0
        %1983 = vmatpush1.bf16.msra.mxu0 0
        %1984 = vmatprep.subr.bf16.mxu0 0
        %1985 = vmatpush1.bf16.msra.mxu0 0
        %1986 = vmatprep.subr.bf16.mxu0 0
        %1987 = vmatpush1.bf16.msra.mxu0 0
        %1988 = vmatprep.subr.bf16.mxu0 0
        %1989 = vmatpush1.bf16.msra.mxu0 0
        %1990 = vmatprep.subr.bf16.mxu0 0
        %1991 = vmatpush1.bf16.msra.mxu0 0
        %1992 = vmatprep.subr.bf16.mxu0 0
        %1993 = vmatpush1.bf16.msra.mxu0 0
        %1994 = vmatprep.subr.bf16.mxu0 0
        %1995 = vmatpush1.bf16.msra.mxu0 0
        %1996 = vmatprep.subr.bf16.mxu0 0
        %1997 = vmatpush1.bf16.msra.mxu0 0
        %1998 = vmatprep.subr.bf16.mxu0 0
        %1999 = vmatpush1.bf16.msra.mxu0 0
        %2000 = vmatprep.subr.bf16.mxu0 0
        %2001 = vmatpush1.bf16.msra.mxu0 0
        %2002 = vmatprep.subr.bf16.mxu0 0
        %2003 = vmatpush1.bf16.msra.mxu0 0
        %2004 = vmatprep.subr.bf16.mxu0 0
        %2005 = vmatpush1.bf16.msra.mxu0 0
        %2006 = vmatprep.subr.bf16.mxu0 0
        %2007 = vmatpush1.bf16.msra.mxu0 0
        %2008 = vmatprep.mubr.bf16.mxu0 0
        %2009 = vmatmul.mubr.bf16.gmra.mrb[0].mxu0 %v1971
        %v2010 = vpop.f32.mrb[0].mxu0
        %v2011 = vadd.f32 %v1942, %v2010
        %v2012 = vpop.f32.mrb[0].mxu0
        %v2013 = vadd.f32 %v1944, %v2012
        %v2014 = vpop.f32.mrb[0].mxu0
        %v2015 = vadd.f32 %v1946, %v2014
        %v2016 = vpop.f32.mrb[0].mxu0
        %v2017 = vadd.f32 %v1948, %v2016
        %2018 = vmatprep.mubr.bf16.mxu0 0
        %2019 = vmatmul.mubr.bf16.gmra.mrb[0].mxu0 %v1974
        %v2020 = vpop.f32.mrb[0].mxu0
        %v2021 = vadd.f32 %v1952, %v2020
        %v2022 = vpop.f32.mrb[0].mxu0
        %v2023 = vadd.f32 %v1954, %v2022
        %v2024 = vpop.f32.mrb[0].mxu0
        %v2025 = vadd.f32 %v1956, %v2024
        %v2026 = vpop.f32.mrb[0].mxu0
        %v2027 = vadd.f32 %v1958, %v2026
        %2028 = vdwg.mxu0
        %s2029 = scalar_lea.vmem [#allocation8], 96
        %v2030 = vld [vmem:[%s2029] sm:$0xf]
        %v2031 = vld [vmem:[%s2029 + $0x4] sm:$0xf]
        %v2032 = vld [vmem:[%s2029 + $0x8] sm:$0xf]
        %v2033 = vld [vmem:[%s2029 + $0xc] sm:$0xf]
        %v2034 = vpack.c.bf16 %v1868, %v1866
        %v2035 = vpack.c.bf16 %v1869, %v1867
        %v2036 = vpack.c.bf16 %v1872, %v1870
        %v2037 = vpack.c.bf16 %v1873, %v1871
        %v2042 = vunpack.c.l.b16 %v2030
        %v2043 = vunpack.c.l.b16 %v2031
        %v2044 = vunpack.c.l.b16 %v2032
        %v2045 = vunpack.c.l.b16 %v2033
        %v2046 = vpack.c.b16 %v2043, %v2042
        %v2047 = vpack.c.b16 %v2045, %v2044
        %v2049 = vsel %vm847, %v2046, 0
        %v2052 = vsel %vm847, %v2047, 0
        %2054 = vmatprep.subr.bf16.mxu0 %v2035
        %2055 = vmatpush1.bf16.msra.mxu0 %v2034
        %2056 = vmatprep.subr.bf16.mxu0 %v2037
        %2057 = vmatpush1.bf16.msra.mxu0 %v2036
        %2058 = vmatprep.subr.bf16.mxu0 0
        %2059 = vmatpush1.bf16.msra.mxu0 0
        %2060 = vmatprep.subr.bf16.mxu0 0
        %2061 = vmatpush1.bf16.msra.mxu0 0
        %2062 = vmatprep.subr.bf16.mxu0 0
        %2063 = vmatpush1.bf16.msra.mxu0 0
        %2064 = vmatprep.subr.bf16.mxu0 0
        %2065 = vmatpush1.bf16.msra.mxu0 0
        %2066 = vmatprep.subr.bf16.mxu0 0
        %2067 = vmatpush1.bf16.msra.mxu0 0
        %2068 = vmatprep.subr.bf16.mxu0 0
        %2069 = vmatpush1.bf16.msra.mxu0 0
        %2070 = vmatprep.subr.bf16.mxu0 0
        %2071 = vmatpush1.bf16.msra.mxu0 0
        %2072 = vmatprep.subr.bf16.mxu0 0
        %2073 = vmatpush1.bf16.msra.mxu0 0
        %2074 = vmatprep.subr.bf16.mxu0 0
        %2075 = vmatpush1.bf16.msra.mxu0 0
        %2076 = vmatprep.subr.bf16.mxu0 0
        %2077 = vmatpush1.bf16.msra.mxu0 0
        %2078 = vmatprep.subr.bf16.mxu0 0
        %2079 = vmatpush1.bf16.msra.mxu0 0
        %2080 = vmatprep.subr.bf16.mxu0 0
        %2081 = vmatpush1.bf16.msra.mxu0 0
        %2082 = vmatprep.subr.bf16.mxu0 0
        %2083 = vmatpush1.bf16.msra.mxu0 0
        %2084 = vmatprep.subr.bf16.mxu0 0
        %2085 = vmatpush1.bf16.msra.mxu0 0
        %2086 = vmatprep.mubr.bf16.mxu0 0
        %2087 = vmatmul.mubr.bf16.gmra.mrb[0].mxu0 %v2049
        %v2088 = vpop.f32.mrb[0].mxu0
        %v2089 = vadd.f32 0.0, %v2088
        %v2090 = vpop.f32.mrb[0].mxu0
        %v2091 = vadd.f32 0.0, %v2090
        %v2092 = vpop.f32.mrb[0].mxu0
        %v2093 = vadd.f32 0.0, %v2092
        %v2094 = vpop.f32.mrb[0].mxu0
        %v2095 = vadd.f32 0.0, %v2094
        %2096 = vmatprep.mubr.bf16.mxu0 0
        %2097 = vmatmul.mubr.bf16.gmra.mrb[0].mxu0 %v2052
        %v2098 = vpop.f32.mrb[0].mxu0
        %v2099 = vadd.f32 0.0, %v2098
        %v2100 = vpop.f32.mrb[0].mxu0
        %v2101 = vadd.f32 0.0, %v2100
        %v2102 = vpop.f32.mrb[0].mxu0
        %v2103 = vadd.f32 0.0, %v2102
        %v2104 = vpop.f32.mrb[0].mxu0
        %v2105 = vadd.f32 0.0, %v2104
        %2106 = vdwg.mxu0
        %v2107 = vadd.f32 %v2011, %v2089
        %v2108 = vadd.f32 %v2013, %v2091
        %v2109 = vadd.f32 %v2015, %v2093
        %v2110 = vadd.f32 %v2017, %v2095
        %v2111 = vadd.f32 %v2021, %v2099
        %v2112 = vadd.f32 %v2023, %v2101
        %v2113 = vadd.f32 %v2025, %v2103
        %v2114 = vadd.f32 %v2027, %v2105
        %2115 = vrot.lane.b32.xlu0 %v1738, 112
        %v2116 = vpop.permute.xlu0 %2115
        %2117 = vrot.lane.b32.xlu0 %v1740, 112
        %v2118 = vpop.permute.xlu0 %2117
        %2119 = vrot.lane.b32.xlu0 %v1742, 112
        %v2120 = vpop.permute.xlu0 %2119
        %2121 = vrot.lane.b32.xlu0 %v1744, 112
        %v2122 = vpop.permute.xlu0 %2121
        %2123 = vrot.lane.b32.xlu0 %v1739, 112
        %v2124 = vpop.permute.xlu0 %2123
        %2125 = vrot.lane.b32.xlu0 %v1741, 112
        %v2126 = vpop.permute.xlu0 %2125
        %2127 = vrot.lane.b32.xlu0 %v1743, 112
        %v2128 = vpop.permute.xlu0 %2127
        %2129 = vrot.lane.b32.xlu0 %v1745, 112
        %v2130 = vpop.permute.xlu0 %2129
        %v2131 = vsel %vm734, %v2116, %v2124
        %v2132 = vsel %vm734, %v2118, %v2126
        %v2133 = vsel %vm734, %v2120, %v2128
        %v2134 = vsel %vm734, %v2122, %v2130
        %v2135 = vsel %vm734, %v2124, %v2116
        %v2136 = vsel %vm734, %v2126, %v2118
        %v2137 = vsel %vm734, %v2128, %v2120
        %v2138 = vsel %vm734, %v2130, %v2122
        %2139 = vrot.lane.b32.xlu0 %v1738, 16
        %v2140 = vpop.permute.xlu0 %2139
        %2141 = vrot.lane.b32.xlu0 %v1740, 16
        %v2142 = vpop.permute.xlu0 %2141
        %2143 = vrot.lane.b32.xlu0 %v1742, 16
        %v2144 = vpop.permute.xlu0 %2143
        %2145 = vrot.lane.b32.xlu0 %v1744, 16
        %v2146 = vpop.permute.xlu0 %2145
        %2147 = vrot.lane.b32.xlu0 %v1739, 16
        %v2148 = vpop.permute.xlu0 %2147
        %2149 = vrot.lane.b32.xlu0 %v1741, 16
        %v2150 = vpop.permute.xlu0 %2149
        %2151 = vrot.lane.b32.xlu0 %v1743, 16
        %v2152 = vpop.permute.xlu0 %2151
        %2153 = vrot.lane.b32.xlu0 %v1745, 16
        %v2154 = vpop.permute.xlu0 %2153
        %v2155 = vsel %vm759, %v2140, %v2148
        %v2156 = vsel %vm759, %v2142, %v2150
        %v2157 = vsel %vm759, %v2144, %v2152
        %v2158 = vsel %vm759, %v2146, %v2154
        %v2159 = vsel %vm759, %v2148, %v2140
        %v2160 = vsel %vm759, %v2150, %v2142
        %v2161 = vsel %vm759, %v2152, %v2144
        %v2162 = vsel %vm759, %v2154, %v2146
        %v2163 = vsel %vm784, %v2131, %v2159
        %v2164 = vsel %vm785, %v2135, %v2155
        %v2165 = vsel %vm784, %v2132, %v2160
        %v2166 = vsel %vm785, %v2136, %v2156
        %v2167 = vsel %vm784, %v2133, %v2161
        %v2168 = vsel %vm785, %v2137, %v2157
        %v2169 = vsel %vm784, %v2134, %v2162
        %v2170 = vsel %vm785, %v2138, %v2158
        %v2171 = vsel %vm810, %v2159, %v2131
        %v2172 = vsel %vm811, %v2155, %v2135
        %v2173 = vsel %vm810, %v2160, %v2132
        %v2174 = vsel %vm811, %v2156, %v2136
        %v2175 = vsel %vm810, %v2161, %v2133
        %v2176 = vsel %vm811, %v2157, %v2137
        %v2177 = vsel %vm810, %v2162, %v2134
        %v2178 = vsel %vm811, %v2158, %v2138
        %s2179 = scalar_lea.vmem [#allocation8], 16
        %v2180 = vld [vmem:[%s2179] sm:$0xf]
        %v2181 = vld [vmem:[%s2179 + $0x4] sm:$0xf]
        %v2182 = vld [vmem:[%s2179 + $0x8] sm:$0xf]
        %v2183 = vld [vmem:[%s2179 + $0xc] sm:$0xf]
        %v2184 = vpack.c.bf16 %v2165, %v2163
        %v2185 = vpack.c.bf16 %v2166, %v2164
        %v2186 = vpack.c.bf16 %v2169, %v2167
        %v2187 = vpack.c.bf16 %v2170, %v2168
        %v2192 = vunpack.c.l.b16 %v2180
        %v2193 = vunpack.c.l.b16 %v2181
        %v2194 = vunpack.c.l.b16 %v2182
        %v2195 = vunpack.c.l.b16 %v2183
        %v2196 = vpack.c.b16 %v2193, %v2192
        %v2197 = vpack.c.b16 %v2195, %v2194
        %v2199 = vsel %vm847, %v2196, 0
        %v2202 = vsel %vm847, %v2197, 0
        %2204 = vmatprep.subr.bf16.mxu0 %v2185
        %2205 = vmatpush1.bf16.msra.mxu0 %v2184
        %2206 = vmatprep.subr.bf16.mxu0 %v2187
        %2207 = vmatpush1.bf16.msra.mxu0 %v2186
        %2208 = vmatprep.subr.bf16.mxu0 0
        %2209 = vmatpush1.bf16.msra.mxu0 0
        %2210 = vmatprep.subr.bf16.mxu0 0
        %2211 = vmatpush1.bf16.msra.mxu0 0
        %2212 = vmatprep.subr.bf16.mxu0 0
        %2213 = vmatpush1.bf16.msra.mxu0 0
        %2214 = vmatprep.subr.bf16.mxu0 0
        %2215 = vmatpush1.bf16.msra.mxu0 0
        %2216 = vmatprep.subr.bf16.mxu0 0
        %2217 = vmatpush1.bf16.msra.mxu0 0
        %2218 = vmatprep.subr.bf16.mxu0 0
        %2219 = vmatpush1.bf16.msra.mxu0 0
        %2220 = vmatprep.subr.bf16.mxu0 0
        %2221 = vmatpush1.bf16.msra.mxu0 0
        %2222 = vmatprep.subr.bf16.mxu0 0
        %2223 = vmatpush1.bf16.msra.mxu0 0
        %2224 = vmatprep.subr.bf16.mxu0 0
        %2225 = vmatpush1.bf16.msra.mxu0 0
        %2226 = vmatprep.subr.bf16.mxu0 0
        %2227 = vmatpush1.bf16.msra.mxu0 0
        %2228 = vmatprep.subr.bf16.mxu0 0
        %2229 = vmatpush1.bf16.msra.mxu0 0
        %2230 = vmatprep.subr.bf16.mxu0 0
        %2231 = vmatpush1.bf16.msra.mxu0 0
        %2232 = vmatprep.subr.bf16.mxu0 0
        %2233 = vmatpush1.bf16.msra.mxu0 0
        %2234 = vmatprep.subr.bf16.mxu0 0
        %2235 = vmatpush1.bf16.msra.mxu0 0
        %2236 = vmatprep.mubr.bf16.mxu0 0
        %2237 = vmatmul.mubr.bf16.gmra.mrb[0].mxu0 %v2199
        %v2238 = vpop.f32.mrb[0].mxu0
        %v2239 = vadd.f32 0.0, %v2238
        %v2240 = vpop.f32.mrb[0].mxu0
        %v2241 = vadd.f32 0.0, %v2240
        %v2242 = vpop.f32.mrb[0].mxu0
        %v2243 = vadd.f32 0.0, %v2242
        %v2244 = vpop.f32.mrb[0].mxu0
        %v2245 = vadd.f32 0.0, %v2244
        %2246 = vmatprep.mubr.bf16.mxu0 0
        %2247 = vmatmul.mubr.bf16.gmra.mrb[0].mxu0 %v2202
        %v2248 = vpop.f32.mrb[0].mxu0
        %v2249 = vadd.f32 0.0, %v2248
        %v2250 = vpop.f32.mrb[0].mxu0
        %v2251 = vadd.f32 0.0, %v2250
        %v2252 = vpop.f32.mrb[0].mxu0
        %v2253 = vadd.f32 0.0, %v2252
        %v2254 = vpop.f32.mrb[0].mxu0
        %v2255 = vadd.f32 0.0, %v2254
        %2256 = vdwg.mxu0
        %v2257 = vadd.f32 %v2107, %v2239
        %v2258 = vadd.f32 %v2108, %v2241
        %v2259 = vadd.f32 %v2109, %v2243
        %v2260 = vadd.f32 %v2110, %v2245
        %v2261 = vadd.f32 %v2111, %v2249
        %v2262 = vadd.f32 %v2112, %v2251
        %v2263 = vadd.f32 %v2113, %v2253
        %v2264 = vadd.f32 %v2114, %v2255
        %s2265 = scalar_lea.vmem [#allocation8], 64
        %v2266 = vld [vmem:[%s2265] sm:$0xf]
        %v2267 = vld [vmem:[%s2265 + $0x4] sm:$0xf]
        %v2268 = vld [vmem:[%s2265 + $0x8] sm:$0xf]
        %v2269 = vld [vmem:[%s2265 + $0xc] sm:$0xf]
        %v2270 = vpack.c.bf16 %v1740, %v1738
        %v2271 = vpack.c.bf16 %v1741, %v1739
        %v2272 = vpack.c.bf16 %v1744, %v1742
        %v2273 = vpack.c.bf16 %v1745, %v1743
        %v2278 = vunpack.c.l.b16 %v2266
        %v2279 = vunpack.c.l.b16 %v2267
        %v2280 = vunpack.c.l.b16 %v2268
        %v2281 = vunpack.c.l.b16 %v2269
        %v2282 = vpack.c.b16 %v2279, %v2278
        %v2283 = vpack.c.b16 %v2281, %v2280
        %v2285 = vsel %vm847, %v2282, 0
        %v2288 = vsel %vm847, %v2283, 0
        %2290 = vmatprep.subr.bf16.mxu0 %v2271
        %2291 = vmatpush1.bf16.msra.mxu0 %v2270
        %2292 = vmatprep.subr.bf16.mxu0 %v2273
        %2293 = vmatpush1.bf16.msra.mxu0 %v2272
        %2294 = vmatprep.subr.bf16.mxu0 0
        %2295 = vmatpush1.bf16.msra.mxu0 0
        %2296 = vmatprep.subr.bf16.mxu0 0
        %2297 = vmatpush1.bf16.msra.mxu0 0
        %2298 = vmatprep.subr.bf16.mxu0 0
        %2299 = vmatpush1.bf16.msra.mxu0 0
        %2300 = vmatprep.subr.bf16.mxu0 0
        %2301 = vmatpush1.bf16.msra.mxu0 0
        %2302 = vmatprep.subr.bf16.mxu0 0
        %2303 = vmatpush1.bf16.msra.mxu0 0
        %2304 = vmatprep.subr.bf16.mxu0 0
        %2305 = vmatpush1.bf16.msra.mxu0 0
        %2306 = vmatprep.subr.bf16.mxu0 0
        %2307 = vmatpush1.bf16.msra.mxu0 0
        %2308 = vmatprep.subr.bf16.mxu0 0
        %2309 = vmatpush1.bf16.msra.mxu0 0
        %2310 = vmatprep.subr.bf16.mxu0 0
        %2311 = vmatpush1.bf16.msra.mxu0 0
        %2312 = vmatprep.subr.bf16.mxu0 0
        %2313 = vmatpush1.bf16.msra.mxu0 0
        %2314 = vmatprep.subr.bf16.mxu0 0
        %2315 = vmatpush1.bf16.msra.mxu0 0
        %2316 = vmatprep.subr.bf16.mxu0 0
        %2317 = vmatpush1.bf16.msra.mxu0 0
        %2318 = vmatprep.subr.bf16.mxu0 0
        %2319 = vmatpush1.bf16.msra.mxu0 0
        %2320 = vmatprep.subr.bf16.mxu0 0
        %2321 = vmatpush1.bf16.msra.mxu0 0
        %2322 = vmatprep.mubr.bf16.mxu0 0
        %2323 = vmatmul.mubr.bf16.gmra.mrb[0].mxu0 %v2285
        %v2324 = vpop.f32.mrb[0].mxu0
        %v2325 = vadd.f32 0.0, %v2324
        %v2326 = vpop.f32.mrb[0].mxu0
        %v2327 = vadd.f32 0.0, %v2326
        %v2328 = vpop.f32.mrb[0].mxu0
        %v2329 = vadd.f32 0.0, %v2328
        %v2330 = vpop.f32.mrb[0].mxu0
        %v2331 = vadd.f32 0.0, %v2330
        %2332 = vmatprep.mubr.bf16.mxu0 0
        %2333 = vmatmul.mubr.bf16.gmra.mrb[0].mxu0 %v2288
        %v2334 = vpop.f32.mrb[0].mxu0
        %v2335 = vadd.f32 0.0, %v2334
        %v2336 = vpop.f32.mrb[0].mxu0
        %v2337 = vadd.f32 0.0, %v2336
        %v2338 = vpop.f32.mrb[0].mxu0
        %v2339 = vadd.f32 0.0, %v2338
        %v2340 = vpop.f32.mrb[0].mxu0
        %v2341 = vadd.f32 0.0, %v2340
        %2342 = vdwg.mxu0
        %v2343 = vadd.f32 %v2257, %v2325
        %v2344 = vadd.f32 %v2258, %v2327
        %v2345 = vadd.f32 %v2259, %v2329
        %v2346 = vadd.f32 %v2260, %v2331
        %v2347 = vadd.f32 %v2261, %v2335
        %v2348 = vadd.f32 %v2262, %v2337
        %v2349 = vadd.f32 %v2263, %v2339
        %v2350 = vadd.f32 %v2264, %v2341
        %s2351 = scalar_lea.vmem [#allocation8], 112
        %v2352 = vld [vmem:[%s2351] sm:$0xf]
        %v2353 = vld [vmem:[%s2351 + $0x4] sm:$0xf]
        %v2354 = vld [vmem:[%s2351 + $0x8] sm:$0xf]
        %v2355 = vld [vmem:[%s2351 + $0xc] sm:$0xf]
        %v2356 = vpack.c.bf16 %v2173, %v2171
        %v2357 = vpack.c.bf16 %v2174, %v2172
        %v2358 = vpack.c.bf16 %v2177, %v2175
        %v2359 = vpack.c.bf16 %v2178, %v2176
        %v2364 = vunpack.c.l.b16 %v2352
        %v2365 = vunpack.c.l.b16 %v2353
        %v2366 = vunpack.c.l.b16 %v2354
        %v2367 = vunpack.c.l.b16 %v2355
        %v2368 = vpack.c.b16 %v2365, %v2364
        %v2369 = vpack.c.b16 %v2367, %v2366
        %v2371 = vsel %vm847, %v2368, 0
        %v2374 = vsel %vm847, %v2369, 0
        %2376 = vmatprep.subr.bf16.mxu0 %v2357
        %2377 = vmatpush1.bf16.msra.mxu0 %v2356
        %2378 = vmatprep.subr.bf16.mxu0 %v2359
        %2379 = vmatpush1.bf16.msra.mxu0 %v2358
        %2380 = vmatprep.subr.bf16.mxu0 0
        %2381 = vmatpush1.bf16.msra.mxu0 0
        %2382 = vmatprep.subr.bf16.mxu0 0
        %2383 = vmatpush1.bf16.msra.mxu0 0
        %2384 = vmatprep.subr.bf16.mxu0 0
        %2385 = vmatpush1.bf16.msra.mxu0 0
        %2386 = vmatprep.subr.bf16.mxu0 0
        %2387 = vmatpush1.bf16.msra.mxu0 0
        %2388 = vmatprep.subr.bf16.mxu0 0
        %2389 = vmatpush1.bf16.msra.mxu0 0
        %2390 = vmatprep.subr.bf16.mxu0 0
        %2391 = vmatpush1.bf16.msra.mxu0 0
        %2392 = vmatprep.subr.bf16.mxu0 0
        %2393 = vmatpush1.bf16.msra.mxu0 0
        %2394 = vmatprep.subr.bf16.mxu0 0
        %2395 = vmatpush1.bf16.msra.mxu0 0
        %2396 = vmatprep.subr.bf16.mxu0 0
        %2397 = vmatpush1.bf16.msra.mxu0 0
        %2398 = vmatprep.subr.bf16.mxu0 0
        %2399 = vmatpush1.bf16.msra.mxu0 0
        %2400 = vmatprep.subr.bf16.mxu0 0
        %2401 = vmatpush1.bf16.msra.mxu0 0
        %2402 = vmatprep.subr.bf16.mxu0 0
        %2403 = vmatpush1.bf16.msra.mxu0 0
        %2404 = vmatprep.subr.bf16.mxu0 0
        %2405 = vmatpush1.bf16.msra.mxu0 0
        %2406 = vmatprep.subr.bf16.mxu0 0
        %2407 = vmatpush1.bf16.msra.mxu0 0
        %2408 = vmatprep.mubr.bf16.mxu0 0
        %2409 = vmatmul.mubr.bf16.gmra.mrb[0].mxu0 %v2371
        %v2410 = vpop.f32.mrb[0].mxu0
        %v2411 = vadd.f32 0.0, %v2410
        %v2412 = vpop.f32.mrb[0].mxu0
        %v2413 = vadd.f32 0.0, %v2412
        %v2414 = vpop.f32.mrb[0].mxu0
        %v2415 = vadd.f32 0.0, %v2414
        %v2416 = vpop.f32.mrb[0].mxu0
        %v2417 = vadd.f32 0.0, %v2416
        %2418 = vmatprep.mubr.bf16.mxu0 0
        %2419 = vmatmul.mubr.bf16.gmra.mrb[0].mxu0 %v2374
        %v2420 = vpop.f32.mrb[0].mxu0
        %v2421 = vadd.f32 0.0, %v2420
        %v2422 = vpop.f32.mrb[0].mxu0
        %v2423 = vadd.f32 0.0, %v2422
        %v2424 = vpop.f32.mrb[0].mxu0
        %v2425 = vadd.f32 0.0, %v2424
        %v2426 = vpop.f32.mrb[0].mxu0
        %v2427 = vadd.f32 0.0, %v2426
        %2428 = vdwg.mxu0
        %v2429 = vadd.f32 %v2343, %v2411
        %v2430 = vadd.f32 %v2344, %v2413
        %v2431 = vadd.f32 %v2345, %v2415
        %v2432 = vadd.f32 %v2346, %v2417
        %v2433 = vadd.f32 %v2347, %v2421
        %v2434 = vadd.f32 %v2348, %v2423
        %v2435 = vadd.f32 %v2349, %v2425
        %v2436 = vadd.f32 %v2350, %v2427
        %2437 = vrot.lane.b32.xlu0 %v1802, 112
        %v2438 = vpop.permute.xlu0 %2437
        %2439 = vrot.lane.b32.xlu0 %v1804, 112
        %v2440 = vpop.permute.xlu0 %2439
        %2441 = vrot.lane.b32.xlu0 %v1806, 112
        %v2442 = vpop.permute.xlu0 %2441
        %2443 = vrot.lane.b32.xlu0 %v1808, 112
        %v2444 = vpop.permute.xlu0 %2443
        %2445 = vrot.lane.b32.xlu0 %v1803, 112
        %v2446 = vpop.permute.xlu0 %2445
        %2447 = vrot.lane.b32.xlu0 %v1805, 112
        %v2448 = vpop.permute.xlu0 %2447
        %2449 = vrot.lane.b32.xlu0 %v1807, 112
        %v2450 = vpop.permute.xlu0 %2449
        %2451 = vrot.lane.b32.xlu0 %v1809, 112
        %v2452 = vpop.permute.xlu0 %2451
        %v2453 = vsel %vm734, %v2438, %v2446
        %v2454 = vsel %vm734, %v2440, %v2448
        %v2455 = vsel %vm734, %v2442, %v2450
        %v2456 = vsel %vm734, %v2444, %v2452
        %v2457 = vsel %vm734, %v2446, %v2438
        %v2458 = vsel %vm734, %v2448, %v2440
        %v2459 = vsel %vm734, %v2450, %v2442
        %v2460 = vsel %vm734, %v2452, %v2444
        %2461 = vrot.lane.b32.xlu0 %v1802, 16
        %v2462 = vpop.permute.xlu0 %2461
        %2463 = vrot.lane.b32.xlu0 %v1804, 16
        %v2464 = vpop.permute.xlu0 %2463
        %2465 = vrot.lane.b32.xlu0 %v1806, 16
        %v2466 = vpop.permute.xlu0 %2465
        %2467 = vrot.lane.b32.xlu0 %v1808, 16
        %v2468 = vpop.permute.xlu0 %2467
        %2469 = vrot.lane.b32.xlu0 %v1803, 16
        %v2470 = vpop.permute.xlu0 %2469
        %2471 = vrot.lane.b32.xlu0 %v1805, 16
        %v2472 = vpop.permute.xlu0 %2471
        %2473 = vrot.lane.b32.xlu0 %v1807, 16
        %v2474 = vpop.permute.xlu0 %2473
        %2475 = vrot.lane.b32.xlu0 %v1809, 16
        %v2476 = vpop.permute.xlu0 %2475
        %v2477 = vsel %vm759, %v2462, %v2470
        %v2478 = vsel %vm759, %v2464, %v2472
        %v2479 = vsel %vm759, %v2466, %v2474
        %v2480 = vsel %vm759, %v2468, %v2476
        %v2481 = vsel %vm759, %v2470, %v2462
        %v2482 = vsel %vm759, %v2472, %v2464
        %v2483 = vsel %vm759, %v2474, %v2466
        %v2484 = vsel %vm759, %v2476, %v2468
        %v2485 = vsel %vm784, %v2453, %v2481
        %v2486 = vsel %vm785, %v2457, %v2477
        %v2487 = vsel %vm784, %v2454, %v2482
        %v2488 = vsel %vm785, %v2458, %v2478
        %v2489 = vsel %vm784, %v2455, %v2483
        %v2490 = vsel %vm785, %v2459, %v2479
        %v2491 = vsel %vm784, %v2456, %v2484
        %v2492 = vsel %vm785, %v2460, %v2480
        %v2493 = vsel %vm810, %v2481, %v2453
        %v2494 = vsel %vm811, %v2477, %v2457
        %v2495 = vsel %vm810, %v2482, %v2454
        %v2496 = vsel %vm811, %v2478, %v2458
        %v2497 = vsel %vm810, %v2483, %v2455
        %v2498 = vsel %vm811, %v2479, %v2459
        %v2499 = vsel %vm810, %v2484, %v2456
        %v2500 = vsel %vm811, %v2480, %v2460
        %s2501 = scalar_lea.vmem [#allocation8], 32
        %v2502 = vld [vmem:[%s2501] sm:$0xf]
        %v2503 = vld [vmem:[%s2501 + $0x4] sm:$0xf]
        %v2504 = vld [vmem:[%s2501 + $0x8] sm:$0xf]
        %v2505 = vld [vmem:[%s2501 + $0xc] sm:$0xf]
        %v2506 = vpack.c.bf16 %v2487, %v2485
        %v2507 = vpack.c.bf16 %v2488, %v2486
        %v2508 = vpack.c.bf16 %v2491, %v2489
        %v2509 = vpack.c.bf16 %v2492, %v2490
        %v2514 = vunpack.c.l.b16 %v2502
        %v2515 = vunpack.c.l.b16 %v2503
        %v2516 = vunpack.c.l.b16 %v2504
        %v2517 = vunpack.c.l.b16 %v2505
        %v2518 = vpack.c.b16 %v2515, %v2514
        %v2519 = vpack.c.b16 %v2517, %v2516
        %v2521 = vsel %vm847, %v2518, 0
        %v2524 = vsel %vm847, %v2519, 0
        %2526 = vmatprep.subr.bf16.mxu0 %v2507
        %2527 = vmatpush1.bf16.msra.mxu0 %v2506
        %2528 = vmatprep.subr.bf16.mxu0 %v2509
        %2529 = vmatpush1.bf16.msra.mxu0 %v2508
        %2530 = vmatprep.subr.bf16.mxu0 0
        %2531 = vmatpush1.bf16.msra.mxu0 0
        %2532 = vmatprep.subr.bf16.mxu0 0
        %2533 = vmatpush1.bf16.msra.mxu0 0
        %2534 = vmatprep.subr.bf16.mxu0 0
        %2535 = vmatpush1.bf16.msra.mxu0 0
        %2536 = vmatprep.subr.bf16.mxu0 0
        %2537 = vmatpush1.bf16.msra.mxu0 0
        %2538 = vmatprep.subr.bf16.mxu0 0
        %2539 = vmatpush1.bf16.msra.mxu0 0
        %2540 = vmatprep.subr.bf16.mxu0 0
        %2541 = vmatpush1.bf16.msra.mxu0 0
        %2542 = vmatprep.subr.bf16.mxu0 0
        %2543 = vmatpush1.bf16.msra.mxu0 0
        %2544 = vmatprep.subr.bf16.mxu0 0
        %2545 = vmatpush1.bf16.msra.mxu0 0
        %2546 = vmatprep.subr.bf16.mxu0 0
        %2547 = vmatpush1.bf16.msra.mxu0 0
        %2548 = vmatprep.subr.bf16.mxu0 0
        %2549 = vmatpush1.bf16.msra.mxu0 0
        %2550 = vmatprep.subr.bf16.mxu0 0
        %2551 = vmatpush1.bf16.msra.mxu0 0
        %2552 = vmatprep.subr.bf16.mxu0 0
        %2553 = vmatpush1.bf16.msra.mxu0 0
        %2554 = vmatprep.subr.bf16.mxu0 0
        %2555 = vmatpush1.bf16.msra.mxu0 0
        %2556 = vmatprep.subr.bf16.mxu0 0
        %2557 = vmatpush1.bf16.msra.mxu0 0
        %2558 = vmatprep.mubr.bf16.mxu0 0
        %2559 = vmatmul.mubr.bf16.gmra.mrb[0].mxu0 %v2521
        %v2560 = vpop.f32.mrb[0].mxu0
        %v2561 = vadd.f32 0.0, %v2560
        %v2562 = vpop.f32.mrb[0].mxu0
        %v2563 = vadd.f32 0.0, %v2562
        %v2564 = vpop.f32.mrb[0].mxu0
        %v2565 = vadd.f32 0.0, %v2564
        %v2566 = vpop.f32.mrb[0].mxu0
        %v2567 = vadd.f32 0.0, %v2566
        %2568 = vmatprep.mubr.bf16.mxu0 0
        %2569 = vmatmul.mubr.bf16.gmra.mrb[0].mxu0 %v2524
        %v2570 = vpop.f32.mrb[0].mxu0
        %v2571 = vadd.f32 0.0, %v2570
        %v2572 = vpop.f32.mrb[0].mxu0
        %v2573 = vadd.f32 0.0, %v2572
        %v2574 = vpop.f32.mrb[0].mxu0
        %v2575 = vadd.f32 0.0, %v2574
        %v2576 = vpop.f32.mrb[0].mxu0
        %v2577 = vadd.f32 0.0, %v2576
        %2578 = vdwg.mxu0
        %v2579 = vadd.f32 %v2429, %v2561
        %v2580 = vadd.f32 %v2430, %v2563
        %v2581 = vadd.f32 %v2431, %v2565
        %v2582 = vadd.f32 %v2432, %v2567
        %v2583 = vadd.f32 %v2433, %v2571
        %v2584 = vadd.f32 %v2434, %v2573
        %v2585 = vadd.f32 %v2435, %v2575
        %v2586 = vadd.f32 %v2436, %v2577
        %s2587 = scalar_lea.vmem [#allocation8], 80
        %v2588 = vld [vmem:[%s2587] sm:$0xf]
        %v2589 = vld [vmem:[%s2587 + $0x4] sm:$0xf]
        %v2590 = vld [vmem:[%s2587 + $0x8] sm:$0xf]
        %v2591 = vld [vmem:[%s2587 + $0xc] sm:$0xf]
        %v2592 = vpack.c.bf16 %v1804, %v1802
        %v2593 = vpack.c.bf16 %v1805, %v1803
        %v2594 = vpack.c.bf16 %v1808, %v1806
        %v2595 = vpack.c.bf16 %v1809, %v1807
        %v2600 = vunpack.c.l.b16 %v2588
        %v2601 = vunpack.c.l.b16 %v2589
        %v2602 = vunpack.c.l.b16 %v2590
        %v2603 = vunpack.c.l.b16 %v2591
        %v2604 = vpack.c.b16 %v2601, %v2600
        %v2605 = vpack.c.b16 %v2603, %v2602
        %v2607 = vsel %vm847, %v2604, 0
        %v2610 = vsel %vm847, %v2605, 0
        %2612 = vmatprep.subr.bf16.mxu0 %v2593
        %2613 = vmatpush1.bf16.msra.mxu0 %v2592
        %2614 = vmatprep.subr.bf16.mxu0 %v2595
        %2615 = vmatpush1.bf16.msra.mxu0 %v2594
        %2616 = vmatprep.subr.bf16.mxu0 0
        %2617 = vmatpush1.bf16.msra.mxu0 0
        %2618 = vmatprep.subr.bf16.mxu0 0
        %2619 = vmatpush1.bf16.msra.mxu0 0
        %2620 = vmatprep.subr.bf16.mxu0 0
        %2621 = vmatpush1.bf16.msra.mxu0 0
        %2622 = vmatprep.subr.bf16.mxu0 0
        %2623 = vmatpush1.bf16.msra.mxu0 0
        %2624 = vmatprep.subr.bf16.mxu0 0
        %2625 = vmatpush1.bf16.msra.mxu0 0
        %2626 = vmatprep.subr.bf16.mxu0 0
        %2627 = vmatpush1.bf16.msra.mxu0 0
        %2628 = vmatprep.subr.bf16.mxu0 0
        %2629 = vmatpush1.bf16.msra.mxu0 0
        %2630 = vmatprep.subr.bf16.mxu0 0
        %2631 = vmatpush1.bf16.msra.mxu0 0
        %2632 = vmatprep.subr.bf16.mxu0 0
        %2633 = vmatpush1.bf16.msra.mxu0 0
        %2634 = vmatprep.subr.bf16.mxu0 0
        %2635 = vmatpush1.bf16.msra.mxu0 0
        %2636 = vmatprep.subr.bf16.mxu0 0
        %2637 = vmatpush1.bf16.msra.mxu0 0
        %2638 = vmatprep.subr.bf16.mxu0 0
        %2639 = vmatpush1.bf16.msra.mxu0 0
        %2640 = vmatprep.subr.bf16.mxu0 0
        %2641 = vmatpush1.bf16.msra.mxu0 0
        %2642 = vmatprep.subr.bf16.mxu0 0
        %2643 = vmatpush1.bf16.msra.mxu0 0
        %2644 = vmatprep.mubr.bf16.mxu0 0
        %2645 = vmatmul.mubr.bf16.gmra.mrb[0].mxu0 %v2607
        %v2646 = vpop.f32.mrb[0].mxu0
        %v2647 = vadd.f32 0.0, %v2646
        %v2648 = vpop.f32.mrb[0].mxu0
        %v2649 = vadd.f32 0.0, %v2648
        %v2650 = vpop.f32.mrb[0].mxu0
        %v2651 = vadd.f32 0.0, %v2650
        %v2652 = vpop.f32.mrb[0].mxu0
        %v2653 = vadd.f32 0.0, %v2652
        %2654 = vmatprep.mubr.bf16.mxu0 0
        %2655 = vmatmul.mubr.bf16.gmra.mrb[0].mxu0 %v2610
        %v2656 = vpop.f32.mrb[0].mxu0
        %v2657 = vadd.f32 0.0, %v2656
        %v2658 = vpop.f32.mrb[0].mxu0
        %v2659 = vadd.f32 0.0, %v2658
        %v2660 = vpop.f32.mrb[0].mxu0
        %v2661 = vadd.f32 0.0, %v2660
        %v2662 = vpop.f32.mrb[0].mxu0
        %v2663 = vadd.f32 0.0, %v2662
        %2664 = vdwg.mxu0
        %v2665 = vadd.f32 %v2579, %v2647
        %v2666 = vadd.f32 %v2580, %v2649
        %v2667 = vadd.f32 %v2581, %v2651
        %v2668 = vadd.f32 %v2582, %v2653
        %v2669 = vadd.f32 %v2583, %v2657
        %v2670 = vadd.f32 %v2584, %v2659
        %v2671 = vadd.f32 %v2585, %v2661
        %v2672 = vadd.f32 %v2586, %v2663
        %s2673 = scalar_lea.vmem [#allocation8], 128
        %v2674 = vld [vmem:[%s2673] sm:$0xf]
        %v2675 = vld [vmem:[%s2673 + $0x4] sm:$0xf]
        %v2676 = vld [vmem:[%s2673 + $0x8] sm:$0xf]
        %v2677 = vld [vmem:[%s2673 + $0xc] sm:$0xf]
        %v2678 = vpack.c.bf16 %v2495, %v2493
        %v2679 = vpack.c.bf16 %v2496, %v2494
        %v2680 = vpack.c.bf16 %v2499, %v2497
        %v2681 = vpack.c.bf16 %v2500, %v2498
        %v2686 = vunpack.c.l.b16 %v2674
        %v2687 = vunpack.c.l.b16 %v2675
        %v2688 = vunpack.c.l.b16 %v2676
        %v2689 = vunpack.c.l.b16 %v2677
        %v2690 = vpack.c.b16 %v2687, %v2686
        %v2691 = vpack.c.b16 %v2689, %v2688
        %v2693 = vsel %vm847, %v2690, 0
        %v2696 = vsel %vm847, %v2691, 0
        %2698 = vmatprep.subr.bf16.mxu0 %v2679
        %2699 = vmatpush1.bf16.msra.mxu0 %v2678
        %2700 = vmatprep.subr.bf16.mxu0 %v2681
        %2701 = vmatpush1.bf16.msra.mxu0 %v2680
        %2702 = vmatprep.subr.bf16.mxu0 0
        %2703 = vmatpush1.bf16.msra.mxu0 0
        %2704 = vmatprep.subr.bf16.mxu0 0
        %2705 = vmatpush1.bf16.msra.mxu0 0
        %2706 = vmatprep.subr.bf16.mxu0 0
        %2707 = vmatpush1.bf16.msra.mxu0 0
        %2708 = vmatprep.subr.bf16.mxu0 0
        %2709 = vmatpush1.bf16.msra.mxu0 0
        %2710 = vmatprep.subr.bf16.mxu0 0
        %2711 = vmatpush1.bf16.msra.mxu0 0
        %2712 = vmatprep.subr.bf16.mxu0 0
        %2713 = vmatpush1.bf16.msra.mxu0 0
        %2714 = vmatprep.subr.bf16.mxu0 0
        %2715 = vmatpush1.bf16.msra.mxu0 0
        %2716 = vmatprep.subr.bf16.mxu0 0
        %2717 = vmatpush1.bf16.msra.mxu0 0
        %2718 = vmatprep.subr.bf16.mxu0 0
        %2719 = vmatpush1.bf16.msra.mxu0 0
        %2720 = vmatprep.subr.bf16.mxu0 0
        %2721 = vmatpush1.bf16.msra.mxu0 0
        %2722 = vmatprep.subr.bf16.mxu0 0
        %2723 = vmatpush1.bf16.msra.mxu0 0
        %2724 = vmatprep.subr.bf16.mxu0 0
        %2725 = vmatpush1.bf16.msra.mxu0 0
        %2726 = vmatprep.subr.bf16.mxu0 0
        %2727 = vmatpush1.bf16.msra.mxu0 0
        %2728 = vmatprep.subr.bf16.mxu0 0
        %2729 = vmatpush1.bf16.msra.mxu0 0
        %2730 = vmatprep.mubr.bf16.mxu0 0
        %2731 = vmatmul.mubr.bf16.gmra.mrb[0].mxu0 %v2693
        %v2732 = vpop.f32.mrb[0].mxu0
        %v2733 = vadd.f32 0.0, %v2732
        %v2734 = vpop.f32.mrb[0].mxu0
        %v2735 = vadd.f32 0.0, %v2734
        %v2736 = vpop.f32.mrb[0].mxu0
        %v2737 = vadd.f32 0.0, %v2736
        %v2738 = vpop.f32.mrb[0].mxu0
        %v2739 = vadd.f32 0.0, %v2738
        %2740 = vmatprep.mubr.bf16.mxu0 0
        %2741 = vmatmul.mubr.bf16.gmra.mrb[0].mxu0 %v2696
        %v2742 = vpop.f32.mrb[0].mxu0
        %v2743 = vadd.f32 0.0, %v2742
        %v2744 = vpop.f32.mrb[0].mxu0
        %v2745 = vadd.f32 0.0, %v2744
        %v2746 = vpop.f32.mrb[0].mxu0
        %v2747 = vadd.f32 0.0, %v2746
        %v2748 = vpop.f32.mrb[0].mxu0
        %v2749 = vadd.f32 0.0, %v2748
        %2750 = vdwg.mxu0
        %v2751 = vadd.f32 %v2665, %v2733
        %v2752 = vadd.f32 %v2666, %v2735
        %v2753 = vadd.f32 %v2667, %v2737
        %v2754 = vadd.f32 %v2668, %v2739
        %v2755 = vadd.f32 %v2669, %v2743
        %v2756 = vadd.f32 %v2670, %v2745
        %v2757 = vadd.f32 %v2671, %v2747
        %v2758 = vadd.f32 %v2672, %v2749
        %v2759 = vld [vmem:[%s6] sm:$0xff]
        %v2760 = vld [vmem:[%s6 + $0x8] sm:$0xff]
        %v2761 = vld [vmem:[%s6 + $0x10] sm:$0xff]
        %v2762 = vld [vmem:[%s6 + $0x18] sm:$0xff]
        %2764 = vset.pattern.permute.xlu0 0
        %2765 = vperm.xlu0 %2764, %v2759
        %v2766 = vpop.permute.xlu0 %2765
        %2769 = vset.pattern.permute.xlu0 0
        %2770 = vperm.xlu0 %2769, %v2760
        %v2771 = vpop.permute.xlu0 %2770
        %2774 = vset.pattern.permute.xlu0 0
        %2775 = vperm.xlu0 %2774, %v2761
        %v2776 = vpop.permute.xlu0 %2775
        %2779 = vset.pattern.permute.xlu0 0
        %2780 = vperm.xlu0 %2779, %v2762
        %v2781 = vpop.permute.xlu0 %2780
        %v2783 = vadd.f32 %v2751, %v2766
        %v2784 = vadd.f32 %v2752, %v2766
        %v2785 = vadd.f32 %v2753, %v2771
        %v2786 = vadd.f32 %v2754, %v2771
        %v2787 = vadd.f32 %v2755, %v2776
        %v2788 = vadd.f32 %v2756, %v2776
        %v2789 = vadd.f32 %v2757, %v2781
        %v2790 = vadd.f32 %v2758, %v2781
        %v2791 = vadd.f32 %v2783, %v597
        %v2792 = vadd.f32 %v2784, %v598
        %v2793 = vadd.f32 %v2785, %v599
        %v2794 = vadd.f32 %v2786, %v600
        %v2795 = vadd.f32 %v2787, %v601
        %v2796 = vadd.f32 %v2788, %v602
        %v2797 = vadd.f32 %v2789, %v603
        %v2798 = vadd.f32 %v2790, %v604
        %v2799 = vmax.f32 %v2791, 0.0
        %v2800 = vmax.f32 %v2792, 0.0
        %v2801 = vmax.f32 %v2793, 0.0
        %v2802 = vmax.f32 %v2794, 0.0
        %v2803 = vmax.f32 %v2795, 0.0
        %v2804 = vmax.f32 %v2796, 0.0
        %v2805 = vmax.f32 %v2797, 0.0
        %v2806 = vmax.f32 %v2798, 0.0
        %2807 = vrot.lane.b32.xlu0 %v2799, 127
        %v2808 = vpop.permute.xlu0 %2807
        %2809 = vrot.lane.b32.xlu0 %v2801, 127
        %v2810 = vpop.permute.xlu0 %2809
        %2811 = vrot.lane.b32.xlu0 %v2803, 127
        %v2812 = vpop.permute.xlu0 %2811
        %2813 = vrot.lane.b32.xlu0 %v2805, 127
        %v2814 = vpop.permute.xlu0 %2813
        %2815 = vrot.lane.b32.xlu0 %v2800, 127
        %v2816 = vpop.permute.xlu0 %2815
        %2817 = vrot.lane.b32.xlu0 %v2802, 127
        %v2818 = vpop.permute.xlu0 %2817
        %2819 = vrot.lane.b32.xlu0 %v2804, 127
        %v2820 = vpop.permute.xlu0 %2819
        %2821 = vrot.lane.b32.xlu0 %v2806, 127
        %v2822 = vpop.permute.xlu0 %2821
        %v2823 = vsel %vm631, %v2808, %v2816
        %v2824 = vsel %vm631, %v2810, %v2818
        %v2825 = vsel %vm631, %v2812, %v2820
        %v2826 = vsel %vm631, %v2814, %v2822
        %v2827 = vsel %vm631, %v2816, %v2808
        %v2828 = vsel %vm631, %v2818, %v2810
        %v2829 = vsel %vm631, %v2820, %v2812
        %v2830 = vsel %vm631, %v2822, %v2814
        %2831 = vrot.lane.b32.xlu0 %v2799, 1
        %v2832 = vpop.permute.xlu0 %2831
        %2833 = vrot.lane.b32.xlu0 %v2801, 1
        %v2834 = vpop.permute.xlu0 %2833
        %2835 = vrot.lane.b32.xlu0 %v2803, 1
        %v2836 = vpop.permute.xlu0 %2835
        %2837 = vrot.lane.b32.xlu0 %v2805, 1
        %v2838 = vpop.permute.xlu0 %2837
        %2839 = vrot.lane.b32.xlu0 %v2800, 1
        %v2840 = vpop.permute.xlu0 %2839
        %2841 = vrot.lane.b32.xlu0 %v2802, 1
        %v2842 = vpop.permute.xlu0 %2841
        %2843 = vrot.lane.b32.xlu0 %v2804, 1
        %v2844 = vpop.permute.xlu0 %2843
        %2845 = vrot.lane.b32.xlu0 %v2806, 1
        %v2846 = vpop.permute.xlu0 %2845
        %v2847 = vsel %vm656, %v2832, %v2840
        %v2848 = vsel %vm656, %v2834, %v2842
        %v2849 = vsel %vm656, %v2836, %v2844
        %v2850 = vsel %vm656, %v2838, %v2846
        %v2851 = vsel %vm656, %v2840, %v2832
        %v2852 = vsel %vm656, %v2842, %v2834
        %v2853 = vsel %vm656, %v2844, %v2836
        %v2854 = vsel %vm656, %v2846, %v2838
        %v2855 = vsel %vm682, %v2823, %v2851
        %v2856 = vsel %vm683, %v2827, %v2847
        %v2857 = vsel %vm682, %v2824, %v2852
        %v2858 = vsel %vm683, %v2828, %v2848
        %v2859 = vsel %vm682, %v2825, %v2853
        %v2860 = vsel %vm683, %v2829, %v2849
        %v2861 = vsel %vm682, %v2826, %v2854
        %v2862 = vsel %vm683, %v2830, %v2850
        %v2863 = vsel %vm708, %v2851, %v2823
        %v2864 = vsel %vm709, %v2847, %v2827
        %v2865 = vsel %vm708, %v2852, %v2824
        %v2866 = vsel %vm709, %v2848, %v2828
        %v2867 = vsel %vm708, %v2853, %v2825
        %v2868 = vsel %vm709, %v2849, %v2829
        %v2869 = vsel %vm708, %v2854, %v2826
        %v2870 = vsel %vm709, %v2850, %v2830
        %2871 = vrot.lane.b32.xlu0 %v2855, 112
        %v2872 = vpop.permute.xlu0 %2871
        %2873 = vrot.lane.b32.xlu0 %v2857, 112
        %v2874 = vpop.permute.xlu0 %2873
        %2875 = vrot.lane.b32.xlu0 %v2859, 112
        %v2876 = vpop.permute.xlu0 %2875
        %2877 = vrot.lane.b32.xlu0 %v2861, 112
        %v2878 = vpop.permute.xlu0 %2877
        %2879 = vrot.lane.b32.xlu0 %v2856, 112
        %v2880 = vpop.permute.xlu0 %2879
        %2881 = vrot.lane.b32.xlu0 %v2858, 112
        %v2882 = vpop.permute.xlu0 %2881
        %2883 = vrot.lane.b32.xlu0 %v2860, 112
        %v2884 = vpop.permute.xlu0 %2883
        %2885 = vrot.lane.b32.xlu0 %v2862, 112
        %v2886 = vpop.permute.xlu0 %2885
        %v2887 = vsel %vm734, %v2872, %v2880
        %v2888 = vsel %vm734, %v2874, %v2882
        %v2889 = vsel %vm734, %v2876, %v2884
        %v2890 = vsel %vm734, %v2878, %v2886
        %v2891 = vsel %vm734, %v2880, %v2872
        %v2892 = vsel %vm734, %v2882, %v2874
        %v2893 = vsel %vm734, %v2884, %v2876
        %v2894 = vsel %vm734, %v2886, %v2878
        %2895 = vrot.lane.b32.xlu0 %v2855, 16
        %v2896 = vpop.permute.xlu0 %2895
        %2897 = vrot.lane.b32.xlu0 %v2857, 16
        %v2898 = vpop.permute.xlu0 %2897
        %2899 = vrot.lane.b32.xlu0 %v2859, 16
        %v2900 = vpop.permute.xlu0 %2899
        %2901 = vrot.lane.b32.xlu0 %v2861, 16
        %v2902 = vpop.permute.xlu0 %2901
        %2903 = vrot.lane.b32.xlu0 %v2856, 16
        %v2904 = vpop.permute.xlu0 %2903
        %2905 = vrot.lane.b32.xlu0 %v2858, 16
        %v2906 = vpop.permute.xlu0 %2905
        %2907 = vrot.lane.b32.xlu0 %v2860, 16
        %v2908 = vpop.permute.xlu0 %2907
        %2909 = vrot.lane.b32.xlu0 %v2862, 16
        %v2910 = vpop.permute.xlu0 %2909
        %v2911 = vsel %vm759, %v2896, %v2904
        %v2912 = vsel %vm759, %v2898, %v2906
        %v2913 = vsel %vm759, %v2900, %v2908
        %v2914 = vsel %vm759, %v2902, %v2910
        %v2915 = vsel %vm759, %v2904, %v2896
        %v2916 = vsel %vm759, %v2906, %v2898
        %v2917 = vsel %vm759, %v2908, %v2900
        %v2918 = vsel %vm759, %v2910, %v2902
        %v2919 = vsel %vm784, %v2887, %v2915
        %v2920 = vsel %vm785, %v2891, %v2911
        %v2921 = vsel %vm784, %v2888, %v2916
        %v2922 = vsel %vm785, %v2892, %v2912
        %v2923 = vsel %vm784, %v2889, %v2917
        %v2924 = vsel %vm785, %v2893, %v2913
        %v2925 = vsel %vm784, %v2890, %v2918
        %v2926 = vsel %vm785, %v2894, %v2914
        %v2927 = vsel %vm810, %v2915, %v2887
        %v2928 = vsel %vm811, %v2911, %v2891
        %v2929 = vsel %vm810, %v2916, %v2888
        %v2930 = vsel %vm811, %v2912, %v2892
        %v2931 = vsel %vm810, %v2917, %v2889
        %v2932 = vsel %vm811, %v2913, %v2893
        %v2933 = vsel %vm810, %v2918, %v2890
        %v2934 = vsel %vm811, %v2914, %v2894
        %v2935 = vld [vmem:[#allocation10] sm:$0xf]
        %v2936 = vld [vmem:[#allocation10 + $0x4] sm:$0xf]
        %v2937 = vld [vmem:[#allocation10 + $0x8] sm:$0xf]
        %v2938 = vld [vmem:[#allocation10 + $0xc] sm:$0xf]
        %v2939 = vpack.c.bf16 %v2921, %v2919
        %v2940 = vpack.c.bf16 %v2922, %v2920
        %v2941 = vpack.c.bf16 %v2925, %v2923
        %v2942 = vpack.c.bf16 %v2926, %v2924
        %s2943 = scalar_lea.vmem [#allocation10], 48
        %v2944 = vld [vmem:[%s2943] sm:$0xf]
        %v2945 = vld [vmem:[%s2943 + $0x4] sm:$0xf]
        %v2946 = vld [vmem:[%s2943 + $0x8] sm:$0xf]
        %v2947 = vld [vmem:[%s2943 + $0xc] sm:$0xf]
        %v2948 = vpack.c.bf16 %v2857, %v2855
        %v2949 = vpack.c.bf16 %v2858, %v2856
        %v2950 = vpack.c.bf16 %v2861, %v2859
        %v2951 = vpack.c.bf16 %v2862, %v2860
        %v2956 = vunpack.c.l.b16 %v2944
        %v2957 = vunpack.c.l.b16 %v2945
        %v2958 = vunpack.c.l.b16 %v2946
        %v2959 = vunpack.c.l.b16 %v2947
        %v2960 = vpack.c.b16 %v2957, %v2956
        %v2961 = vpack.c.b16 %v2959, %v2958
        %v2963 = vsel %vm847, %v2960, 0
        %v2966 = vsel %vm847, %v2961, 0
        %2968 = vmatprep.subr.bf16.mxu0 %v2949
        %2969 = vmatpush1.bf16.msra.mxu0 %v2948
        %2970 = vmatprep.subr.bf16.mxu0 %v2951
        %2971 = vmatpush1.bf16.msra.mxu0 %v2950
        %2972 = vmatprep.subr.bf16.mxu0 0
        %2973 = vmatpush1.bf16.msra.mxu0 0
        %2974 = vmatprep.subr.bf16.mxu0 0
        %2975 = vmatpush1.bf16.msra.mxu0 0
        %2976 = vmatprep.subr.bf16.mxu0 0
        %2977 = vmatpush1.bf16.msra.mxu0 0
        %2978 = vmatprep.subr.bf16.mxu0 0
        %2979 = vmatpush1.bf16.msra.mxu0 0
        %2980 = vmatprep.subr.bf16.mxu0 0
        %2981 = vmatpush1.bf16.msra.mxu0 0
        %2982 = vmatprep.subr.bf16.mxu0 0
        %2983 = vmatpush1.bf16.msra.mxu0 0
        %2984 = vmatprep.subr.bf16.mxu0 0
        %2985 = vmatpush1.bf16.msra.mxu0 0
        %2986 = vmatprep.subr.bf16.mxu0 0
        %2987 = vmatpush1.bf16.msra.mxu0 0
        %2988 = vmatprep.subr.bf16.mxu0 0
        %2989 = vmatpush1.bf16.msra.mxu0 0
        %2990 = vmatprep.subr.bf16.mxu0 0
        %2991 = vmatpush1.bf16.msra.mxu0 0
        %2992 = vmatprep.subr.bf16.mxu0 0
        %2993 = vmatpush1.bf16.msra.mxu0 0
        %2994 = vmatprep.subr.bf16.mxu0 0
        %2995 = vmatpush1.bf16.msra.mxu0 0
        %2996 = vmatprep.subr.bf16.mxu0 0
        %2997 = vmatpush1.bf16.msra.mxu0 0
        %2998 = vmatprep.subr.bf16.mxu0 0
        %2999 = vmatpush1.bf16.msra.mxu0 0
        %3000 = vmatprep.mubr.bf16.mxu0 0
        %3001 = vmatmul.mubr.bf16.gmra.mrb[0].mxu0 %v2963
        %v3002 = vpop.f32.mrb[0].mxu0
        %v3003 = vadd.f32 0.0, %v3002
        %v3004 = vpop.f32.mrb[0].mxu0
        %v3005 = vadd.f32 0.0, %v3004
        %v3006 = vpop.f32.mrb[0].mxu0
        %v3007 = vadd.f32 0.0, %v3006
        %v3008 = vpop.f32.mrb[0].mxu0
        %v3009 = vadd.f32 0.0, %v3008
        %3010 = vmatprep.mubr.bf16.mxu0 0
        %3011 = vmatmul.mubr.bf16.gmra.mrb[0].mxu0 %v2966
        %v3012 = vpop.f32.mrb[0].mxu0
        %v3013 = vadd.f32 0.0, %v3012
        %v3014 = vpop.f32.mrb[0].mxu0
        %v3015 = vadd.f32 0.0, %v3014
        %v3016 = vpop.f32.mrb[0].mxu0
        %v3017 = vadd.f32 0.0, %v3016
        %v3018 = vpop.f32.mrb[0].mxu0
        %v3019 = vadd.f32 0.0, %v3018
        %3020 = vdwg.mxu0
        %v3025 = vunpack.c.l.b16 %v2935
        %v3026 = vunpack.c.l.b16 %v2936
        %v3027 = vunpack.c.l.b16 %v2937
        %v3028 = vunpack.c.l.b16 %v2938
        %v3029 = vpack.c.b16 %v3026, %v3025
        %v3030 = vpack.c.b16 %v3028, %v3027
        %v3032 = vsel %vm847, %v3029, 0
        %v3035 = vsel %vm847, %v3030, 0
        %3037 = vmatprep.subr.bf16.mxu0 %v2940
        %3038 = vmatpush1.bf16.msra.mxu0 %v2939
        %3039 = vmatprep.subr.bf16.mxu0 %v2942
        %3040 = vmatpush1.bf16.msra.mxu0 %v2941
        %3041 = vmatprep.subr.bf16.mxu0 0
        %3042 = vmatpush1.bf16.msra.mxu0 0
        %3043 = vmatprep.subr.bf16.mxu0 0
        %3044 = vmatpush1.bf16.msra.mxu0 0
        %3045 = vmatprep.subr.bf16.mxu0 0
        %3046 = vmatpush1.bf16.msra.mxu0 0
        %3047 = vmatprep.subr.bf16.mxu0 0
        %3048 = vmatpush1.bf16.msra.mxu0 0
        %3049 = vmatprep.subr.bf16.mxu0 0
        %3050 = vmatpush1.bf16.msra.mxu0 0
        %3051 = vmatprep.subr.bf16.mxu0 0
        %3052 = vmatpush1.bf16.msra.mxu0 0
        %3053 = vmatprep.subr.bf16.mxu0 0
        %3054 = vmatpush1.bf16.msra.mxu0 0
        %3055 = vmatprep.subr.bf16.mxu0 0
        %3056 = vmatpush1.bf16.msra.mxu0 0
        %3057 = vmatprep.subr.bf16.mxu0 0
        %3058 = vmatpush1.bf16.msra.mxu0 0
        %3059 = vmatprep.subr.bf16.mxu0 0
        %3060 = vmatpush1.bf16.msra.mxu0 0
        %3061 = vmatprep.subr.bf16.mxu0 0
        %3062 = vmatpush1.bf16.msra.mxu0 0
        %3063 = vmatprep.subr.bf16.mxu0 0
        %3064 = vmatpush1.bf16.msra.mxu0 0
        %3065 = vmatprep.subr.bf16.mxu0 0
        %3066 = vmatpush1.bf16.msra.mxu0 0
        %3067 = vmatprep.subr.bf16.mxu0 0
        %3068 = vmatpush1.bf16.msra.mxu0 0
        %3069 = vmatprep.mubr.bf16.mxu0 0
        %3070 = vmatmul.mubr.bf16.gmra.mrb[0].mxu0 %v3032
        %v3071 = vpop.f32.mrb[0].mxu0
        %v3072 = vadd.f32 %v3003, %v3071
        %v3073 = vpop.f32.mrb[0].mxu0
        %v3074 = vadd.f32 %v3005, %v3073
        %v3075 = vpop.f32.mrb[0].mxu0
        %v3076 = vadd.f32 %v3007, %v3075
        %v3077 = vpop.f32.mrb[0].mxu0
        %v3078 = vadd.f32 %v3009, %v3077
        %3079 = vmatprep.mubr.bf16.mxu0 0
        %3080 = vmatmul.mubr.bf16.gmra.mrb[0].mxu0 %v3035
        %v3081 = vpop.f32.mrb[0].mxu0
        %v3082 = vadd.f32 %v3013, %v3081
        %v3083 = vpop.f32.mrb[0].mxu0
        %v3084 = vadd.f32 %v3015, %v3083
        %v3085 = vpop.f32.mrb[0].mxu0
        %v3086 = vadd.f32 %v3017, %v3085
        %v3087 = vpop.f32.mrb[0].mxu0
        %v3088 = vadd.f32 %v3019, %v3087
        %3089 = vdwg.mxu0
        %s3090 = scalar_lea.vmem [#allocation10], 96
        %v3091 = vld [vmem:[%s3090] sm:$0xf]
        %v3092 = vld [vmem:[%s3090 + $0x4] sm:$0xf]
        %v3093 = vld [vmem:[%s3090 + $0x8] sm:$0xf]
        %v3094 = vld [vmem:[%s3090 + $0xc] sm:$0xf]
        %v3095 = vpack.c.bf16 %v2929, %v2927
        %v3096 = vpack.c.bf16 %v2930, %v2928
        %v3097 = vpack.c.bf16 %v2933, %v2931
        %v3098 = vpack.c.bf16 %v2934, %v2932
        %v3103 = vunpack.c.l.b16 %v3091
        %v3104 = vunpack.c.l.b16 %v3092
        %v3105 = vunpack.c.l.b16 %v3093
        %v3106 = vunpack.c.l.b16 %v3094
        %v3107 = vpack.c.b16 %v3104, %v3103
        %v3108 = vpack.c.b16 %v3106, %v3105
        %v3110 = vsel %vm847, %v3107, 0
        %v3113 = vsel %vm847, %v3108, 0
        %3115 = vmatprep.subr.bf16.mxu0 %v3096
        %3116 = vmatpush1.bf16.msra.mxu0 %v3095
        %3117 = vmatprep.subr.bf16.mxu0 %v3098
        %3118 = vmatpush1.bf16.msra.mxu0 %v3097
        %3119 = vmatprep.subr.bf16.mxu0 0
        %3120 = vmatpush1.bf16.msra.mxu0 0
        %3121 = vmatprep.subr.bf16.mxu0 0
        %3122 = vmatpush1.bf16.msra.mxu0 0
        %3123 = vmatprep.subr.bf16.mxu0 0
        %3124 = vmatpush1.bf16.msra.mxu0 0
        %3125 = vmatprep.subr.bf16.mxu0 0
        %3126 = vmatpush1.bf16.msra.mxu0 0
        %3127 = vmatprep.subr.bf16.mxu0 0
        %3128 = vmatpush1.bf16.msra.mxu0 0
        %3129 = vmatprep.subr.bf16.mxu0 0
        %3130 = vmatpush1.bf16.msra.mxu0 0
        %3131 = vmatprep.subr.bf16.mxu0 0
        %3132 = vmatpush1.bf16.msra.mxu0 0
        %3133 = vmatprep.subr.bf16.mxu0 0
        %3134 = vmatpush1.bf16.msra.mxu0 0
        %3135 = vmatprep.subr.bf16.mxu0 0
        %3136 = vmatpush1.bf16.msra.mxu0 0
        %3137 = vmatprep.subr.bf16.mxu0 0
        %3138 = vmatpush1.bf16.msra.mxu0 0
        %3139 = vmatprep.subr.bf16.mxu0 0
        %3140 = vmatpush1.bf16.msra.mxu0 0
        %3141 = vmatprep.subr.bf16.mxu0 0
        %3142 = vmatpush1.bf16.msra.mxu0 0
        %3143 = vmatprep.subr.bf16.mxu0 0
        %3144 = vmatpush1.bf16.msra.mxu0 0
        %3145 = vmatprep.subr.bf16.mxu0 0
        %3146 = vmatpush1.bf16.msra.mxu0 0
        %3147 = vmatprep.mubr.bf16.mxu0 0
        %3148 = vmatmul.mubr.bf16.gmra.mrb[0].mxu0 %v3110
        %v3149 = vpop.f32.mrb[0].mxu0
        %v3150 = vadd.f32 0.0, %v3149
        %v3151 = vpop.f32.mrb[0].mxu0
        %v3152 = vadd.f32 0.0, %v3151
        %v3153 = vpop.f32.mrb[0].mxu0
        %v3154 = vadd.f32 0.0, %v3153
        %v3155 = vpop.f32.mrb[0].mxu0
        %v3156 = vadd.f32 0.0, %v3155
        %3157 = vmatprep.mubr.bf16.mxu0 0
        %3158 = vmatmul.mubr.bf16.gmra.mrb[0].mxu0 %v3113
        %v3159 = vpop.f32.mrb[0].mxu0
        %v3160 = vadd.f32 0.0, %v3159
        %v3161 = vpop.f32.mrb[0].mxu0
        %v3162 = vadd.f32 0.0, %v3161
        %v3163 = vpop.f32.mrb[0].mxu0
        %v3164 = vadd.f32 0.0, %v3163
        %v3165 = vpop.f32.mrb[0].mxu0
        %v3166 = vadd.f32 0.0, %v3165
        %3167 = vdwg.mxu0
        %v3168 = vadd.f32 %v3072, %v3150
        %v3169 = vadd.f32 %v3074, %v3152
        %v3170 = vadd.f32 %v3076, %v3154
        %v3171 = vadd.f32 %v3078, %v3156
        %v3172 = vadd.f32 %v3082, %v3160
        %v3173 = vadd.f32 %v3084, %v3162
        %v3174 = vadd.f32 %v3086, %v3164
        %v3175 = vadd.f32 %v3088, %v3166
        %3176 = vrot.lane.b32.xlu0 %v2799, 112
        %v3177 = vpop.permute.xlu0 %3176
        %3178 = vrot.lane.b32.xlu0 %v2801, 112
        %v3179 = vpop.permute.xlu0 %3178
        %3180 = vrot.lane.b32.xlu0 %v2803, 112
        %v3181 = vpop.permute.xlu0 %3180
        %3182 = vrot.lane.b32.xlu0 %v2805, 112
        %v3183 = vpop.permute.xlu0 %3182
        %3184 = vrot.lane.b32.xlu0 %v2800, 112
        %v3185 = vpop.permute.xlu0 %3184
        %3186 = vrot.lane.b32.xlu0 %v2802, 112
        %v3187 = vpop.permute.xlu0 %3186
        %3188 = vrot.lane.b32.xlu0 %v2804, 112
        %v3189 = vpop.permute.xlu0 %3188
        %3190 = vrot.lane.b32.xlu0 %v2806, 112
        %v3191 = vpop.permute.xlu0 %3190
        %v3192 = vsel %vm734, %v3177, %v3185
        %v3193 = vsel %vm734, %v3179, %v3187
        %v3194 = vsel %vm734, %v3181, %v3189
        %v3195 = vsel %vm734, %v3183, %v3191
        %v3196 = vsel %vm734, %v3185, %v3177
        %v3197 = vsel %vm734, %v3187, %v3179
        %v3198 = vsel %vm734, %v3189, %v3181
        %v3199 = vsel %vm734, %v3191, %v3183
        %3200 = vrot.lane.b32.xlu0 %v2799, 16
        %v3201 = vpop.permute.xlu0 %3200
        %3202 = vrot.lane.b32.xlu0 %v2801, 16
        %v3203 = vpop.permute.xlu0 %3202
        %3204 = vrot.lane.b32.xlu0 %v2803, 16
        %v3205 = vpop.permute.xlu0 %3204
        %3206 = vrot.lane.b32.xlu0 %v2805, 16
        %v3207 = vpop.permute.xlu0 %3206
        %3208 = vrot.lane.b32.xlu0 %v2800, 16
        %v3209 = vpop.permute.xlu0 %3208
        %3210 = vrot.lane.b32.xlu0 %v2802, 16
        %v3211 = vpop.permute.xlu0 %3210
        %3212 = vrot.lane.b32.xlu0 %v2804, 16
        %v3213 = vpop.permute.xlu0 %3212
        %3214 = vrot.lane.b32.xlu0 %v2806, 16
        %v3215 = vpop.permute.xlu0 %3214
        %v3216 = vsel %vm759, %v3201, %v3209
        %v3217 = vsel %vm759, %v3203, %v3211
        %v3218 = vsel %vm759, %v3205, %v3213
        %v3219 = vsel %vm759, %v3207, %v3215
        %v3220 = vsel %vm759, %v3209, %v3201
        %v3221 = vsel %vm759, %v3211, %v3203
        %v3222 = vsel %vm759, %v3213, %v3205
        %v3223 = vsel %vm759, %v3215, %v3207
        %v3224 = vsel %vm784, %v3192, %v3220
        %v3225 = vsel %vm785, %v3196, %v3216
        %v3226 = vsel %vm784, %v3193, %v3221
        %v3227 = vsel %vm785, %v3197, %v3217
        %v3228 = vsel %vm784, %v3194, %v3222
        %v3229 = vsel %vm785, %v3198, %v3218
        %v3230 = vsel %vm784, %v3195, %v3223
        %v3231 = vsel %vm785, %v3199, %v3219
        %v3232 = vsel %vm810, %v3220, %v3192
        %v3233 = vsel %vm811, %v3216, %v3196
        %v3234 = vsel %vm810, %v3221, %v3193
        %v3235 = vsel %vm811, %v3217, %v3197
        %v3236 = vsel %vm810, %v3222, %v3194
        %v3237 = vsel %vm811, %v3218, %v3198
        %v3238 = vsel %vm810, %v3223, %v3195
        %v3239 = vsel %vm811, %v3219, %v3199
        %s3240 = scalar_lea.vmem [#allocation10], 16
        %v3241 = vld [vmem:[%s3240] sm:$0xf]
        %v3242 = vld [vmem:[%s3240 + $0x4] sm:$0xf]
        %v3243 = vld [vmem:[%s3240 + $0x8] sm:$0xf]
        %v3244 = vld [vmem:[%s3240 + $0xc] sm:$0xf]
        %v3245 = vpack.c.bf16 %v3226, %v3224
        %v3246 = vpack.c.bf16 %v3227, %v3225
        %v3247 = vpack.c.bf16 %v3230, %v3228
        %v3248 = vpack.c.bf16 %v3231, %v3229
        %v3253 = vunpack.c.l.b16 %v3241
        %v3254 = vunpack.c.l.b16 %v3242
        %v3255 = vunpack.c.l.b16 %v3243
        %v3256 = vunpack.c.l.b16 %v3244
        %v3257 = vpack.c.b16 %v3254, %v3253
        %v3258 = vpack.c.b16 %v3256, %v3255
        %v3260 = vsel %vm847, %v3257, 0
        %v3263 = vsel %vm847, %v3258, 0
        %3265 = vmatprep.subr.bf16.mxu0 %v3246
        %3266 = vmatpush1.bf16.msra.mxu0 %v3245
        %3267 = vmatprep.subr.bf16.mxu0 %v3248
        %3268 = vmatpush1.bf16.msra.mxu0 %v3247
        %3269 = vmatprep.subr.bf16.mxu0 0
        %3270 = vmatpush1.bf16.msra.mxu0 0
        %3271 = vmatprep.subr.bf16.mxu0 0
        %3272 = vmatpush1.bf16.msra.mxu0 0
        %3273 = vmatprep.subr.bf16.mxu0 0
        %3274 = vmatpush1.bf16.msra.mxu0 0
        %3275 = vmatprep.subr.bf16.mxu0 0
        %3276 = vmatpush1.bf16.msra.mxu0 0
        %3277 = vmatprep.subr.bf16.mxu0 0
        %3278 = vmatpush1.bf16.msra.mxu0 0
        %3279 = vmatprep.subr.bf16.mxu0 0
        %3280 = vmatpush1.bf16.msra.mxu0 0
        %3281 = vmatprep.subr.bf16.mxu0 0
        %3282 = vmatpush1.bf16.msra.mxu0 0
        %3283 = vmatprep.subr.bf16.mxu0 0
        %3284 = vmatpush1.bf16.msra.mxu0 0
        %3285 = vmatprep.subr.bf16.mxu0 0
        %3286 = vmatpush1.bf16.msra.mxu0 0
        %3287 = vmatprep.subr.bf16.mxu0 0
        %3288 = vmatpush1.bf16.msra.mxu0 0
        %3289 = vmatprep.subr.bf16.mxu0 0
        %3290 = vmatpush1.bf16.msra.mxu0 0
        %3291 = vmatprep.subr.bf16.mxu0 0
        %3292 = vmatpush1.bf16.msra.mxu0 0
        %3293 = vmatprep.subr.bf16.mxu0 0
        %3294 = vmatpush1.bf16.msra.mxu0 0
        %3295 = vmatprep.subr.bf16.mxu0 0
        %3296 = vmatpush1.bf16.msra.mxu0 0
        %3297 = vmatprep.mubr.bf16.mxu0 0
        %3298 = vmatmul.mubr.bf16.gmra.mrb[0].mxu0 %v3260
        %v3299 = vpop.f32.mrb[0].mxu0
        %v3300 = vadd.f32 0.0, %v3299
        %v3301 = vpop.f32.mrb[0].mxu0
        %v3302 = vadd.f32 0.0, %v3301
        %v3303 = vpop.f32.mrb[0].mxu0
        %v3304 = vadd.f32 0.0, %v3303
        %v3305 = vpop.f32.mrb[0].mxu0
        %v3306 = vadd.f32 0.0, %v3305
        %3307 = vmatprep.mubr.bf16.mxu0 0
        %3308 = vmatmul.mubr.bf16.gmra.mrb[0].mxu0 %v3263
        %v3309 = vpop.f32.mrb[0].mxu0
        %v3310 = vadd.f32 0.0, %v3309
        %v3311 = vpop.f32.mrb[0].mxu0
        %v3312 = vadd.f32 0.0, %v3311
        %v3313 = vpop.f32.mrb[0].mxu0
        %v3314 = vadd.f32 0.0, %v3313
        %v3315 = vpop.f32.mrb[0].mxu0
        %v3316 = vadd.f32 0.0, %v3315
        %3317 = vdwg.mxu0
        %v3318 = vadd.f32 %v3168, %v3300
        %v3319 = vadd.f32 %v3169, %v3302
        %v3320 = vadd.f32 %v3170, %v3304
        %v3321 = vadd.f32 %v3171, %v3306
        %v3322 = vadd.f32 %v3172, %v3310
        %v3323 = vadd.f32 %v3173, %v3312
        %v3324 = vadd.f32 %v3174, %v3314
        %v3325 = vadd.f32 %v3175, %v3316
        %s3326 = scalar_lea.vmem [#allocation10], 64
        %v3327 = vld [vmem:[%s3326] sm:$0xf]
        %v3328 = vld [vmem:[%s3326 + $0x4] sm:$0xf]
        %v3329 = vld [vmem:[%s3326 + $0x8] sm:$0xf]
        %v3330 = vld [vmem:[%s3326 + $0xc] sm:$0xf]
        %v3331 = vpack.c.bf16 %v2801, %v2799
        %v3332 = vpack.c.bf16 %v2802, %v2800
        %v3333 = vpack.c.bf16 %v2805, %v2803
        %v3334 = vpack.c.bf16 %v2806, %v2804
        %v3339 = vunpack.c.l.b16 %v3327
        %v3340 = vunpack.c.l.b16 %v3328
        %v3341 = vunpack.c.l.b16 %v3329
        %v3342 = vunpack.c.l.b16 %v3330
        %v3343 = vpack.c.b16 %v3340, %v3339
        %v3344 = vpack.c.b16 %v3342, %v3341
        %v3346 = vsel %vm847, %v3343, 0
        %v3349 = vsel %vm847, %v3344, 0
        %3351 = vmatprep.subr.bf16.mxu0 %v3332
        %3352 = vmatpush1.bf16.msra.mxu0 %v3331
        %3353 = vmatprep.subr.bf16.mxu0 %v3334
        %3354 = vmatpush1.bf16.msra.mxu0 %v3333
        %3355 = vmatprep.subr.bf16.mxu0 0
        %3356 = vmatpush1.bf16.msra.mxu0 0
        %3357 = vmatprep.subr.bf16.mxu0 0
        %3358 = vmatpush1.bf16.msra.mxu0 0
        %3359 = vmatprep.subr.bf16.mxu0 0
        %3360 = vmatpush1.bf16.msra.mxu0 0
        %3361 = vmatprep.subr.bf16.mxu0 0
        %3362 = vmatpush1.bf16.msra.mxu0 0
        %3363 = vmatprep.subr.bf16.mxu0 0
        %3364 = vmatpush1.bf16.msra.mxu0 0
        %3365 = vmatprep.subr.bf16.mxu0 0
        %3366 = vmatpush1.bf16.msra.mxu0 0
        %3367 = vmatprep.subr.bf16.mxu0 0
        %3368 = vmatpush1.bf16.msra.mxu0 0
        %3369 = vmatprep.subr.bf16.mxu0 0
        %3370 = vmatpush1.bf16.msra.mxu0 0
        %3371 = vmatprep.subr.bf16.mxu0 0
        %3372 = vmatpush1.bf16.msra.mxu0 0
        %3373 = vmatprep.subr.bf16.mxu0 0
        %3374 = vmatpush1.bf16.msra.mxu0 0
        %3375 = vmatprep.subr.bf16.mxu0 0
        %3376 = vmatpush1.bf16.msra.mxu0 0
        %3377 = vmatprep.subr.bf16.mxu0 0
        %3378 = vmatpush1.bf16.msra.mxu0 0
        %3379 = vmatprep.subr.bf16.mxu0 0
        %3380 = vmatpush1.bf16.msra.mxu0 0
        %3381 = vmatprep.subr.bf16.mxu0 0
        %3382 = vmatpush1.bf16.msra.mxu0 0
        %3383 = vmatprep.mubr.bf16.mxu0 0
        %3384 = vmatmul.mubr.bf16.gmra.mrb[0].mxu0 %v3346
        %v3385 = vpop.f32.mrb[0].mxu0
        %v3386 = vadd.f32 0.0, %v3385
        %v3387 = vpop.f32.mrb[0].mxu0
        %v3388 = vadd.f32 0.0, %v3387
        %v3389 = vpop.f32.mrb[0].mxu0
        %v3390 = vadd.f32 0.0, %v3389
        %v3391 = vpop.f32.mrb[0].mxu0
        %v3392 = vadd.f32 0.0, %v3391
        %3393 = vmatprep.mubr.bf16.mxu0 0
        %3394 = vmatmul.mubr.bf16.gmra.mrb[0].mxu0 %v3349
        %v3395 = vpop.f32.mrb[0].mxu0
        %v3396 = vadd.f32 0.0, %v3395
        %v3397 = vpop.f32.mrb[0].mxu0
        %v3398 = vadd.f32 0.0, %v3397
        %v3399 = vpop.f32.mrb[0].mxu0
        %v3400 = vadd.f32 0.0, %v3399
        %v3401 = vpop.f32.mrb[0].mxu0
        %v3402 = vadd.f32 0.0, %v3401
        %3403 = vdwg.mxu0
        %v3404 = vadd.f32 %v3318, %v3386
        %v3405 = vadd.f32 %v3319, %v3388
        %v3406 = vadd.f32 %v3320, %v3390
        %v3407 = vadd.f32 %v3321, %v3392
        %v3408 = vadd.f32 %v3322, %v3396
        %v3409 = vadd.f32 %v3323, %v3398
        %v3410 = vadd.f32 %v3324, %v3400
        %v3411 = vadd.f32 %v3325, %v3402
        %s3412 = scalar_lea.vmem [#allocation10], 112
        %v3413 = vld [vmem:[%s3412] sm:$0xf]
        %v3414 = vld [vmem:[%s3412 + $0x4] sm:$0xf]
        %v3415 = vld [vmem:[%s3412 + $0x8] sm:$0xf]
        %v3416 = vld [vmem:[%s3412 + $0xc] sm:$0xf]
        %v3417 = vpack.c.bf16 %v3234, %v3232
        %v3418 = vpack.c.bf16 %v3235, %v3233
        %v3419 = vpack.c.bf16 %v3238, %v3236
        %v3420 = vpack.c.bf16 %v3239, %v3237
        %v3425 = vunpack.c.l.b16 %v3413
        %v3426 = vunpack.c.l.b16 %v3414
        %v3427 = vunpack.c.l.b16 %v3415
        %v3428 = vunpack.c.l.b16 %v3416
        %v3429 = vpack.c.b16 %v3426, %v3425
        %v3430 = vpack.c.b16 %v3428, %v3427
        %v3432 = vsel %vm847, %v3429, 0
        %v3435 = vsel %vm847, %v3430, 0
        %3437 = vmatprep.subr.bf16.mxu0 %v3418
        %3438 = vmatpush1.bf16.msra.mxu0 %v3417
        %3439 = vmatprep.subr.bf16.mxu0 %v3420
        %3440 = vmatpush1.bf16.msra.mxu0 %v3419
        %3441 = vmatprep.subr.bf16.mxu0 0
        %3442 = vmatpush1.bf16.msra.mxu0 0
        %3443 = vmatprep.subr.bf16.mxu0 0
        %3444 = vmatpush1.bf16.msra.mxu0 0
        %3445 = vmatprep.subr.bf16.mxu0 0
        %3446 = vmatpush1.bf16.msra.mxu0 0
        %3447 = vmatprep.subr.bf16.mxu0 0
        %3448 = vmatpush1.bf16.msra.mxu0 0
        %3449 = vmatprep.subr.bf16.mxu0 0
        %3450 = vmatpush1.bf16.msra.mxu0 0
        %3451 = vmatprep.subr.bf16.mxu0 0
        %3452 = vmatpush1.bf16.msra.mxu0 0
        %3453 = vmatprep.subr.bf16.mxu0 0
        %3454 = vmatpush1.bf16.msra.mxu0 0
        %3455 = vmatprep.subr.bf16.mxu0 0
        %3456 = vmatpush1.bf16.msra.mxu0 0
        %3457 = vmatprep.subr.bf16.mxu0 0
        %3458 = vmatpush1.bf16.msra.mxu0 0
        %3459 = vmatprep.subr.bf16.mxu0 0
        %3460 = vmatpush1.bf16.msra.mxu0 0
        %3461 = vmatprep.subr.bf16.mxu0 0
        %3462 = vmatpush1.bf16.msra.mxu0 0
        %3463 = vmatprep.subr.bf16.mxu0 0
        %3464 = vmatpush1.bf16.msra.mxu0 0
        %3465 = vmatprep.subr.bf16.mxu0 0
        %3466 = vmatpush1.bf16.msra.mxu0 0
        %3467 = vmatprep.subr.bf16.mxu0 0
        %3468 = vmatpush1.bf16.msra.mxu0 0
        %3469 = vmatprep.mubr.bf16.mxu0 0
        %3470 = vmatmul.mubr.bf16.gmra.mrb[0].mxu0 %v3432
        %v3471 = vpop.f32.mrb[0].mxu0
        %v3472 = vadd.f32 0.0, %v3471
        %v3473 = vpop.f32.mrb[0].mxu0
        %v3474 = vadd.f32 0.0, %v3473
        %v3475 = vpop.f32.mrb[0].mxu0
        %v3476 = vadd.f32 0.0, %v3475
        %v3477 = vpop.f32.mrb[0].mxu0
        %v3478 = vadd.f32 0.0, %v3477
        %3479 = vmatprep.mubr.bf16.mxu0 0
        %3480 = vmatmul.mubr.bf16.gmra.mrb[0].mxu0 %v3435
        %v3481 = vpop.f32.mrb[0].mxu0
        %v3482 = vadd.f32 0.0, %v3481
        %v3483 = vpop.f32.mrb[0].mxu0
        %v3484 = vadd.f32 0.0, %v3483
        %v3485 = vpop.f32.mrb[0].mxu0
        %v3486 = vadd.f32 0.0, %v3485
        %v3487 = vpop.f32.mrb[0].mxu0
        %v3488 = vadd.f32 0.0, %v3487
        %3489 = vdwg.mxu0
        %v3490 = vadd.f32 %v3404, %v3472
        %v3491 = vadd.f32 %v3405, %v3474
        %v3492 = vadd.f32 %v3406, %v3476
        %v3493 = vadd.f32 %v3407, %v3478
        %v3494 = vadd.f32 %v3408, %v3482
        %v3495 = vadd.f32 %v3409, %v3484
        %v3496 = vadd.f32 %v3410, %v3486
        %v3497 = vadd.f32 %v3411, %v3488
        %3498 = vrot.lane.b32.xlu0 %v2863, 112
        %v3499 = vpop.permute.xlu0 %3498
        %3500 = vrot.lane.b32.xlu0 %v2865, 112
        %v3501 = vpop.permute.xlu0 %3500
        %3502 = vrot.lane.b32.xlu0 %v2867, 112
        %v3503 = vpop.permute.xlu0 %3502
        %3504 = vrot.lane.b32.xlu0 %v2869, 112
        %v3505 = vpop.permute.xlu0 %3504
        %3506 = vrot.lane.b32.xlu0 %v2864, 112
        %v3507 = vpop.permute.xlu0 %3506
        %3508 = vrot.lane.b32.xlu0 %v2866, 112
        %v3509 = vpop.permute.xlu0 %3508
        %3510 = vrot.lane.b32.xlu0 %v2868, 112
        %v3511 = vpop.permute.xlu0 %3510
        %3512 = vrot.lane.b32.xlu0 %v2870, 112
        %v3513 = vpop.permute.xlu0 %3512
        %v3514 = vsel %vm734, %v3499, %v3507
        %v3515 = vsel %vm734, %v3501, %v3509
        %v3516 = vsel %vm734, %v3503, %v3511
        %v3517 = vsel %vm734, %v3505, %v3513
        %v3518 = vsel %vm734, %v3507, %v3499
        %v3519 = vsel %vm734, %v3509, %v3501
        %v3520 = vsel %vm734, %v3511, %v3503
        %v3521 = vsel %vm734, %v3513, %v3505
        %3522 = vrot.lane.b32.xlu0 %v2863, 16
        %v3523 = vpop.permute.xlu0 %3522
        %3524 = vrot.lane.b32.xlu0 %v2865, 16
        %v3525 = vpop.permute.xlu0 %3524
        %3526 = vrot.lane.b32.xlu0 %v2867, 16
        %v3527 = vpop.permute.xlu0 %3526
        %3528 = vrot.lane.b32.xlu0 %v2869, 16
        %v3529 = vpop.permute.xlu0 %3528
        %3530 = vrot.lane.b32.xlu0 %v2864, 16
        %v3531 = vpop.permute.xlu0 %3530
        %3532 = vrot.lane.b32.xlu0 %v2866, 16
        %v3533 = vpop.permute.xlu0 %3532
        %3534 = vrot.lane.b32.xlu0 %v2868, 16
        %v3535 = vpop.permute.xlu0 %3534
        %3536 = vrot.lane.b32.xlu0 %v2870, 16
        %v3537 = vpop.permute.xlu0 %3536
        %v3538 = vsel %vm759, %v3523, %v3531
        %v3539 = vsel %vm759, %v3525, %v3533
        %v3540 = vsel %vm759, %v3527, %v3535
        %v3541 = vsel %vm759, %v3529, %v3537
        %v3542 = vsel %vm759, %v3531, %v3523
        %v3543 = vsel %vm759, %v3533, %v3525
        %v3544 = vsel %vm759, %v3535, %v3527
        %v3545 = vsel %vm759, %v3537, %v3529
        %v3546 = vsel %vm784, %v3514, %v3542
        %v3547 = vsel %vm785, %v3518, %v3538
        %v3548 = vsel %vm784, %v3515, %v3543
        %v3549 = vsel %vm785, %v3519, %v3539
        %v3550 = vsel %vm784, %v3516, %v3544
        %v3551 = vsel %vm785, %v3520, %v3540
        %v3552 = vsel %vm784, %v3517, %v3545
        %v3553 = vsel %vm785, %v3521, %v3541
        %v3554 = vsel %vm810, %v3542, %v3514
        %v3555 = vsel %vm811, %v3538, %v3518
        %v3556 = vsel %vm810, %v3543, %v3515
        %v3557 = vsel %vm811, %v3539, %v3519
        %v3558 = vsel %vm810, %v3544, %v3516
        %v3559 = vsel %vm811, %v3540, %v3520
        %v3560 = vsel %vm810, %v3545, %v3517
        %v3561 = vsel %vm811, %v3541, %v3521
        %s3562 = scalar_lea.vmem [#allocation10], 32
        %v3563 = vld [vmem:[%s3562] sm:$0xf]
        %v3564 = vld [vmem:[%s3562 + $0x4] sm:$0xf]
        %v3565 = vld [vmem:[%s3562 + $0x8] sm:$0xf]
        %v3566 = vld [vmem:[%s3562 + $0xc] sm:$0xf]
        %v3567 = vpack.c.bf16 %v3548, %v3546
        %v3568 = vpack.c.bf16 %v3549, %v3547
        %v3569 = vpack.c.bf16 %v3552, %v3550
        %v3570 = vpack.c.bf16 %v3553, %v3551
        %v3575 = vunpack.c.l.b16 %v3563
        %v3576 = vunpack.c.l.b16 %v3564
        %v3577 = vunpack.c.l.b16 %v3565
        %v3578 = vunpack.c.l.b16 %v3566
        %v3579 = vpack.c.b16 %v3576, %v3575
        %v3580 = vpack.c.b16 %v3578, %v3577
        %v3582 = vsel %vm847, %v3579, 0
        %v3585 = vsel %vm847, %v3580, 0
        %3587 = vmatprep.subr.bf16.mxu0 %v3568
        %3588 = vmatpush1.bf16.msra.mxu0 %v3567
        %3589 = vmatprep.subr.bf16.mxu0 %v3570
        %3590 = vmatpush1.bf16.msra.mxu0 %v3569
        %3591 = vmatprep.subr.bf16.mxu0 0
        %3592 = vmatpush1.bf16.msra.mxu0 0
        %3593 = vmatprep.subr.bf16.mxu0 0
        %3594 = vmatpush1.bf16.msra.mxu0 0
        %3595 = vmatprep.subr.bf16.mxu0 0
        %3596 = vmatpush1.bf16.msra.mxu0 0
        %3597 = vmatprep.subr.bf16.mxu0 0
        %3598 = vmatpush1.bf16.msra.mxu0 0
        %3599 = vmatprep.subr.bf16.mxu0 0
        %3600 = vmatpush1.bf16.msra.mxu0 0
        %3601 = vmatprep.subr.bf16.mxu0 0
        %3602 = vmatpush1.bf16.msra.mxu0 0
        %3603 = vmatprep.subr.bf16.mxu0 0
        %3604 = vmatpush1.bf16.msra.mxu0 0
        %3605 = vmatprep.subr.bf16.mxu0 0
        %3606 = vmatpush1.bf16.msra.mxu0 0
        %3607 = vmatprep.subr.bf16.mxu0 0
        %3608 = vmatpush1.bf16.msra.mxu0 0
        %3609 = vmatprep.subr.bf16.mxu0 0
        %3610 = vmatpush1.bf16.msra.mxu0 0
        %3611 = vmatprep.subr.bf16.mxu0 0
        %3612 = vmatpush1.bf16.msra.mxu0 0
        %3613 = vmatprep.subr.bf16.mxu0 0
        %3614 = vmatpush1.bf16.msra.mxu0 0
        %3615 = vmatprep.subr.bf16.mxu0 0
        %3616 = vmatpush1.bf16.msra.mxu0 0
        %3617 = vmatprep.subr.bf16.mxu0 0
        %3618 = vmatpush1.bf16.msra.mxu0 0
        %3619 = vmatprep.mubr.bf16.mxu0 0
        %3620 = vmatmul.mubr.bf16.gmra.mrb[0].mxu0 %v3582
        %v3621 = vpop.f32.mrb[0].mxu0
        %v3622 = vadd.f32 0.0, %v3621
        %v3623 = vpop.f32.mrb[0].mxu0
        %v3624 = vadd.f32 0.0, %v3623
        %v3625 = vpop.f32.mrb[0].mxu0
        %v3626 = vadd.f32 0.0, %v3625
        %v3627 = vpop.f32.mrb[0].mxu0
        %v3628 = vadd.f32 0.0, %v3627
        %3629 = vmatprep.mubr.bf16.mxu0 0
        %3630 = vmatmul.mubr.bf16.gmra.mrb[0].mxu0 %v3585
        %v3631 = vpop.f32.mrb[0].mxu0
        %v3632 = vadd.f32 0.0, %v3631
        %v3633 = vpop.f32.mrb[0].mxu0
        %v3634 = vadd.f32 0.0, %v3633
        %v3635 = vpop.f32.mrb[0].mxu0
        %v3636 = vadd.f32 0.0, %v3635
        %v3637 = vpop.f32.mrb[0].mxu0
        %v3638 = vadd.f32 0.0, %v3637
        %3639 = vdwg.mxu0
        %v3640 = vadd.f32 %v3490, %v3622
        %v3641 = vadd.f32 %v3491, %v3624
        %v3642 = vadd.f32 %v3492, %v3626
        %v3643 = vadd.f32 %v3493, %v3628
        %v3644 = vadd.f32 %v3494, %v3632
        %v3645 = vadd.f32 %v3495, %v3634
        %v3646 = vadd.f32 %v3496, %v3636
        %v3647 = vadd.f32 %v3497, %v3638
        %s3648 = scalar_lea.vmem [#allocation10], 80
        %v3649 = vld [vmem:[%s3648] sm:$0xf]
        %v3650 = vld [vmem:[%s3648 + $0x4] sm:$0xf]
        %v3651 = vld [vmem:[%s3648 + $0x8] sm:$0xf]
        %v3652 = vld [vmem:[%s3648 + $0xc] sm:$0xf]
        %v3653 = vpack.c.bf16 %v2865, %v2863
        %v3654 = vpack.c.bf16 %v2866, %v2864
        %v3655 = vpack.c.bf16 %v2869, %v2867
        %v3656 = vpack.c.bf16 %v2870, %v2868
        %v3661 = vunpack.c.l.b16 %v3649
        %v3662 = vunpack.c.l.b16 %v3650
        %v3663 = vunpack.c.l.b16 %v3651
        %v3664 = vunpack.c.l.b16 %v3652
        %v3665 = vpack.c.b16 %v3662, %v3661
        %v3666 = vpack.c.b16 %v3664, %v3663
        %v3668 = vsel %vm847, %v3665, 0
        %v3671 = vsel %vm847, %v3666, 0
        %3673 = vmatprep.subr.bf16.mxu0 %v3654
        %3674 = vmatpush1.bf16.msra.mxu0 %v3653
        %3675 = vmatprep.subr.bf16.mxu0 %v3656
        %3676 = vmatpush1.bf16.msra.mxu0 %v3655
        %3677 = vmatprep.subr.bf16.mxu0 0
        %3678 = vmatpush1.bf16.msra.mxu0 0
        %3679 = vmatprep.subr.bf16.mxu0 0
        %3680 = vmatpush1.bf16.msra.mxu0 0
        %3681 = vmatprep.subr.bf16.mxu0 0
        %3682 = vmatpush1.bf16.msra.mxu0 0
        %3683 = vmatprep.subr.bf16.mxu0 0
        %3684 = vmatpush1.bf16.msra.mxu0 0
        %3685 = vmatprep.subr.bf16.mxu0 0
        %3686 = vmatpush1.bf16.msra.mxu0 0
        %3687 = vmatprep.subr.bf16.mxu0 0
        %3688 = vmatpush1.bf16.msra.mxu0 0
        %3689 = vmatprep.subr.bf16.mxu0 0
        %3690 = vmatpush1.bf16.msra.mxu0 0
        %3691 = vmatprep.subr.bf16.mxu0 0
        %3692 = vmatpush1.bf16.msra.mxu0 0
        %3693 = vmatprep.subr.bf16.mxu0 0
        %3694 = vmatpush1.bf16.msra.mxu0 0
        %3695 = vmatprep.subr.bf16.mxu0 0
        %3696 = vmatpush1.bf16.msra.mxu0 0
        %3697 = vmatprep.subr.bf16.mxu0 0
        %3698 = vmatpush1.bf16.msra.mxu0 0
        %3699 = vmatprep.subr.bf16.mxu0 0
        %3700 = vmatpush1.bf16.msra.mxu0 0
        %3701 = vmatprep.subr.bf16.mxu0 0
        %3702 = vmatpush1.bf16.msra.mxu0 0
        %3703 = vmatprep.subr.bf16.mxu0 0
        %3704 = vmatpush1.bf16.msra.mxu0 0
        %3705 = vmatprep.mubr.bf16.mxu0 0
        %3706 = vmatmul.mubr.bf16.gmra.mrb[0].mxu0 %v3668
        %v3707 = vpop.f32.mrb[0].mxu0
        %v3708 = vadd.f32 0.0, %v3707
        %v3709 = vpop.f32.mrb[0].mxu0
        %v3710 = vadd.f32 0.0, %v3709
        %v3711 = vpop.f32.mrb[0].mxu0
        %v3712 = vadd.f32 0.0, %v3711
        %v3713 = vpop.f32.mrb[0].mxu0
        %v3714 = vadd.f32 0.0, %v3713
        %3715 = vmatprep.mubr.bf16.mxu0 0
        %3716 = vmatmul.mubr.bf16.gmra.mrb[0].mxu0 %v3671
        %v3717 = vpop.f32.mrb[0].mxu0
        %v3718 = vadd.f32 0.0, %v3717
        %v3719 = vpop.f32.mrb[0].mxu0
        %v3720 = vadd.f32 0.0, %v3719
        %v3721 = vpop.f32.mrb[0].mxu0
        %v3722 = vadd.f32 0.0, %v3721
        %v3723 = vpop.f32.mrb[0].mxu0
        %v3724 = vadd.f32 0.0, %v3723
        %3725 = vdwg.mxu0
        %v3726 = vadd.f32 %v3640, %v3708
        %v3727 = vadd.f32 %v3641, %v3710
        %v3728 = vadd.f32 %v3642, %v3712
        %v3729 = vadd.f32 %v3643, %v3714
        %v3730 = vadd.f32 %v3644, %v3718
        %v3731 = vadd.f32 %v3645, %v3720
        %v3732 = vadd.f32 %v3646, %v3722
        %v3733 = vadd.f32 %v3647, %v3724
        %s3734 = scalar_lea.vmem [#allocation10], 128
        %v3735 = vld [vmem:[%s3734] sm:$0xf]
        %v3736 = vld [vmem:[%s3734 + $0x4] sm:$0xf]
        %v3737 = vld [vmem:[%s3734 + $0x8] sm:$0xf]
        %v3738 = vld [vmem:[%s3734 + $0xc] sm:$0xf]
        %v3739 = vpack.c.bf16 %v3556, %v3554
        %v3740 = vpack.c.bf16 %v3557, %v3555
        %v3741 = vpack.c.bf16 %v3560, %v3558
        %v3742 = vpack.c.bf16 %v3561, %v3559
        %v3747 = vunpack.c.l.b16 %v3735
        %v3748 = vunpack.c.l.b16 %v3736
        %v3749 = vunpack.c.l.b16 %v3737
        %v3750 = vunpack.c.l.b16 %v3738
        %v3751 = vpack.c.b16 %v3748, %v3747
        %v3752 = vpack.c.b16 %v3750, %v3749
        %v3754 = vsel %vm847, %v3751, 0
        %v3757 = vsel %vm847, %v3752, 0
        %3759 = vmatprep.subr.bf16.mxu0 %v3740
        %3760 = vmatpush1.bf16.msra.mxu0 %v3739
        %3761 = vmatprep.subr.bf16.mxu0 %v3742
        %3762 = vmatpush1.bf16.msra.mxu0 %v3741
        %3763 = vmatprep.subr.bf16.mxu0 0
        %3764 = vmatpush1.bf16.msra.mxu0 0
        %3765 = vmatprep.subr.bf16.mxu0 0
        %3766 = vmatpush1.bf16.msra.mxu0 0
        %3767 = vmatprep.subr.bf16.mxu0 0
        %3768 = vmatpush1.bf16.msra.mxu0 0
        %3769 = vmatprep.subr.bf16.mxu0 0
        %3770 = vmatpush1.bf16.msra.mxu0 0
        %3771 = vmatprep.subr.bf16.mxu0 0
        %3772 = vmatpush1.bf16.msra.mxu0 0
        %3773 = vmatprep.subr.bf16.mxu0 0
        %3774 = vmatpush1.bf16.msra.mxu0 0
        %3775 = vmatprep.subr.bf16.mxu0 0
        %3776 = vmatpush1.bf16.msra.mxu0 0
        %3777 = vmatprep.subr.bf16.mxu0 0
        %3778 = vmatpush1.bf16.msra.mxu0 0
        %3779 = vmatprep.subr.bf16.mxu0 0
        %3780 = vmatpush1.bf16.msra.mxu0 0
        %3781 = vmatprep.subr.bf16.mxu0 0
        %3782 = vmatpush1.bf16.msra.mxu0 0
        %3783 = vmatprep.subr.bf16.mxu0 0
        %3784 = vmatpush1.bf16.msra.mxu0 0
        %3785 = vmatprep.subr.bf16.mxu0 0
        %3786 = vmatpush1.bf16.msra.mxu0 0
        %3787 = vmatprep.subr.bf16.mxu0 0
        %3788 = vmatpush1.bf16.msra.mxu0 0
        %3789 = vmatprep.subr.bf16.mxu0 0
        %3790 = vmatpush1.bf16.msra.mxu0 0
        %3791 = vmatprep.mubr.bf16.mxu0 0
        %3792 = vmatmul.mubr.bf16.gmra.mrb[0].mxu0 %v3754
        %v3793 = vpop.f32.mrb[0].mxu0
        %v3794 = vadd.f32 0.0, %v3793
        %v3795 = vpop.f32.mrb[0].mxu0
        %v3796 = vadd.f32 0.0, %v3795
        %v3797 = vpop.f32.mrb[0].mxu0
        %v3798 = vadd.f32 0.0, %v3797
        %v3799 = vpop.f32.mrb[0].mxu0
        %v3800 = vadd.f32 0.0, %v3799
        %3801 = vmatprep.mubr.bf16.mxu0 0
        %3802 = vmatmul.mubr.bf16.gmra.mrb[0].mxu0 %v3757
        %v3803 = vpop.f32.mrb[0].mxu0
        %v3804 = vadd.f32 0.0, %v3803
        %v3805 = vpop.f32.mrb[0].mxu0
        %v3806 = vadd.f32 0.0, %v3805
        %v3807 = vpop.f32.mrb[0].mxu0
        %v3808 = vadd.f32 0.0, %v3807
        %v3809 = vpop.f32.mrb[0].mxu0
        %v3810 = vadd.f32 0.0, %v3809
        %3811 = vdwg.mxu0
        %v3812 = vadd.f32 %v3726, %v3794
        %v3813 = vadd.f32 %v3727, %v3796
        %v3814 = vadd.f32 %v3728, %v3798
        %v3815 = vadd.f32 %v3729, %v3800
        %v3816 = vadd.f32 %v3730, %v3804
        %v3817 = vadd.f32 %v3731, %v3806
        %v3818 = vadd.f32 %v3732, %v3808
        %v3819 = vadd.f32 %v3733, %v3810
        %v3820 = vld [vmem:[%s8] sm:$0xff]
        %v3821 = vld [vmem:[%s8 + $0x8] sm:$0xff]
        %v3822 = vld [vmem:[%s8 + $0x10] sm:$0xff]
        %v3823 = vld [vmem:[%s8 + $0x18] sm:$0xff]
        %3825 = vset.pattern.permute.xlu0 0
        %3826 = vperm.xlu0 %3825, %v3820
        %v3827 = vpop.permute.xlu0 %3826
        %3830 = vset.pattern.permute.xlu0 0
        %3831 = vperm.xlu0 %3830, %v3821
        %v3832 = vpop.permute.xlu0 %3831
        %3835 = vset.pattern.permute.xlu0 0
        %3836 = vperm.xlu0 %3835, %v3822
        %v3837 = vpop.permute.xlu0 %3836
        %3840 = vset.pattern.permute.xlu0 0
        %3841 = vperm.xlu0 %3840, %v3823
        %v3842 = vpop.permute.xlu0 %3841
        %v3844 = vadd.f32 %v3812, %v3827
        %v3845 = vadd.f32 %v3813, %v3827
        %v3846 = vadd.f32 %v3814, %v3832
        %v3847 = vadd.f32 %v3815, %v3832
        %v3848 = vadd.f32 %v3816, %v3837
        %v3849 = vadd.f32 %v3817, %v3837
        %v3850 = vadd.f32 %v3818, %v3842
        %v3851 = vadd.f32 %v3819, %v3842
        %v3852 = vadd.f32 %v3844, %v605
        %v3853 = vadd.f32 %v3845, %v606
        %v3854 = vadd.f32 %v3846, %v607
        %v3855 = vadd.f32 %v3847, %v608
        %v3856 = vadd.f32 %v3848, %v609
        %v3857 = vadd.f32 %v3849, %v610
        %v3858 = vadd.f32 %v3850, %v611
        %v3859 = vadd.f32 %v3851, %v612
        %v3860 = vmax.f32 %v3852, 0.0
        %v3861 = vmax.f32 %v3853, 0.0
        %v3862 = vmax.f32 %v3854, 0.0
        %v3863 = vmax.f32 %v3855, 0.0
        %v3864 = vmax.f32 %v3856, 0.0
        %v3865 = vmax.f32 %v3857, 0.0
        %v3866 = vmax.f32 %v3858, 0.0
        %v3867 = vmax.f32 %v3859, 0.0
        %3868 = vst [vmem:[%s577] sm:$0xff] %v3860
        %3869 = vst [vmem:[%s577 + $0x8] sm:$0xff] %v3861
        %3870 = vst [vmem:[%s577 + $0x10] sm:$0xff] %v3862
        %3871 = vst [vmem:[%s577 + $0x18] sm:$0xff] %v3863
        %3872 = vst [vmem:[%s577 + $0x20] sm:$0xff] %v3864
        %3873 = vst [vmem:[%s577 + $0x28] sm:$0xff] %v3865
        %3874 = vst [vmem:[%s577 + $0x30] sm:$0xff] %v3866
        %3875 = vst [vmem:[%s577 + $0x38] sm:$0xff] %v3867
        %v3876 = vpack.c.bf16 %v3862, %v3860
        %v3877 = vpack.c.bf16 %v3863, %v3861
        %v3878 = vpack.c.bf16 %v3866, %v3864
        %v3879 = vpack.c.bf16 %v3867, %v3865
        %3881 = vset.pattern.permute.xlu0 0
        %3882 = vperm.xlu0 %3881, %v585
        %v3883 = vpop.permute.xlu0 %3882
        %3886 = vset.pattern.permute.xlu0 0
        %3887 = vperm.xlu0 %3886, %v586
        %v3888 = vpop.permute.xlu0 %3887
        %3891 = vset.pattern.permute.xlu0 0
        %3892 = vperm.xlu0 %3891, %v587
        %v3893 = vpop.permute.xlu0 %3892
        %3896 = vset.pattern.permute.xlu0 0
        %3897 = vperm.xlu0 %3896, %v588
        %v3898 = vpop.permute.xlu0 %3897
        %v3904 = vunpack.c.l.b16 %v581
        %v3905 = vunpack.c.l.b16 %v582
        %v3906 = vunpack.c.l.b16 %v583
        %v3907 = vunpack.c.l.b16 %v584
        %v3908 = vpack.c.b16 %v3905, %v3904
        %v3909 = vpack.c.b16 %v3907, %v3906
        %v3911 = vsel %vm847, %v3908, 0
        %v3914 = vsel %vm847, %v3909, 0
        %3916 = vmatprep.subr.bf16.mxu0 %v3877
        %3917 = vmatpush1.bf16.msra.mxu0 %v3876
        %3918 = vmatprep.subr.bf16.mxu0 %v3879
        %3919 = vmatpush1.bf16.msra.mxu0 %v3878
        %3920 = vmatprep.subr.bf16.mxu0 0
        %3921 = vmatpush1.bf16.msra.mxu0 0
        %3922 = vmatprep.subr.bf16.mxu0 0
        %3923 = vmatpush1.bf16.msra.mxu0 0
        %3924 = vmatprep.subr.bf16.mxu0 0
        %3925 = vmatpush1.bf16.msra.mxu0 0
        %3926 = vmatprep.subr.bf16.mxu0 0
        %3927 = vmatpush1.bf16.msra.mxu0 0
        %3928 = vmatprep.subr.bf16.mxu0 0
        %3929 = vmatpush1.bf16.msra.mxu0 0
        %3930 = vmatprep.subr.bf16.mxu0 0
        %3931 = vmatpush1.bf16.msra.mxu0 0
        %3932 = vmatprep.subr.bf16.mxu0 0
        %3933 = vmatpush1.bf16.msra.mxu0 0
        %3934 = vmatprep.subr.bf16.mxu0 0
        %3935 = vmatpush1.bf16.msra.mxu0 0
        %3936 = vmatprep.subr.bf16.mxu0 0
        %3937 = vmatpush1.bf16.msra.mxu0 0
        %3938 = vmatprep.subr.bf16.mxu0 0
        %3939 = vmatpush1.bf16.msra.mxu0 0
        %3940 = vmatprep.subr.bf16.mxu0 0
        %3941 = vmatpush1.bf16.msra.mxu0 0
        %3942 = vmatprep.subr.bf16.mxu0 0
        %3943 = vmatpush1.bf16.msra.mxu0 0
        %3944 = vmatprep.subr.bf16.mxu0 0
        %3945 = vmatpush1.bf16.msra.mxu0 0
        %3946 = vmatprep.subr.bf16.mxu0 0
        %3947 = vmatpush1.bf16.msra.mxu0 0
        %3948 = vmatprep.mubr.bf16.mxu0 0
        %3949 = vmatmul.mubr.bf16.gmra.mrb[0].mxu0 %v3911
        %v3950 = vpop.f32.mrb[0].mxu0
        %v3951 = vadd.f32 %v3883, %v3950
        %v3952 = vpop.f32.mrb[0].mxu0
        %v3953 = vadd.f32 %v3883, %v3952
        %v3954 = vpop.f32.mrb[0].mxu0
        %v3955 = vadd.f32 %v3888, %v3954
        %v3956 = vpop.f32.mrb[0].mxu0
        %v3957 = vadd.f32 %v3888, %v3956
        %3958 = vmatprep.mubr.bf16.mxu0 0
        %3959 = vmatmul.mubr.bf16.gmra.mrb[0].mxu0 %v3914
        %v3960 = vpop.f32.mrb[0].mxu0
        %v3961 = vadd.f32 %v3893, %v3960
        %v3962 = vpop.f32.mrb[0].mxu0
        %v3963 = vadd.f32 %v3893, %v3962
        %v3964 = vpop.f32.mrb[0].mxu0
        %v3965 = vadd.f32 %v3898, %v3964
        %v3966 = vpop.f32.mrb[0].mxu0
        %v3967 = vadd.f32 %v3898, %v3966
        %3968 = vdwg.mxu0
        %v3969 = vmax.f32 %v3951, 0.0
        %v3970 = vmax.f32 %v3953, 0.0
        %v3971 = vmax.f32 %v3955, 0.0
        %v3972 = vmax.f32 %v3957, 0.0
        %v3973 = vmax.f32 %v3961, 0.0
        %v3974 = vmax.f32 %v3963, 0.0
        %v3975 = vmax.f32 %v3965, 0.0
        %v3976 = vmax.f32 %v3967, 0.0
        %v3977 = vmin.f32 %v3969, 4.0
        %v3978 = vmin.f32 %v3970, 4.0
        %v3979 = vmin.f32 %v3971, 4.0
        %v3980 = vmin.f32 %v3972, 4.0
        %v3981 = vmin.f32 %v3973, 4.0
        %v3982 = vmin.f32 %v3974, 4.0
        %v3983 = vmin.f32 %v3975, 4.0
        %v3984 = vmin.f32 %v3976, 4.0
        %v3985 = vround.ne.pseudo %v3977
        %v3986 = vround.ne.pseudo %v3978
        %v3987 = vround.ne.pseudo %v3979
        %v3988 = vround.ne.pseudo %v3980
        %v3989 = vround.ne.pseudo %v3981
        %v3990 = vround.ne.pseudo %v3982
        %v3991 = vround.ne.pseudo %v3983
        %v3992 = vround.ne.pseudo %v3984
        %v3993 = vsub.f32 %v3951, %v3985
        %v3994 = vsub.f32 %v3953, %v3986
        %v3995 = vsub.f32 %v3955, %v3987
        %v3996 = vsub.f32 %v3957, %v3988
        %v3997 = vsub.f32 %v3961, %v3989
        %v3998 = vsub.f32 %v3963, %v3990
        %v3999 = vsub.f32 %v3965, %v3991
        %v4000 = vsub.f32 %v3967, %v3992
        %v4001 = vmul.f32 %v3993, 0.25
        %v4002 = vmul.f32 %v3994, 0.25
        %v4003 = vmul.f32 %v3995, 0.25
        %v4004 = vmul.f32 %v3996, 0.25
        %v4005 = vmul.f32 %v3997, 0.25
        %v4006 = vmul.f32 %v3998, 0.25
        %v4007 = vmul.f32 %v3999, 0.25
        %v4008 = vmul.f32 %v4000, 0.25
        %v4009 = vadd.f32 %v4001, %v3951
        %v4010 = vadd.f32 %v4002, %v3953
        %v4011 = vadd.f32 %v4003, %v3955
        %v4012 = vadd.f32 %v4004, %v3957
        %v4013 = vadd.f32 %v4005, %v3961
        %v4014 = vadd.f32 %v4006, %v3963
        %v4015 = vadd.f32 %v4007, %v3965
        %v4016 = vadd.f32 %v4008, %v3967
        %v4017 = vmax.f32 %v4009, 0.0
        %v4018 = vmax.f32 %v4010, 0.0
        %v4019 = vmax.f32 %v4011, 0.0
        %v4020 = vmax.f32 %v4012, 0.0
        %v4021 = vmax.f32 %v4013, 0.0
        %v4022 = vmax.f32 %v4014, 0.0
        %v4023 = vmax.f32 %v4015, 0.0
        %v4024 = vmax.f32 %v4016, 0.0
        %v4025 = vmin.f32 %v4017, 4.0
        %v4026 = vmin.f32 %v4018, 4.0
        %v4027 = vmin.f32 %v4019, 4.0
        %v4028 = vmin.f32 %v4020, 4.0
        %v4029 = vmin.f32 %v4021, 4.0
        %v4030 = vmin.f32 %v4022, 4.0
        %v4031 = vmin.f32 %v4023, 4.0
        %v4032 = vmin.f32 %v4024, 4.0
        %v4033 = vround.ne.pseudo %v4025
        %v4034 = vround.ne.pseudo %v4026
        %v4035 = vround.ne.pseudo %v4027
        %v4036 = vround.ne.pseudo %v4028
        %v4037 = vround.ne.pseudo %v4029
        %v4038 = vround.ne.pseudo %v4030
        %v4039 = vround.ne.pseudo %v4031
        %v4040 = vround.ne.pseudo %v4032
        %v4041 = vadd.f32 %v3985, %v4033
        %v4042 = vadd.f32 %v3986, %v4034
        %v4043 = vadd.f32 %v3987, %v4035
        %v4044 = vadd.f32 %v3988, %v4036
        %v4045 = vadd.f32 %v3989, %v4037
        %v4046 = vadd.f32 %v3990, %v4038
        %v4047 = vadd.f32 %v3991, %v4039
        %v4048 = vadd.f32 %v3992, %v4040
        %v4049 = vsub.f32 %v4009, %v4033
        %v4050 = vsub.f32 %v4010, %v4034
        %v4051 = vsub.f32 %v4011, %v4035
        %v4052 = vsub.f32 %v4012, %v4036
        %v4053 = vsub.f32 %v4013, %v4037
        %v4054 = vsub.f32 %v4014, %v4038
        %v4055 = vsub.f32 %v4015, %v4039
        %v4056 = vsub.f32 %v4016, %v4040
        %v4057 = vmul.f32 %v4049, 0.25
        %v4058 = vmul.f32 %v4050, 0.25
        %v4059 = vmul.f32 %v4051, 0.25
        %v4060 = vmul.f32 %v4052, 0.25
        %v4061 = vmul.f32 %v4053, 0.25
        %v4062 = vmul.f32 %v4054, 0.25
        %v4063 = vmul.f32 %v4055, 0.25
        %v4064 = vmul.f32 %v4056, 0.25
        %v4065 = vadd.f32 %v4057, %v3951
        %v4066 = vadd.f32 %v4058, %v3953
        %v4067 = vadd.f32 %v4059, %v3955
        %v4068 = vadd.f32 %v4060, %v3957
        %v4069 = vadd.f32 %v4061, %v3961
        %v4070 = vadd.f32 %v4062, %v3963
        %v4071 = vadd.f32 %v4063, %v3965
        %v4072 = vadd.f32 %v4064, %v3967
        %v4073 = vmax.f32 %v4065, 0.0
        %v4074 = vmax.f32 %v4066, 0.0
        %v4075 = vmax.f32 %v4067, 0.0
        %v4076 = vmax.f32 %v4068, 0.0
        %v4077 = vmax.f32 %v4069, 0.0
        %v4078 = vmax.f32 %v4070, 0.0
        %v4079 = vmax.f32 %v4071, 0.0
        %v4080 = vmax.f32 %v4072, 0.0
        %v4081 = vmin.f32 %v4073, 4.0
        %v4082 = vmin.f32 %v4074, 4.0
        %v4083 = vmin.f32 %v4075, 4.0
        %v4084 = vmin.f32 %v4076, 4.0
        %v4085 = vmin.f32 %v4077, 4.0
        %v4086 = vmin.f32 %v4078, 4.0
        %v4087 = vmin.f32 %v4079, 4.0
        %v4088 = vmin.f32 %v4080, 4.0
        %v4089 = vround.ne.pseudo %v4081
        %v4090 = vround.ne.pseudo %v4082
        %v4091 = vround.ne.pseudo %v4083
        %v4092 = vround.ne.pseudo %v4084
        %v4093 = vround.ne.pseudo %v4085
        %v4094 = vround.ne.pseudo %v4086
        %v4095 = vround.ne.pseudo %v4087
        %v4096 = vround.ne.pseudo %v4088
        %v4097 = vadd.f32 %v4041, %v4089
        %v4098 = vadd.f32 %v4042, %v4090
        %v4099 = vadd.f32 %v4043, %v4091
        %v4100 = vadd.f32 %v4044, %v4092
        %v4101 = vadd.f32 %v4045, %v4093
        %v4102 = vadd.f32 %v4046, %v4094
        %v4103 = vadd.f32 %v4047, %v4095
        %v4104 = vadd.f32 %v4048, %v4096
        %v4105 = vsub.f32 %v4065, %v4089
        %v4106 = vsub.f32 %v4066, %v4090
        %v4107 = vsub.f32 %v4067, %v4091
        %v4108 = vsub.f32 %v4068, %v4092
        %v4109 = vsub.f32 %v4069, %v4093
        %v4110 = vsub.f32 %v4070, %v4094
        %v4111 = vsub.f32 %v4071, %v4095
        %v4112 = vsub.f32 %v4072, %v4096
        %v4113 = vmul.f32 %v4105, 0.25
        %v4114 = vmul.f32 %v4106, 0.25
        %v4115 = vmul.f32 %v4107, 0.25
        %v4116 = vmul.f32 %v4108, 0.25
        %v4117 = vmul.f32 %v4109, 0.25
        %v4118 = vmul.f32 %v4110, 0.25
        %v4119 = vmul.f32 %v4111, 0.25
        %v4120 = vmul.f32 %v4112, 0.25
        %v4121 = vadd.f32 %v4113, %v3951
        %v4122 = vadd.f32 %v4114, %v3953
        %v4123 = vadd.f32 %v4115, %v3955
        %v4124 = vadd.f32 %v4116, %v3957
        %v4125 = vadd.f32 %v4117, %v3961
        %v4126 = vadd.f32 %v4118, %v3963
        %v4127 = vadd.f32 %v4119, %v3965
        %v4128 = vadd.f32 %v4120, %v3967
        %v4129 = vmax.f32 %v4121, 0.0
        %v4130 = vmax.f32 %v4122, 0.0
        %v4131 = vmax.f32 %v4123, 0.0
        %v4132 = vmax.f32 %v4124, 0.0
        %v4133 = vmax.f32 %v4125, 0.0
        %v4134 = vmax.f32 %v4126, 0.0
        %v4135 = vmax.f32 %v4127, 0.0
        %v4136 = vmax.f32 %v4128, 0.0
        %v4137 = vmin.f32 %v4129, 4.0
        %v4138 = vmin.f32 %v4130, 4.0
        %v4139 = vmin.f32 %v4131, 4.0
        %v4140 = vmin.f32 %v4132, 4.0
        %v4141 = vmin.f32 %v4133, 4.0
        %v4142 = vmin.f32 %v4134, 4.0
        %v4143 = vmin.f32 %v4135, 4.0
        %v4144 = vmin.f32 %v4136, 4.0
        %v4145 = vround.ne.pseudo %v4137
        %v4146 = vround.ne.pseudo %v4138
        %v4147 = vround.ne.pseudo %v4139
        %v4148 = vround.ne.pseudo %v4140
        %v4149 = vround.ne.pseudo %v4141
        %v4150 = vround.ne.pseudo %v4142
        %v4151 = vround.ne.pseudo %v4143
        %v4152 = vround.ne.pseudo %v4144
        %v4153 = vadd.f32 %v4097, %v4145
        %v4154 = vadd.f32 %v4098, %v4146
        %v4155 = vadd.f32 %v4099, %v4147
        %v4156 = vadd.f32 %v4100, %v4148
        %v4157 = vadd.f32 %v4101, %v4149
        %v4158 = vadd.f32 %v4102, %v4150
        %v4159 = vadd.f32 %v4103, %v4151
        %v4160 = vadd.f32 %v4104, %v4152
        %v4161 = vpack.c.bf16 %v4155, %v4153
        %v4162 = vpack.c.bf16 %v4156, %v4154
        %v4163 = vpack.c.bf16 %v4159, %v4157
        %v4164 = vpack.c.bf16 %v4160, %v4158
        %v4169 = vunpack.c.l.b16 %v589
        %v4170 = vunpack.c.l.b16 %v590
        %v4171 = vunpack.c.l.b16 %v591
        %v4172 = vunpack.c.l.b16 %v592
        %v4173 = vpack.c.b16 %v4170, %v4169
        %v4174 = vpack.c.b16 %v4172, %v4171
        %v4176 = vsel %vm847, %v4173, 0
        %v4179 = vsel %vm847, %v4174, 0
        %4181 = vmatprep.subr.bf16.mxu0 %v4162
        %4182 = vmatpush1.bf16.msra.mxu0 %v4161
        %4183 = vmatprep.subr.bf16.mxu0 %v4164
        %4184 = vmatpush1.bf16.msra.mxu0 %v4163
        %4185 = vmatprep.subr.bf16.mxu0 0
        %4186 = vmatpush1.bf16.msra.mxu0 0
        %4187 = vmatprep.subr.bf16.mxu0 0
        %4188 = vmatpush1.bf16.msra.mxu0 0
        %4189 = vmatprep.subr.bf16.mxu0 0
        %4190 = vmatpush1.bf16.msra.mxu0 0
        %4191 = vmatprep.subr.bf16.mxu0 0
        %4192 = vmatpush1.bf16.msra.mxu0 0
        %4193 = vmatprep.subr.bf16.mxu0 0
        %4194 = vmatpush1.bf16.msra.mxu0 0
        %4195 = vmatprep.subr.bf16.mxu0 0
        %4196 = vmatpush1.bf16.msra.mxu0 0
        %4197 = vmatprep.subr.bf16.mxu0 0
        %4198 = vmatpush1.bf16.msra.mxu0 0
        %4199 = vmatprep.subr.bf16.mxu0 0
        %4200 = vmatpush1.bf16.msra.mxu0 0
        %4201 = vmatprep.subr.bf16.mxu0 0
        %4202 = vmatpush1.bf16.msra.mxu0 0
        %4203 = vmatprep.subr.bf16.mxu0 0
        %4204 = vmatpush1.bf16.msra.mxu0 0
        %4205 = vmatprep.subr.bf16.mxu0 0
        %4206 = vmatpush1.bf16.msra.mxu0 0
        %4207 = vmatprep.subr.bf16.mxu0 0
        %4208 = vmatpush1.bf16.msra.mxu0 0
        %4209 = vmatprep.subr.bf16.mxu0 0
        %4210 = vmatpush1.bf16.msra.mxu0 0
        %4211 = vmatprep.subr.bf16.mxu0 0
        %4212 = vmatpush1.bf16.msra.mxu0 0
        %4213 = vmatprep.mubr.bf16.mxu0 0
        %4214 = vmatmul.mubr.bf16.gmra.mrb[0].mxu0 %v4176
        %v4215 = vpop.f32.mrb[0].mxu0
        %v4216 = vadd.f32 0.0, %v4215
        %v4217 = vpop.f32.mrb[0].mxu0
        %v4218 = vadd.f32 0.0, %v4217
        %v4219 = vpop.f32.mrb[0].mxu0
        %v4220 = vadd.f32 0.0, %v4219
        %v4221 = vpop.f32.mrb[0].mxu0
        %v4222 = vadd.f32 0.0, %v4221
        %4223 = vmatprep.mubr.bf16.mxu0 0
        %4224 = vmatmul.mubr.bf16.gmra.mrb[0].mxu0 %v4179
        %v4225 = vpop.f32.mrb[0].mxu0
        %v4226 = vadd.f32 0.0, %v4225
        %v4227 = vpop.f32.mrb[0].mxu0
        %v4228 = vadd.f32 0.0, %v4227
        %v4229 = vpop.f32.mrb[0].mxu0
        %v4230 = vadd.f32 0.0, %v4229
        %v4231 = vpop.f32.mrb[0].mxu0
        %v4232 = vadd.f32 0.0, %v4231
        %4233 = vdwg.mxu0
        %v4234 = vmul.f32 %v4216, 0.25
        %v4235 = vmul.f32 %v4218, 0.25
        %v4236 = vmul.f32 %v4220, 0.25
        %v4237 = vmul.f32 %v4222, 0.25
        %v4238 = vmul.f32 %v4226, 0.25
        %v4239 = vmul.f32 %v4228, 0.25
        %v4240 = vmul.f32 %v4230, 0.25
        %v4241 = vmul.f32 %v4232, 0.25
        %4243 = vset.pattern.permute.xlu0 0
        %4244 = vperm.xlu0 %4243, %v593
        %v4245 = vpop.permute.xlu0 %4244
        %4248 = vset.pattern.permute.xlu0 0
        %4249 = vperm.xlu0 %4248, %v594
        %v4250 = vpop.permute.xlu0 %4249
        %4253 = vset.pattern.permute.xlu0 0
        %4254 = vperm.xlu0 %4253, %v595
        %v4255 = vpop.permute.xlu0 %4254
        %4258 = vset.pattern.permute.xlu0 0
        %4259 = vperm.xlu0 %4258, %v596
        %v4260 = vpop.permute.xlu0 %4259
        %v4262 = vadd.f32 %v4234, %v4245
        %v4263 = vadd.f32 %v4235, %v4245
        %v4264 = vadd.f32 %v4236, %v4250
        %v4265 = vadd.f32 %v4237, %v4250
        %v4266 = vadd.f32 %v4238, %v4255
        %v4267 = vadd.f32 %v4239, %v4255
        %v4268 = vadd.f32 %v4240, %v4260
        %v4269 = vadd.f32 %v4241, %v4260
        %v4270 = vadd.f32 %v4262, %v597
        %v4271 = vadd.f32 %v4263, %v598
        %v4272 = vadd.f32 %v4264, %v599
        %v4273 = vadd.f32 %v4265, %v600
        %v4274 = vadd.f32 %v4266, %v601
        %v4275 = vadd.f32 %v4267, %v602
        %v4276 = vadd.f32 %v4268, %v603
        %v4277 = vadd.f32 %v4269, %v604
        %v4278 = vmax.f32 %v4270, 0.0
        %v4279 = vmax.f32 %v4271, 0.0
        %v4280 = vmax.f32 %v4272, 0.0
        %v4281 = vmax.f32 %v4273, 0.0
        %v4282 = vmax.f32 %v4274, 0.0
        %v4283 = vmax.f32 %v4275, 0.0
        %v4284 = vmax.f32 %v4276, 0.0
        %v4285 = vmax.f32 %v4277, 0.0
        %4286 = vst [vmem:[%s570] sm:$0xff] %v4278
        %4287 = vst [vmem:[%s570 + $0x8] sm:$0xff] %v4279
        %4288 = vst [vmem:[%s570 + $0x10] sm:$0xff] %v4280
        %4289 = vst [vmem:[%s570 + $0x18] sm:$0xff] %v4281
        %4290 = vst [vmem:[%s570 + $0x20] sm:$0xff] %v4282
        %4291 = vst [vmem:[%s570 + $0x28] sm:$0xff] %v4283
        %4292 = vst [vmem:[%s570 + $0x30] sm:$0xff] %v4284
        %4293 = vst [vmem:[%s570 + $0x38] sm:$0xff] %v4285
        %s4294 = sand.u32 %s330, 1
        %s4295 = scalar_lea.sflag [#allocation4], %s4294
        %s4296 = sand.u32 %s330, 1
        %s4297 = smul.addr %s4296, 64
        %s4298 = scalar_lea.vmem [#allocation11], %s4297
        %s4299 = sand.u32 %s356, 1
        %s4300 = scalar_lea.sflag [#allocation13], %s4299
        %s4301 = sand.u32 %s356, 1
        %s4302 = smul.addr %s4301, 64
        %s4303 = scalar_lea.vmem [#allocation12], %s4302
        // Predicated region
        $region93: #{tpu_custom_call.1} parent=71 // pred_check
          %p4304 = pneg %p340
        $region94: #{tpu_custom_call.1} parent=71 // pred_check_branch
          %4306 = sbr.rel (%p4304) target = $region96
        $region95: #{tpu_custom_call.1} parent=71 // pred_region
          %s4308 = ssub.s32 1024, 1024
          %4309 = vsyncadd %s4295, %s4308
          %s4310 = smul.addr %s39, 8
          %s4311 = smul.addr %s4310, 128
          %s4312 = scalar_lea.hbm %s13, %s4311
          %s4313 = sshll.u32 %s4298, 4
          %s4314 = int_to_ptr.vmem [resolvable:$true] %s4313
          %4319 = dma.vmem_to_hbm [thread:$0]  %s4314, 1024, %s4312, %s4295, 256, 256, 16
        $region96: #{tpu_custom_call.1} parent=71 // pred_fallthru
          _
        // Predicated region
        $region97: #{tpu_custom_call.1} parent=71 // pred_check
          %p4320 = pneg %p366
        $region98: #{tpu_custom_call.1} parent=71 // pred_check_branch
          %4322 = sbr.rel (%p4320) target = $region100
        $region99: #{tpu_custom_call.1} parent=71 // pred_region
          %s4324 = ssub.s32 1024, 1024
          %4325 = vsyncadd %s4300, %s4324
          %s4326 = smul.addr %s39, 8
          %s4327 = smul.addr %s4326, 128
          %s4328 = scalar_lea.hbm %s14, %s4327
          %s4329 = sshll.u32 %s4303, 4
          %s4330 = int_to_ptr.vmem [resolvable:$true] %s4329
          %4335 = dma.vmem_to_hbm [thread:$0]  %s4330, 1024, %s4328, %s4300, 256, 256, 16
        $region100: #{tpu_custom_call.1} parent=71 // pred_fallthru
          _
      $region72: #{tpu_custom_call.1} parent=5 // pred_fallthru
        _
      %p4336 = scmp.le.s32.totalorder 2, %s34
      // Predicated region
      $region101: #{tpu_custom_call.1} parent=5 // pred_check
        %p4337 = pneg %p4336
      $region102: #{tpu_custom_call.1} parent=5 // pred_check_branch
        %4339 = sbr.rel (%p4337) target = $region104
      $region103: #{tpu_custom_call.1} parent=5 // pred_region
        %s4340 = ssub.s32 %s34, 2
        // Predicated region
        $region105: #{tpu_custom_call.1} parent=103 // pred_check
          %p4341 = pneg %p346
        $region106: #{tpu_custom_call.1} parent=103 // pred_check_branch
          %4343 = sbr.rel (%p4341) target = $region108
        $region107: #{tpu_custom_call.1} parent=103 // pred_region
          %s4344 = sand.u32 %s331, 1
          %s4345 = scalar_lea.sflag [#allocation4], %s4344
          %s4346 = sand.u32 %s331, 1
          %s4347 = smul.addr %s4346, 64
          %s4348 = scalar_lea.vmem [#allocation11], %s4347
          %4349 = dma.done %s4345, 1024
        $region108: #{tpu_custom_call.1} parent=103 // pred_fallthru
          _
        // Predicated region
        $region109: #{tpu_custom_call.1} parent=103 // pred_check
          %p4350 = pneg %p372
        $region110: #{tpu_custom_call.1} parent=103 // pred_check_branch
          %4352 = sbr.rel (%p4350) target = $region112
        $region111: #{tpu_custom_call.1} parent=103 // pred_region
          %s4353 = sand.u32 %s357, 1
          %s4354 = scalar_lea.sflag [#allocation13], %s4353
          %s4355 = sand.u32 %s357, 1
          %s4356 = smul.addr %s4355, 64
          %s4357 = scalar_lea.vmem [#allocation12], %s4356
          %4358 = dma.done %s4354, 1024
        $region112: #{tpu_custom_call.1} parent=103 // pred_fallthru
          _
      $region104: #{tpu_custom_call.1} parent=5 // pred_fallthru
        _
    $region6: #{tpu_custom_call.1} parent=1 // loop_footer
      %s38 = sadd.s32 1, %s34
    $region7: #{tpu_custom_call.1} parent=1 // loop_footer_branch
      %33 = sbr.rel target = $region3
    $region8: #{tpu_custom_call.1} parent=1 // loop_exit
      _
    %4359 = vsyncpa [#allocation3], 1
    %s4360 = scalar_lea.sflag [#allocation3], 1
    %4361 = vsyncpa %s4360, 1
    %4362 = vsyncpa [#allocation6], 1
    %s4363 = scalar_lea.sflag [#allocation6], 1
    %4364 = vsyncpa %s4363, 1
    %4365 = vsyncpa [#allocation9], 1
    %4366 = vsyncpa [#allocation4], 1
    %s4367 = scalar_lea.sflag [#allocation4], 1
    %4368 = vsyncpa %s4367, 1
    %4369 = vsyncpa [#allocation13], 1
    %s4370 = scalar_lea.sflag [#allocation13], 1
    %4371 = vsyncpa %s4370, 1

</llo_original>
